<compile_context>
chip_gen: v5e
topology: v5e:2x2
jax: 0.10.0
libtpu: 0.0.40
codegen_flags: <defaults>
</compile_context>

<pallas_src>
import functools

import jax
import jax.numpy as jnp
from jax.experimental import pallas as pl
from jax.experimental.pallas import tpu as pltpu

EPS = 1e-6


def _round_up(n, m):
    return ((n + m - 1) // m) * m


def _vmem_capacity_bytes():
    """Per-core VMEM capacity; conservative 64 MiB fallback (v7x)."""
    try:
        cap = int(pltpu.get_tpu_info().vmem_capacity_bytes)
        if cap > 0:
            return cap
    except Exception:
        pass
    return 64 << 20


def _pick_row_tile(rows8, row_bytes, weight_bytes, vmem_budget, max_tm):
    """Largest tm (multiple of 8, <= max_tm, fits VMEM) dividing rows8."""
    cap = max(8, (vmem_budget - weight_bytes) // max(row_bytes, 1))
    cap = min(cap, rows8, max_tm)
    cap -= cap % 8
    cap = max(cap, 8)
    for tm in range(cap, 7, -8):
        if rows8 % tm == 0:
            return tm
    return 8


def _sublayer_connection_kernel(x_ref, w_ref, bias_ref, o_ref, *, feat):
    """One (tm, F) row tile: LayerNorm -> folded dense sublayer -> residual."""
    x = x_ref[...].astype(jnp.float32)                        # (tm, F)

    # --- LayerNorm statistics (two-pass, torch semantics: F-1, eps on std) --
    mean = jnp.sum(x, axis=-1, keepdims=True) * (1.0 / feat)  # (tm, 1)
    d = x - mean
    var = jnp.sum(d * d, axis=-1, keepdims=True) * (1.0 / (feat - 1))
    std = jnp.sqrt(var)
    inv = 1.0 / (std + EPS)                                    # (tm, 1), exact
    z = d * inv                                                # (tm, F)  (LN affine is folded into W/bias)

    # --- folded sublayer: bf16 MXU feed, f32 accumulate ---------------------
    sub = jnp.dot(z.astype(jnp.bfloat16), w_ref[...],
                  preferred_element_type=jnp.float32) + bias_ref[...]

    # --- dropout (eval mode => identity) + residual add ---------------------
    # TODO(synk): training-mode dropout (pltpu.prng_seed/prng_random_bits mask
    #             + 1/(1-p) scale) not implemented; module is run in eval mode.
    o_ref[...] = (x + sub).astype(o_ref.dtype)


def sublayer_connection(x, a2, b2, w, bias, *, max_tm=4096):
    """Fused pre-LN residual block:  x + Linear(LayerNorm(x)).

    x: (B, S, F).  a2, b2, bias: (F,).  w: (F, F), applied as `normed @ w`.
    """
    B, S, F = x.shape
    rows = B * S
    x2d = x.reshape(rows, F)                  # no pad, no dtype change

    # Fold the LN affine into the dense sublayer (exact):
    #   (a2*z + b2) @ W + bias == z @ (a2[:,None]*W) + (b2 @ W + bias)
    w_f32 = w.astype(jnp.float32)
    w_folded = a2.astype(jnp.float32)[:, None] * w_f32
    bias_folded = (b2.astype(jnp.float32) @ w_f32
                   + bias.astype(jnp.float32)).reshape(1, F)
    w_bf16 = w_folded.astype(jnp.bfloat16)    # MXU feed; halves its DMA/VMEM

    # Rows must be sublane-aligned; demo shapes avoid this pad entirely.
    rows8 = _round_up(rows, 8)
    if rows8 != rows:
        x2d = jnp.pad(x2d, ((0, rows8 - rows), (0, 0)))

    # --- generation-aware VMEM budgeting and row-tile selection -------------
    in_item = jnp.dtype(x.dtype).itemsize
    F_lanes = _round_up(F, 128)               # lane-padded VMEM footprint
    # double-buffered x tile + double-buffered out tile, per row:
    row_bytes = 2 * F_lanes * in_item + 2 * F_lanes * in_item
    # resident (double-buffered) bf16 weight + bias + misc slack:
    weight_bytes = (2 * _round_up(F, 16) * F_lanes * 2
                    + 2 * 8 * F_lanes * 4 + (1 << 20))

    capacity = _vmem_capacity_bytes()
    budget = int(0.80 * capacity)
    tm = _pick_row_tile(rows8, row_bytes, weight_bytes, budget, max_tm)

    need = weight_bytes + row_bytes * tm
    vmem_limit = int(min(0.9 * capacity, max(2 * need, 16 << 20)))

    grid = (rows8 // tm,)

    cost = pl.CostEstimate(
        flops=2 * rows8 * F * F,
        transcendentals=rows8,
        bytes_accessed=2 * rows8 * F * in_item + F * F * 2 + F * 4,
    )

    out2d = pl.pallas_call(
        functools.partial(_sublayer_connection_kernel, feat=F),
        out_shape=jax.ShapeDtypeStruct((rows8, F), x.dtype),
        grid_spec=pltpu.PrefetchScalarGridSpec(
            num_scalar_prefetch=0,
            grid=grid,
            in_specs=[
                pl.BlockSpec((tm, F), lambda i: (i, 0)),   # x row tile
                pl.BlockSpec((F, F), lambda i: (0, 0)),    # folded W (bf16)
                pl.BlockSpec((1, F), lambda i: (0, 0)),    # folded bias
            ],
            out_specs=pl.BlockSpec((tm, F), lambda i: (i, 0)),
        ),
        compiler_params=pltpu.CompilerParams(
            dimension_semantics=("parallel",),
            vmem_limit_bytes=vmem_limit,
        ),
        cost_estimate=cost,
    )(x2d, w_bf16, bias_folded)

    if rows8 != rows:
        out2d = out2d[:rows]
    return out2d.reshape(B, S, F)


if __name__ == "__main__":
    # rows = 1024 (sublane-aligned, no padding), F = 96 (lane dim == full dim).
    B, S, F = 2, 512, 96

    key = jax.random.PRNGKey(0)
    kx, kw, ka, kb, kbias = jax.random.split(key, 5)

    x = jax.random.normal(kx, (B, S, F), dtype=jnp.float32)

    # Non-trivial LN / sublayer parameters to exercise the affine folding.
    a2 = 1.0 + 0.1 * jax.random.normal(ka, (F,), dtype=jnp.float32)
    b2 = 0.1 * jax.random.normal(kb, (F,), dtype=jnp.float32)
    w = jax.random.normal(kw, (F, F), dtype=jnp.float32) * 0.02
    bias = 0.1 * jax.random.normal(kbias, (F,), dtype=jnp.float32)

    # Default (large) row tile -> single grid step for these shapes.
    out = sublayer_connection(x, a2, b2, w, bias)
    jax.block_until_ready(out)
    # Smaller tile cap -> multi-step grid, exercises the pipelined path.
    out_tiled = sublayer_connection(x, a2, b2, w, bias, max_tm=256)
    jax.block_until_ready(out_tiled)

    # Pure-JAX f32 reference (same math as the PyTorch module in eval mode).
    mean = jnp.mean(x, axis=-1, keepdims=True)
    diff = x - mean
    std = jnp.sqrt(jnp.sum(diff * diff, axis=-1, keepdims=True) / (F - 1))
    normed = a2 * diff / (std + EPS) + b2
    ref = x + (jnp.einsum("bsf,fg->bsg", normed, w) + bias)

    assert out.shape == ref.shape
    err1 = float(jnp.max(jnp.abs(out - ref)))
    err2 = float(jnp.max(jnp.abs(out_tiled - ref)))
    # Tolerance covers the intentional bf16 MXU feed of z / W.
    assert jnp.allclose(out, ref, atol=1e-2, rtol=1e-2), err1
    assert jnp.allclose(out_tiled, ref, atol=1e-2, rtol=1e-2), err2

    print("KERNEL_OK")
</pallas_src>

<mosaic_0001>
module attributes {stable_mosaic.version = 11 : i64} {
  func.func @_sublayer_connection_kernel(%arg0: i32, %arg1: memref<1024x96xf32, #tpu.memory_space<vmem>>, %arg2: memref<96x96xbf16, #tpu.memory_space<vmem>>, %arg3: memref<1x96xf32, #tpu.memory_space<vmem>>, %arg4: memref<1024x96xf32, #tpu.memory_space<vmem>>) attributes {dimension_semantics = [#tpu.dimension_semantics<parallel>], iteration_bounds = array<i64: 1>, scalar_prefetch = 0 : i64, scratch_operands = 0 : i64, tpu.core_type = #tpu.core_type<tc>, window_params = [{transform_indices = @transform_0, window_bounds = array<i64: 1024, 96>}, {pipeline_mode = #tpu.pipeline_mode<synchronous>, transform_indices = @transform_1, window_bounds = array<i64: 96, 96>}, {pipeline_mode = #tpu.pipeline_mode<synchronous>, transform_indices = @transform_2, window_bounds = array<i64: 1, 96>}, {transform_indices = @transform_3, window_bounds = array<i64: 1024, 96>}]} {
    %c0 = arith.constant 0 : index
    %c0_0 = arith.constant 0 : index
    %0 = vector.load %arg1[%c0, %c0_0] : memref<1024x96xf32, #tpu.memory_space<vmem>>, vector<1024x96xf32>
    %cst = arith.constant dense<0.000000e+00> : vector<1024xf32>
    %1 = vector.multi_reduction <add>, %0, %cst [1] : vector<1024x96xf32> to vector<1024xf32>
    %2 = vector.shape_cast %1 : vector<1024xf32> to vector<1024x1xf32>
    %cst_1 = arith.constant 0.010416667 : f32
    %3 = vector.broadcast %cst_1 : f32 to vector<1024x1xf32>
    %4 = arith.mulf %2, %3 : vector<1024x1xf32>
    %5 = vector.broadcast %4 : vector<1024x1xf32> to vector<1024x96xf32>
    %6 = arith.subf %0, %5 : vector<1024x96xf32>
    %7 = arith.mulf %6, %6 : vector<1024x96xf32>
    %cst_2 = arith.constant dense<0.000000e+00> : vector<1024xf32>
    %8 = vector.multi_reduction <add>, %7, %cst_2 [1] : vector<1024x96xf32> to vector<1024xf32>
    %9 = vector.shape_cast %8 : vector<1024xf32> to vector<1024x1xf32>
    %cst_3 = arith.constant 0.0105263162 : f32
    %10 = vector.broadcast %cst_3 : f32 to vector<1024x1xf32>
    %11 = arith.mulf %9, %10 : vector<1024x1xf32>
    %12 = math.sqrt %11 : vector<1024x1xf32>
    %cst_4 = arith.constant 9.99999997E-7 : f32
    %13 = vector.broadcast %cst_4 : f32 to vector<1024x1xf32>
    %14 = arith.addf %12, %13 : vector<1024x1xf32>
    %cst_5 = arith.constant 1.000000e+00 : f32
    %15 = vector.broadcast %cst_5 : f32 to vector<1024x1xf32>
    %16 = arith.divf %15, %14 : vector<1024x1xf32>
    %17 = vector.broadcast %16 : vector<1024x1xf32> to vector<1024x96xf32>
    %18 = arith.mulf %6, %17 : vector<1024x96xf32>
    %19 = arith.truncf %18 : vector<1024x96xf32> to vector<1024x96xbf16>
    %c0_6 = arith.constant 0 : index
    %c0_7 = arith.constant 0 : index
    %20 = vector.load %arg2[%c0_6, %c0_7] : memref<96x96xbf16, #tpu.memory_space<vmem>>, vector<96x96xbf16>
    %cst_8 = arith.constant dense<0.000000e+00> : vector<1024x96xf32>
    %21 = tpu.matmul %19, %20, %cst_8 {dimension_numbers = #tpu.dot_dimension_numbers<[1], [0], [0], [1], [0, 0, 1, 1], [], []>} : vector<1024x96xbf16>, vector<96x96xbf16>, vector<1024x96xf32> -> vector<1024x96xf32>
    %c0_9 = arith.constant 0 : index
    %c0_10 = arith.constant 0 : index
    %22 = vector.load %arg3[%c0_9, %c0_10] : memref<1x96xf32, #tpu.memory_space<vmem>>, vector<1x96xf32>
    %23 = vector.broadcast %22 : vector<1x96xf32> to vector<1024x96xf32>
    %24 = arith.addf %21, %23 : vector<1024x96xf32>
    %25 = arith.addf %0, %24 : vector<1024x96xf32>
    %c0_11 = arith.constant 0 : index
    %c0_12 = arith.constant 0 : index
    %26 = vector.load %arg4[%c0_11, %c0_12] : memref<1024x96xf32, #tpu.memory_space<vmem>>, vector<1024x96xf32>
    tpu.vector_store %arg4[%c0_11, %c0_12], %25 {strides = array<i32>} : memref<1024x96xf32, #tpu.memory_space<vmem>>, vector<1024x96xf32>,
    return
  }
  func.func @transform_0(%arg0: i32) -> (i32, i32) {
    %c0_i32 = arith.constant 0 : i32
    %c0_i32_0 = arith.constant 0 : i32
    return %arg0, %c0_i32 : i32, i32
  }
  func.func @transform_1(%arg0: i32) -> (i32, i32) {
    %c0_i32 = arith.constant 0 : i32
    %c0_i32_0 = arith.constant 0 : i32
    %c0_i32_1 = arith.constant 0 : i32
    return %c0_i32, %c0_i32_0 : i32, i32
  }
  func.func @transform_2(%arg0: i32) -> (i32, i32) {
    %c0_i32 = arith.constant 0 : i32
    %c0_i32_0 = arith.constant 0 : i32
    %c0_i32_1 = arith.constant 0 : i32
    return %c0_i32, %c0_i32_0 : i32, i32
  }
  func.func @transform_3(%arg0: i32) -> (i32, i32) {
    %c0_i32 = arith.constant 0 : i32
    %c0_i32_0 = arith.constant 0 : i32
    return %arg0, %c0_i32 : i32, i32
  }
}

</mosaic_0001>

<llo_original>
// kernel: tpu_custom_call.1
$region0: #{tpu_custom_call.1}
  #allocation0 [shape = 'u32[]', space=smem, size = 0x4, offset = 0x4, fixed_abs, tag = 'smem constant byte address 0x4 - core index']
  #allocation1 [shape = 'u32[72,128]{1,0:T(1,128)}', space=vmem, size = 0x9000, scoped, tag = 'internal scratch']
  %s0 = inlined_call_operand.vmem [shape: f32[1024,96], index: 0, kind: input, shape index: {}]
  %s1 = inlined_call_operand.vmem [shape: bf16[96,96], index: 1, kind: input, shape index: {}]
  %s2 = inlined_call_operand.vmem [shape: f32[1,96], index: 2, kind: input, shape index: {}]
  %s3 = inlined_call_operand.vmem [shape: f32[1024,96], index: 3, kind: output, shape index: {}]
  %s4 = sld [smem:[#allocation0]]
  $region22: #{tpu_custom_call.1} parent=0
    _
  %s6 = ssub.s32 1, %s4
  %s7 = scalar_select 0, %s6, %s4
  // Predicated region
  $region2: #{tpu_custom_call.1} parent=0 // pred_check
    _
  $region3: #{tpu_custom_call.1} parent=0 // pred_check_branch
    %9 = sbr.rel (0) target = $region5
  $region4: #{tpu_custom_call.1} parent=0 // pred_region
    _
  $region5: #{tpu_custom_call.1} parent=0 // pred_fallthru
    _
  // Predicated region
  $region6: #{tpu_custom_call.1} parent=0 // pred_check
    _
  $region7: #{tpu_custom_call.1} parent=0 // pred_check_branch
    %11 = sbr.rel (0) target = $region9
  $region8: #{tpu_custom_call.1} parent=0 // pred_region
    _
  $region9: #{tpu_custom_call.1} parent=0 // pred_fallthru
    _
  // Predicated region
  $region10: #{tpu_custom_call.1} parent=0 // pred_check
    _
  $region11: #{tpu_custom_call.1} parent=0 // pred_check_branch
    %13 = sbr.rel (0) target = $region13
  $region12: #{tpu_custom_call.1} parent=0 // pred_region
    _
  $region13: #{tpu_custom_call.1} parent=0 // pred_fallthru
    _
  %v15 = vld [vmem:[%s0] sm:$0xff]
  %v16 = vld [vmem:[%s0 + $0x8] sm:$0xff]
  %v17 = vld [vmem:[%s0 + $0x10] sm:$0xff]
  %v18 = vld [vmem:[%s0 + $0x18] sm:$0xff]
  %v19 = vld [vmem:[%s0 + $0x20] sm:$0xff]
  %v20 = vld [vmem:[%s0 + $0x28] sm:$0xff]
  %v21 = vld [vmem:[%s0 + $0x30] sm:$0xff]
  %v22 = vld [vmem:[%s0 + $0x38] sm:$0xff]
  %v23 = vld [vmem:[%s0 + $0x40] sm:$0xff]
  %v24 = vld [vmem:[%s0 + $0x48] sm:$0xff]
  %v25 = vld [vmem:[%s0 + $0x50] sm:$0xff]
  %v26 = vld [vmem:[%s0 + $0x58] sm:$0xff]
  %v27 = vld [vmem:[%s0 + $0x60] sm:$0xff]
  %v28 = vld [vmem:[%s0 + $0x68] sm:$0xff]
  %v29 = vld [vmem:[%s0 + $0x70] sm:$0xff]
  %v30 = vld [vmem:[%s0 + $0x78] sm:$0xff]
  %v31 = vld [vmem:[%s0 + $0x80] sm:$0xff]
  %v32 = vld [vmem:[%s0 + $0x88] sm:$0xff]
  %v33 = vld [vmem:[%s0 + $0x90] sm:$0xff]
  %v34 = vld [vmem:[%s0 + $0x98] sm:$0xff]
  %v35 = vld [vmem:[%s0 + $0xa0] sm:$0xff]
  %v36 = vld [vmem:[%s0 + $0xa8] sm:$0xff]
  %v37 = vld [vmem:[%s0 + $0xb0] sm:$0xff]
  %v38 = vld [vmem:[%s0 + $0xb8] sm:$0xff]
  %v39 = vld [vmem:[%s0 + $0xc0] sm:$0xff]
  %v40 = vld [vmem:[%s0 + $0xc8] sm:$0xff]
  %v41 = vld [vmem:[%s0 + $0xd0] sm:$0xff]
  %v42 = vld [vmem:[%s0 + $0xd8] sm:$0xff]
  %v43 = vld [vmem:[%s0 + $0xe0] sm:$0xff]
  %v44 = vld [vmem:[%s0 + $0xe8] sm:$0xff]
  %v45 = vld [vmem:[%s0 + $0xf0] sm:$0xff]
  %v46 = vld [vmem:[%s0 + $0xf8] sm:$0xff]
  %v47 = vld [vmem:[%s0 + $0x100] sm:$0xff]
  %v48 = vld [vmem:[%s0 + $0x108] sm:$0xff]
  %v49 = vld [vmem:[%s0 + $0x110] sm:$0xff]
  %v50 = vld [vmem:[%s0 + $0x118] sm:$0xff]
  %v51 = vld [vmem:[%s0 + $0x120] sm:$0xff]
  %v52 = vld [vmem:[%s0 + $0x128] sm:$0xff]
  %v53 = vld [vmem:[%s0 + $0x130] sm:$0xff]
  %v54 = vld [vmem:[%s0 + $0x138] sm:$0xff]
  %v55 = vld [vmem:[%s0 + $0x140] sm:$0xff]
  %v56 = vld [vmem:[%s0 + $0x148] sm:$0xff]
  %v57 = vld [vmem:[%s0 + $0x150] sm:$0xff]
  %v58 = vld [vmem:[%s0 + $0x158] sm:$0xff]
  %v59 = vld [vmem:[%s0 + $0x160] sm:$0xff]
  %v60 = vld [vmem:[%s0 + $0x168] sm:$0xff]
  %v61 = vld [vmem:[%s0 + $0x170] sm:$0xff]
  %v62 = vld [vmem:[%s0 + $0x178] sm:$0xff]
  %v63 = vld [vmem:[%s0 + $0x180] sm:$0xff]
  %v64 = vld [vmem:[%s0 + $0x188] sm:$0xff]
  %v65 = vld [vmem:[%s0 + $0x190] sm:$0xff]
  %v66 = vld [vmem:[%s0 + $0x198] sm:$0xff]
  %v67 = vld [vmem:[%s0 + $0x1a0] sm:$0xff]
  %v68 = vld [vmem:[%s0 + $0x1a8] sm:$0xff]
  %v69 = vld [vmem:[%s0 + $0x1b0] sm:$0xff]
  %v70 = vld [vmem:[%s0 + $0x1b8] sm:$0xff]
  %v71 = vld [vmem:[%s0 + $0x1c0] sm:$0xff]
  %v72 = vld [vmem:[%s0 + $0x1c8] sm:$0xff]
  %v73 = vld [vmem:[%s0 + $0x1d0] sm:$0xff]
  %v74 = vld [vmem:[%s0 + $0x1d8] sm:$0xff]
  %v75 = vld [vmem:[%s0 + $0x1e0] sm:$0xff]
  %v76 = vld [vmem:[%s0 + $0x1e8] sm:$0xff]
  %v77 = vld [vmem:[%s0 + $0x1f0] sm:$0xff]
  %v78 = vld [vmem:[%s0 + $0x1f8] sm:$0xff]
  %v79 = vld [vmem:[%s0 + $0x200] sm:$0xff]
  %v80 = vld [vmem:[%s0 + $0x208] sm:$0xff]
  %v81 = vld [vmem:[%s0 + $0x210] sm:$0xff]
  %v82 = vld [vmem:[%s0 + $0x218] sm:$0xff]
  %v83 = vld [vmem:[%s0 + $0x220] sm:$0xff]
  %v84 = vld [vmem:[%s0 + $0x228] sm:$0xff]
  %v85 = vld [vmem:[%s0 + $0x230] sm:$0xff]
  %v86 = vld [vmem:[%s0 + $0x238] sm:$0xff]
  %v87 = vld [vmem:[%s0 + $0x240] sm:$0xff]
  %v88 = vld [vmem:[%s0 + $0x248] sm:$0xff]
  %v89 = vld [vmem:[%s0 + $0x250] sm:$0xff]
  %v90 = vld [vmem:[%s0 + $0x258] sm:$0xff]
  %v91 = vld [vmem:[%s0 + $0x260] sm:$0xff]
  %v92 = vld [vmem:[%s0 + $0x268] sm:$0xff]
  %v93 = vld [vmem:[%s0 + $0x270] sm:$0xff]
  %v94 = vld [vmem:[%s0 + $0x278] sm:$0xff]
  %v95 = vld [vmem:[%s0 + $0x280] sm:$0xff]
  %v96 = vld [vmem:[%s0 + $0x288] sm:$0xff]
  %v97 = vld [vmem:[%s0 + $0x290] sm:$0xff]
  %v98 = vld [vmem:[%s0 + $0x298] sm:$0xff]
  %v99 = vld [vmem:[%s0 + $0x2a0] sm:$0xff]
  %v100 = vld [vmem:[%s0 + $0x2a8] sm:$0xff]
  %v101 = vld [vmem:[%s0 + $0x2b0] sm:$0xff]
  %v102 = vld [vmem:[%s0 + $0x2b8] sm:$0xff]
  %v103 = vld [vmem:[%s0 + $0x2c0] sm:$0xff]
  %v104 = vld [vmem:[%s0 + $0x2c8] sm:$0xff]
  %v105 = vld [vmem:[%s0 + $0x2d0] sm:$0xff]
  %v106 = vld [vmem:[%s0 + $0x2d8] sm:$0xff]
  %v107 = vld [vmem:[%s0 + $0x2e0] sm:$0xff]
  %v108 = vld [vmem:[%s0 + $0x2e8] sm:$0xff]
  %v109 = vld [vmem:[%s0 + $0x2f0] sm:$0xff]
  %v110 = vld [vmem:[%s0 + $0x2f8] sm:$0xff]
  %v111 = vld [vmem:[%s0 + $0x300] sm:$0xff]
  %v112 = vld [vmem:[%s0 + $0x308] sm:$0xff]
  %v113 = vld [vmem:[%s0 + $0x310] sm:$0xff]
  %v114 = vld [vmem:[%s0 + $0x318] sm:$0xff]
  %v115 = vld [vmem:[%s0 + $0x320] sm:$0xff]
  %v116 = vld [vmem:[%s0 + $0x328] sm:$0xff]
  %v117 = vld [vmem:[%s0 + $0x330] sm:$0xff]
  %v118 = vld [vmem:[%s0 + $0x338] sm:$0xff]
  %v119 = vld [vmem:[%s0 + $0x340] sm:$0xff]
  %v120 = vld [vmem:[%s0 + $0x348] sm:$0xff]
  %v121 = vld [vmem:[%s0 + $0x350] sm:$0xff]
  %v122 = vld [vmem:[%s0 + $0x358] sm:$0xff]
  %v123 = vld [vmem:[%s0 + $0x360] sm:$0xff]
  %v124 = vld [vmem:[%s0 + $0x368] sm:$0xff]
  %v125 = vld [vmem:[%s0 + $0x370] sm:$0xff]
  %v126 = vld [vmem:[%s0 + $0x378] sm:$0xff]
  %v127 = vld [vmem:[%s0 + $0x380] sm:$0xff]
  %v128 = vld [vmem:[%s0 + $0x388] sm:$0xff]
  %v129 = vld [vmem:[%s0 + $0x390] sm:$0xff]
  %v130 = vld [vmem:[%s0 + $0x398] sm:$0xff]
  %v131 = vld [vmem:[%s0 + $0x3a0] sm:$0xff]
  %v132 = vld [vmem:[%s0 + $0x3a8] sm:$0xff]
  %v133 = vld [vmem:[%s0 + $0x3b0] sm:$0xff]
  %v134 = vld [vmem:[%s0 + $0x3b8] sm:$0xff]
  %v135 = vld [vmem:[%s0 + $0x3c0] sm:$0xff]
  %v136 = vld [vmem:[%s0 + $0x3c8] sm:$0xff]
  %v137 = vld [vmem:[%s0 + $0x3d0] sm:$0xff]
  %v138 = vld [vmem:[%s0 + $0x3d8] sm:$0xff]
  %v139 = vld [vmem:[%s0 + $0x3e0] sm:$0xff]
  %v140 = vld [vmem:[%s0 + $0x3e8] sm:$0xff]
  %v141 = vld [vmem:[%s0 + $0x3f0] sm:$0xff]
  %v142 = vld [vmem:[%s0 + $0x3f8] sm:$0xff]
  %vm143 = vcmask 785408
  %v144 = vsel %vm143, %v15, 0.0
  %145 = vadd.xlane.f32.xlu0 %v144
  %v146 = vpop.xlane.xlu0 %145
  %v147 = vsel %vm143, %v16, 0.0
  %148 = vadd.xlane.f32.xlu0 %v147
  %v149 = vpop.xlane.xlu0 %148
  %v150 = vsel %vm143, %v17, 0.0
  %151 = vadd.xlane.f32.xlu0 %v150
  %v152 = vpop.xlane.xlu0 %151
  %v153 = vsel %vm143, %v18, 0.0
  %154 = vadd.xlane.f32.xlu0 %v153
  %v155 = vpop.xlane.xlu0 %154
  %v156 = vsel %vm143, %v19, 0.0
  %157 = vadd.xlane.f32.xlu0 %v156
  %v158 = vpop.xlane.xlu0 %157
  %v159 = vsel %vm143, %v20, 0.0
  %160 = vadd.xlane.f32.xlu0 %v159
  %v161 = vpop.xlane.xlu0 %160
  %v162 = vsel %vm143, %v21, 0.0
  %163 = vadd.xlane.f32.xlu0 %v162
  %v164 = vpop.xlane.xlu0 %163
  %v165 = vsel %vm143, %v22, 0.0
  %166 = vadd.xlane.f32.xlu0 %v165
  %v167 = vpop.xlane.xlu0 %166
  %v168 = vsel %vm143, %v23, 0.0
  %169 = vadd.xlane.f32.xlu0 %v168
  %v170 = vpop.xlane.xlu0 %169
  %v171 = vsel %vm143, %v24, 0.0
  %172 = vadd.xlane.f32.xlu0 %v171
  %v173 = vpop.xlane.xlu0 %172
  %v174 = vsel %vm143, %v25, 0.0
  %175 = vadd.xlane.f32.xlu0 %v174
  %v176 = vpop.xlane.xlu0 %175
  %v177 = vsel %vm143, %v26, 0.0
  %178 = vadd.xlane.f32.xlu0 %v177
  %v179 = vpop.xlane.xlu0 %178
  %v180 = vsel %vm143, %v27, 0.0
  %181 = vadd.xlane.f32.xlu0 %v180
  %v182 = vpop.xlane.xlu0 %181
  %v183 = vsel %vm143, %v28, 0.0
  %184 = vadd.xlane.f32.xlu0 %v183
  %v185 = vpop.xlane.xlu0 %184
  %v186 = vsel %vm143, %v29, 0.0
  %187 = vadd.xlane.f32.xlu0 %v186
  %v188 = vpop.xlane.xlu0 %187
  %v189 = vsel %vm143, %v30, 0.0
  %190 = vadd.xlane.f32.xlu0 %v189
  %v191 = vpop.xlane.xlu0 %190
  %v192 = vsel %vm143, %v31, 0.0
  %193 = vadd.xlane.f32.xlu0 %v192
  %v194 = vpop.xlane.xlu0 %193
  %v195 = vsel %vm143, %v32, 0.0
  %196 = vadd.xlane.f32.xlu0 %v195
  %v197 = vpop.xlane.xlu0 %196
  %v198 = vsel %vm143, %v33, 0.0
  %199 = vadd.xlane.f32.xlu0 %v198
  %v200 = vpop.xlane.xlu0 %199
  %v201 = vsel %vm143, %v34, 0.0
  %202 = vadd.xlane.f32.xlu0 %v201
  %v203 = vpop.xlane.xlu0 %202
  %v204 = vsel %vm143, %v35, 0.0
  %205 = vadd.xlane.f32.xlu0 %v204
  %v206 = vpop.xlane.xlu0 %205
  %v207 = vsel %vm143, %v36, 0.0
  %208 = vadd.xlane.f32.xlu0 %v207
  %v209 = vpop.xlane.xlu0 %208
  %v210 = vsel %vm143, %v37, 0.0
  %211 = vadd.xlane.f32.xlu0 %v210
  %v212 = vpop.xlane.xlu0 %211
  %v213 = vsel %vm143, %v38, 0.0
  %214 = vadd.xlane.f32.xlu0 %v213
  %v215 = vpop.xlane.xlu0 %214
  %v216 = vsel %vm143, %v39, 0.0
  %217 = vadd.xlane.f32.xlu0 %v216
  %v218 = vpop.xlane.xlu0 %217
  %v219 = vsel %vm143, %v40, 0.0
  %220 = vadd.xlane.f32.xlu0 %v219
  %v221 = vpop.xlane.xlu0 %220
  %v222 = vsel %vm143, %v41, 0.0
  %223 = vadd.xlane.f32.xlu0 %v222
  %v224 = vpop.xlane.xlu0 %223
  %v225 = vsel %vm143, %v42, 0.0
  %226 = vadd.xlane.f32.xlu0 %v225
  %v227 = vpop.xlane.xlu0 %226
  %v228 = vsel %vm143, %v43, 0.0
  %229 = vadd.xlane.f32.xlu0 %v228
  %v230 = vpop.xlane.xlu0 %229
  %v231 = vsel %vm143, %v44, 0.0
  %232 = vadd.xlane.f32.xlu0 %v231
  %v233 = vpop.xlane.xlu0 %232
  %v234 = vsel %vm143, %v45, 0.0
  %235 = vadd.xlane.f32.xlu0 %v234
  %v236 = vpop.xlane.xlu0 %235
  %v237 = vsel %vm143, %v46, 0.0
  %238 = vadd.xlane.f32.xlu0 %v237
  %v239 = vpop.xlane.xlu0 %238
  %v240 = vsel %vm143, %v47, 0.0
  %241 = vadd.xlane.f32.xlu0 %v240
  %v242 = vpop.xlane.xlu0 %241
  %v243 = vsel %vm143, %v48, 0.0
  %244 = vadd.xlane.f32.xlu0 %v243
  %v245 = vpop.xlane.xlu0 %244
  %v246 = vsel %vm143, %v49, 0.0
  %247 = vadd.xlane.f32.xlu0 %v246
  %v248 = vpop.xlane.xlu0 %247
  %v249 = vsel %vm143, %v50, 0.0
  %250 = vadd.xlane.f32.xlu0 %v249
  %v251 = vpop.xlane.xlu0 %250
  %v252 = vsel %vm143, %v51, 0.0
  %253 = vadd.xlane.f32.xlu0 %v252
  %v254 = vpop.xlane.xlu0 %253
  %v255 = vsel %vm143, %v52, 0.0
  %256 = vadd.xlane.f32.xlu0 %v255
  %v257 = vpop.xlane.xlu0 %256
  %v258 = vsel %vm143, %v53, 0.0
  %259 = vadd.xlane.f32.xlu0 %v258
  %v260 = vpop.xlane.xlu0 %259
  %v261 = vsel %vm143, %v54, 0.0
  %262 = vadd.xlane.f32.xlu0 %v261
  %v263 = vpop.xlane.xlu0 %262
  %v264 = vsel %vm143, %v55, 0.0
  %265 = vadd.xlane.f32.xlu0 %v264
  %v266 = vpop.xlane.xlu0 %265
  %v267 = vsel %vm143, %v56, 0.0
  %268 = vadd.xlane.f32.xlu0 %v267
  %v269 = vpop.xlane.xlu0 %268
  %v270 = vsel %vm143, %v57, 0.0
  %271 = vadd.xlane.f32.xlu0 %v270
  %v272 = vpop.xlane.xlu0 %271
  %v273 = vsel %vm143, %v58, 0.0
  %274 = vadd.xlane.f32.xlu0 %v273
  %v275 = vpop.xlane.xlu0 %274
  %v276 = vsel %vm143, %v59, 0.0
  %277 = vadd.xlane.f32.xlu0 %v276
  %v278 = vpop.xlane.xlu0 %277
  %v279 = vsel %vm143, %v60, 0.0
  %280 = vadd.xlane.f32.xlu0 %v279
  %v281 = vpop.xlane.xlu0 %280
  %v282 = vsel %vm143, %v61, 0.0
  %283 = vadd.xlane.f32.xlu0 %v282
  %v284 = vpop.xlane.xlu0 %283
  %v285 = vsel %vm143, %v62, 0.0
  %286 = vadd.xlane.f32.xlu0 %v285
  %v287 = vpop.xlane.xlu0 %286
  %v288 = vsel %vm143, %v63, 0.0
  %289 = vadd.xlane.f32.xlu0 %v288
  %v290 = vpop.xlane.xlu0 %289
  %v291 = vsel %vm143, %v64, 0.0
  %292 = vadd.xlane.f32.xlu0 %v291
  %v293 = vpop.xlane.xlu0 %292
  %v294 = vsel %vm143, %v65, 0.0
  %295 = vadd.xlane.f32.xlu0 %v294
  %v296 = vpop.xlane.xlu0 %295
  %v297 = vsel %vm143, %v66, 0.0
  %298 = vadd.xlane.f32.xlu0 %v297
  %v299 = vpop.xlane.xlu0 %298
  %v300 = vsel %vm143, %v67, 0.0
  %301 = vadd.xlane.f32.xlu0 %v300
  %v302 = vpop.xlane.xlu0 %301
  %v303 = vsel %vm143, %v68, 0.0
  %304 = vadd.xlane.f32.xlu0 %v303
  %v305 = vpop.xlane.xlu0 %304
  %v306 = vsel %vm143, %v69, 0.0
  %307 = vadd.xlane.f32.xlu0 %v306
  %v308 = vpop.xlane.xlu0 %307
  %v309 = vsel %vm143, %v70, 0.0
  %310 = vadd.xlane.f32.xlu0 %v309
  %v311 = vpop.xlane.xlu0 %310
  %v312 = vsel %vm143, %v71, 0.0
  %313 = vadd.xlane.f32.xlu0 %v312
  %v314 = vpop.xlane.xlu0 %313
  %v315 = vsel %vm143, %v72, 0.0
  %316 = vadd.xlane.f32.xlu0 %v315
  %v317 = vpop.xlane.xlu0 %316
  %v318 = vsel %vm143, %v73, 0.0
  %319 = vadd.xlane.f32.xlu0 %v318
  %v320 = vpop.xlane.xlu0 %319
  %v321 = vsel %vm143, %v74, 0.0
  %322 = vadd.xlane.f32.xlu0 %v321
  %v323 = vpop.xlane.xlu0 %322
  %v324 = vsel %vm143, %v75, 0.0
  %325 = vadd.xlane.f32.xlu0 %v324
  %v326 = vpop.xlane.xlu0 %325
  %v327 = vsel %vm143, %v76, 0.0
  %328 = vadd.xlane.f32.xlu0 %v327
  %v329 = vpop.xlane.xlu0 %328
  %v330 = vsel %vm143, %v77, 0.0
  %331 = vadd.xlane.f32.xlu0 %v330
  %v332 = vpop.xlane.xlu0 %331
  %v333 = vsel %vm143, %v78, 0.0
  %334 = vadd.xlane.f32.xlu0 %v333
  %v335 = vpop.xlane.xlu0 %334
  %v336 = vsel %vm143, %v79, 0.0
  %337 = vadd.xlane.f32.xlu0 %v336
  %v338 = vpop.xlane.xlu0 %337
  %v339 = vsel %vm143, %v80, 0.0
  %340 = vadd.xlane.f32.xlu0 %v339
  %v341 = vpop.xlane.xlu0 %340
  %v342 = vsel %vm143, %v81, 0.0
  %343 = vadd.xlane.f32.xlu0 %v342
  %v344 = vpop.xlane.xlu0 %343
  %v345 = vsel %vm143, %v82, 0.0
  %346 = vadd.xlane.f32.xlu0 %v345
  %v347 = vpop.xlane.xlu0 %346
  %v348 = vsel %vm143, %v83, 0.0
  %349 = vadd.xlane.f32.xlu0 %v348
  %v350 = vpop.xlane.xlu0 %349
  %v351 = vsel %vm143, %v84, 0.0
  %352 = vadd.xlane.f32.xlu0 %v351
  %v353 = vpop.xlane.xlu0 %352
  %v354 = vsel %vm143, %v85, 0.0
  %355 = vadd.xlane.f32.xlu0 %v354
  %v356 = vpop.xlane.xlu0 %355
  %v357 = vsel %vm143, %v86, 0.0
  %358 = vadd.xlane.f32.xlu0 %v357
  %v359 = vpop.xlane.xlu0 %358
  %v360 = vsel %vm143, %v87, 0.0
  %361 = vadd.xlane.f32.xlu0 %v360
  %v362 = vpop.xlane.xlu0 %361
  %v363 = vsel %vm143, %v88, 0.0
  %364 = vadd.xlane.f32.xlu0 %v363
  %v365 = vpop.xlane.xlu0 %364
  %v366 = vsel %vm143, %v89, 0.0
  %367 = vadd.xlane.f32.xlu0 %v366
  %v368 = vpop.xlane.xlu0 %367
  %v369 = vsel %vm143, %v90, 0.0
  %370 = vadd.xlane.f32.xlu0 %v369
  %v371 = vpop.xlane.xlu0 %370
  %v372 = vsel %vm143, %v91, 0.0
  %373 = vadd.xlane.f32.xlu0 %v372
  %v374 = vpop.xlane.xlu0 %373
  %v375 = vsel %vm143, %v92, 0.0
  %376 = vadd.xlane.f32.xlu0 %v375
  %v377 = vpop.xlane.xlu0 %376
  %v378 = vsel %vm143, %v93, 0.0
  %379 = vadd.xlane.f32.xlu0 %v378
  %v380 = vpop.xlane.xlu0 %379
  %v381 = vsel %vm143, %v94, 0.0
  %382 = vadd.xlane.f32.xlu0 %v381
  %v383 = vpop.xlane.xlu0 %382
  %v384 = vsel %vm143, %v95, 0.0
  %385 = vadd.xlane.f32.xlu0 %v384
  %v386 = vpop.xlane.xlu0 %385
  %v387 = vsel %vm143, %v96, 0.0
  %388 = vadd.xlane.f32.xlu0 %v387
  %v389 = vpop.xlane.xlu0 %388
  %v390 = vsel %vm143, %v97, 0.0
  %391 = vadd.xlane.f32.xlu0 %v390
  %v392 = vpop.xlane.xlu0 %391
  %v393 = vsel %vm143, %v98, 0.0
  %394 = vadd.xlane.f32.xlu0 %v393
  %v395 = vpop.xlane.xlu0 %394
  %v396 = vsel %vm143, %v99, 0.0
  %397 = vadd.xlane.f32.xlu0 %v396
  %v398 = vpop.xlane.xlu0 %397
  %v399 = vsel %vm143, %v100, 0.0
  %400 = vadd.xlane.f32.xlu0 %v399
  %v401 = vpop.xlane.xlu0 %400
  %v402 = vsel %vm143, %v101, 0.0
  %403 = vadd.xlane.f32.xlu0 %v402
  %v404 = vpop.xlane.xlu0 %403
  %v405 = vsel %vm143, %v102, 0.0
  %406 = vadd.xlane.f32.xlu0 %v405
  %v407 = vpop.xlane.xlu0 %406
  %v408 = vsel %vm143, %v103, 0.0
  %409 = vadd.xlane.f32.xlu0 %v408
  %v410 = vpop.xlane.xlu0 %409
  %v411 = vsel %vm143, %v104, 0.0
  %412 = vadd.xlane.f32.xlu0 %v411
  %v413 = vpop.xlane.xlu0 %412
  %v414 = vsel %vm143, %v105, 0.0
  %415 = vadd.xlane.f32.xlu0 %v414
  %v416 = vpop.xlane.xlu0 %415
  %v417 = vsel %vm143, %v106, 0.0
  %418 = vadd.xlane.f32.xlu0 %v417
  %v419 = vpop.xlane.xlu0 %418
  %v420 = vsel %vm143, %v107, 0.0
  %421 = vadd.xlane.f32.xlu0 %v420
  %v422 = vpop.xlane.xlu0 %421
  %v423 = vsel %vm143, %v108, 0.0
  %424 = vadd.xlane.f32.xlu0 %v423
  %v425 = vpop.xlane.xlu0 %424
  %v426 = vsel %vm143, %v109, 0.0
  %427 = vadd.xlane.f32.xlu0 %v426
  %v428 = vpop.xlane.xlu0 %427
  %v429 = vsel %vm143, %v110, 0.0
  %430 = vadd.xlane.f32.xlu0 %v429
  %v431 = vpop.xlane.xlu0 %430
  %v432 = vsel %vm143, %v111, 0.0
  %433 = vadd.xlane.f32.xlu0 %v432
  %v434 = vpop.xlane.xlu0 %433
  %v435 = vsel %vm143, %v112, 0.0
  %436 = vadd.xlane.f32.xlu0 %v435
  %v437 = vpop.xlane.xlu0 %436
  %v438 = vsel %vm143, %v113, 0.0
  %439 = vadd.xlane.f32.xlu0 %v438
  %v440 = vpop.xlane.xlu0 %439
  %v441 = vsel %vm143, %v114, 0.0
  %442 = vadd.xlane.f32.xlu0 %v441
  %v443 = vpop.xlane.xlu0 %442
  %v444 = vsel %vm143, %v115, 0.0
  %445 = vadd.xlane.f32.xlu0 %v444
  %v446 = vpop.xlane.xlu0 %445
  %v447 = vsel %vm143, %v116, 0.0
  %448 = vadd.xlane.f32.xlu0 %v447
  %v449 = vpop.xlane.xlu0 %448
  %v450 = vsel %vm143, %v117, 0.0
  %451 = vadd.xlane.f32.xlu0 %v450
  %v452 = vpop.xlane.xlu0 %451
  %v453 = vsel %vm143, %v118, 0.0
  %454 = vadd.xlane.f32.xlu0 %v453
  %v455 = vpop.xlane.xlu0 %454
  %v456 = vsel %vm143, %v119, 0.0
  %457 = vadd.xlane.f32.xlu0 %v456
  %v458 = vpop.xlane.xlu0 %457
  %v459 = vsel %vm143, %v120, 0.0
  %460 = vadd.xlane.f32.xlu0 %v459
  %v461 = vpop.xlane.xlu0 %460
  %v462 = vsel %vm143, %v121, 0.0
  %463 = vadd.xlane.f32.xlu0 %v462
  %v464 = vpop.xlane.xlu0 %463
  %v465 = vsel %vm143, %v122, 0.0
  %466 = vadd.xlane.f32.xlu0 %v465
  %v467 = vpop.xlane.xlu0 %466
  %v468 = vsel %vm143, %v123, 0.0
  %469 = vadd.xlane.f32.xlu0 %v468
  %v470 = vpop.xlane.xlu0 %469
  %v471 = vsel %vm143, %v124, 0.0
  %472 = vadd.xlane.f32.xlu0 %v471
  %v473 = vpop.xlane.xlu0 %472
  %v474 = vsel %vm143, %v125, 0.0
  %475 = vadd.xlane.f32.xlu0 %v474
  %v476 = vpop.xlane.xlu0 %475
  %v477 = vsel %vm143, %v126, 0.0
  %478 = vadd.xlane.f32.xlu0 %v477
  %v479 = vpop.xlane.xlu0 %478
  %v480 = vsel %vm143, %v127, 0.0
  %481 = vadd.xlane.f32.xlu0 %v480
  %v482 = vpop.xlane.xlu0 %481
  %v483 = vsel %vm143, %v128, 0.0
  %484 = vadd.xlane.f32.xlu0 %v483
  %v485 = vpop.xlane.xlu0 %484
  %v486 = vsel %vm143, %v129, 0.0
  %487 = vadd.xlane.f32.xlu0 %v486
  %v488 = vpop.xlane.xlu0 %487
  %v489 = vsel %vm143, %v130, 0.0
  %490 = vadd.xlane.f32.xlu0 %v489
  %v491 = vpop.xlane.xlu0 %490
  %v492 = vsel %vm143, %v131, 0.0
  %493 = vadd.xlane.f32.xlu0 %v492
  %v494 = vpop.xlane.xlu0 %493
  %v495 = vsel %vm143, %v132, 0.0
  %496 = vadd.xlane.f32.xlu0 %v495
  %v497 = vpop.xlane.xlu0 %496
  %v498 = vsel %vm143, %v133, 0.0
  %499 = vadd.xlane.f32.xlu0 %v498
  %v500 = vpop.xlane.xlu0 %499
  %v501 = vsel %vm143, %v134, 0.0
  %502 = vadd.xlane.f32.xlu0 %v501
  %v503 = vpop.xlane.xlu0 %502
  %v504 = vsel %vm143, %v135, 0.0
  %505 = vadd.xlane.f32.xlu0 %v504
  %v506 = vpop.xlane.xlu0 %505
  %v507 = vsel %vm143, %v136, 0.0
  %508 = vadd.xlane.f32.xlu0 %v507
  %v509 = vpop.xlane.xlu0 %508
  %v510 = vsel %vm143, %v137, 0.0
  %511 = vadd.xlane.f32.xlu0 %v510
  %v512 = vpop.xlane.xlu0 %511
  %v513 = vsel %vm143, %v138, 0.0
  %514 = vadd.xlane.f32.xlu0 %v513
  %v515 = vpop.xlane.xlu0 %514
  %v516 = vsel %vm143, %v139, 0.0
  %517 = vadd.xlane.f32.xlu0 %v516
  %v518 = vpop.xlane.xlu0 %517
  %v519 = vsel %vm143, %v140, 0.0
  %520 = vadd.xlane.f32.xlu0 %v519
  %v521 = vpop.xlane.xlu0 %520
  %v522 = vsel %vm143, %v141, 0.0
  %523 = vadd.xlane.f32.xlu0 %v522
  %v524 = vpop.xlane.xlu0 %523
  %v525 = vsel %vm143, %v142, 0.0
  %526 = vadd.xlane.f32.xlu0 %v525
  %v527 = vpop.xlane.xlu0 %526
  %v528 = vmul.f32 %v146, 0.010416667
  %v529 = vmul.f32 %v149, 0.010416667
  %v530 = vmul.f32 %v152, 0.010416667
  %v531 = vmul.f32 %v155, 0.010416667
  %v532 = vmul.f32 %v158, 0.010416667
  %v533 = vmul.f32 %v161, 0.010416667
  %v534 = vmul.f32 %v164, 0.010416667
  %v535 = vmul.f32 %v167, 0.010416667
  %v536 = vmul.f32 %v170, 0.010416667
  %v537 = vmul.f32 %v173, 0.010416667
  %v538 = vmul.f32 %v176, 0.010416667
  %v539 = vmul.f32 %v179, 0.010416667
  %v540 = vmul.f32 %v182, 0.010416667
  %v541 = vmul.f32 %v185, 0.010416667
  %v542 = vmul.f32 %v188, 0.010416667
  %v543 = vmul.f32 %v191, 0.010416667
  %v544 = vmul.f32 %v194, 0.010416667
  %v545 = vmul.f32 %v197, 0.010416667
  %v546 = vmul.f32 %v200, 0.010416667
  %v547 = vmul.f32 %v203, 0.010416667
  %v548 = vmul.f32 %v206, 0.010416667
  %v549 = vmul.f32 %v209, 0.010416667
  %v550 = vmul.f32 %v212, 0.010416667
  %v551 = vmul.f32 %v215, 0.010416667
  %v552 = vmul.f32 %v218, 0.010416667
  %v553 = vmul.f32 %v221, 0.010416667
  %v554 = vmul.f32 %v224, 0.010416667
  %v555 = vmul.f32 %v227, 0.010416667
  %v556 = vmul.f32 %v230, 0.010416667
  %v557 = vmul.f32 %v233, 0.010416667
  %v558 = vmul.f32 %v236, 0.010416667
  %v559 = vmul.f32 %v239, 0.010416667
  %v560 = vmul.f32 %v242, 0.010416667
  %v561 = vmul.f32 %v245, 0.010416667
  %v562 = vmul.f32 %v248, 0.010416667
  %v563 = vmul.f32 %v251, 0.010416667
  %v564 = vmul.f32 %v254, 0.010416667
  %v565 = vmul.f32 %v257, 0.010416667
  %v566 = vmul.f32 %v260, 0.010416667
  %v567 = vmul.f32 %v263, 0.010416667
  %v568 = vmul.f32 %v266, 0.010416667
  %v569 = vmul.f32 %v269, 0.010416667
  %v570 = vmul.f32 %v272, 0.010416667
  %v571 = vmul.f32 %v275, 0.010416667
  %v572 = vmul.f32 %v278, 0.010416667
  %v573 = vmul.f32 %v281, 0.010416667
  %v574 = vmul.f32 %v284, 0.010416667
  %v575 = vmul.f32 %v287, 0.010416667
  %v576 = vmul.f32 %v290, 0.010416667
  %v577 = vmul.f32 %v293, 0.010416667
  %v578 = vmul.f32 %v296, 0.010416667
  %v579 = vmul.f32 %v299, 0.010416667
  %v580 = vmul.f32 %v302, 0.010416667
  %v581 = vmul.f32 %v305, 0.010416667
  %v582 = vmul.f32 %v308, 0.010416667
  %v583 = vmul.f32 %v311, 0.010416667
  %v584 = vmul.f32 %v314, 0.010416667
  %v585 = vmul.f32 %v317, 0.010416667
  %v586 = vmul.f32 %v320, 0.010416667
  %v587 = vmul.f32 %v323, 0.010416667
  %v588 = vmul.f32 %v326, 0.010416667
  %v589 = vmul.f32 %v329, 0.010416667
  %v590 = vmul.f32 %v332, 0.010416667
  %v591 = vmul.f32 %v335, 0.010416667
  %v592 = vmul.f32 %v338, 0.010416667
  %v593 = vmul.f32 %v341, 0.010416667
  %v594 = vmul.f32 %v344, 0.010416667
  %v595 = vmul.f32 %v347, 0.010416667
  %v596 = vmul.f32 %v350, 0.010416667
  %v597 = vmul.f32 %v353, 0.010416667
  %v598 = vmul.f32 %v356, 0.010416667
  %v599 = vmul.f32 %v359, 0.010416667
  %v600 = vmul.f32 %v362, 0.010416667
  %v601 = vmul.f32 %v365, 0.010416667
  %v602 = vmul.f32 %v368, 0.010416667
  %v603 = vmul.f32 %v371, 0.010416667
  %v604 = vmul.f32 %v374, 0.010416667
  %v605 = vmul.f32 %v377, 0.010416667
  %v606 = vmul.f32 %v380, 0.010416667
  %v607 = vmul.f32 %v383, 0.010416667
  %v608 = vmul.f32 %v386, 0.010416667
  %v609 = vmul.f32 %v389, 0.010416667
  %v610 = vmul.f32 %v392, 0.010416667
  %v611 = vmul.f32 %v395, 0.010416667
  %v612 = vmul.f32 %v398, 0.010416667
  %v613 = vmul.f32 %v401, 0.010416667
  %v614 = vmul.f32 %v404, 0.010416667
  %v615 = vmul.f32 %v407, 0.010416667
  %v616 = vmul.f32 %v410, 0.010416667
  %v617 = vmul.f32 %v413, 0.010416667
  %v618 = vmul.f32 %v416, 0.010416667
  %v619 = vmul.f32 %v419, 0.010416667
  %v620 = vmul.f32 %v422, 0.010416667
  %v621 = vmul.f32 %v425, 0.010416667
  %v622 = vmul.f32 %v428, 0.010416667
  %v623 = vmul.f32 %v431, 0.010416667
  %v624 = vmul.f32 %v434, 0.010416667
  %v625 = vmul.f32 %v437, 0.010416667
  %v626 = vmul.f32 %v440, 0.010416667
  %v627 = vmul.f32 %v443, 0.010416667
  %v628 = vmul.f32 %v446, 0.010416667
  %v629 = vmul.f32 %v449, 0.010416667
  %v630 = vmul.f32 %v452, 0.010416667
  %v631 = vmul.f32 %v455, 0.010416667
  %v632 = vmul.f32 %v458, 0.010416667
  %v633 = vmul.f32 %v461, 0.010416667
  %v634 = vmul.f32 %v464, 0.010416667
  %v635 = vmul.f32 %v467, 0.010416667
  %v636 = vmul.f32 %v470, 0.010416667
  %v637 = vmul.f32 %v473, 0.010416667
  %v638 = vmul.f32 %v476, 0.010416667
  %v639 = vmul.f32 %v479, 0.010416667
  %v640 = vmul.f32 %v482, 0.010416667
  %v641 = vmul.f32 %v485, 0.010416667
  %v642 = vmul.f32 %v488, 0.010416667
  %v643 = vmul.f32 %v491, 0.010416667
  %v644 = vmul.f32 %v494, 0.010416667
  %v645 = vmul.f32 %v497, 0.010416667
  %v646 = vmul.f32 %v500, 0.010416667
  %v647 = vmul.f32 %v503, 0.010416667
  %v648 = vmul.f32 %v506, 0.010416667
  %v649 = vmul.f32 %v509, 0.010416667
  %v650 = vmul.f32 %v512, 0.010416667
  %v651 = vmul.f32 %v515, 0.010416667
  %v652 = vmul.f32 %v518, 0.010416667
  %v653 = vmul.f32 %v521, 0.010416667
  %v654 = vmul.f32 %v524, 0.010416667
  %v655 = vmul.f32 %v527, 0.010416667
  %v656 = vsub.f32 %v15, %v528
  %v657 = vsub.f32 %v16, %v529
  %v658 = vsub.f32 %v17, %v530
  %v659 = vsub.f32 %v18, %v531
  %v660 = vsub.f32 %v19, %v532
  %v661 = vsub.f32 %v20, %v533
  %v662 = vsub.f32 %v21, %v534
  %v663 = vsub.f32 %v22, %v535
  %v664 = vsub.f32 %v23, %v536
  %v665 = vsub.f32 %v24, %v537
  %v666 = vsub.f32 %v25, %v538
  %v667 = vsub.f32 %v26, %v539
  %v668 = vsub.f32 %v27, %v540
  %v669 = vsub.f32 %v28, %v541
  %v670 = vsub.f32 %v29, %v542
  %v671 = vsub.f32 %v30, %v543
  %v672 = vsub.f32 %v31, %v544
  %v673 = vsub.f32 %v32, %v545
  %v674 = vsub.f32 %v33, %v546
  %v675 = vsub.f32 %v34, %v547
  %v676 = vsub.f32 %v35, %v548
  %v677 = vsub.f32 %v36, %v549
  %v678 = vsub.f32 %v37, %v550
  %v679 = vsub.f32 %v38, %v551
  %v680 = vsub.f32 %v39, %v552
  %v681 = vsub.f32 %v40, %v553
  %v682 = vsub.f32 %v41, %v554
  %v683 = vsub.f32 %v42, %v555
  %v684 = vsub.f32 %v43, %v556
  %v685 = vsub.f32 %v44, %v557
  %v686 = vsub.f32 %v45, %v558
  %v687 = vsub.f32 %v46, %v559
  %v688 = vsub.f32 %v47, %v560
  %v689 = vsub.f32 %v48, %v561
  %v690 = vsub.f32 %v49, %v562
  %v691 = vsub.f32 %v50, %v563
  %v692 = vsub.f32 %v51, %v564
  %v693 = vsub.f32 %v52, %v565
  %v694 = vsub.f32 %v53, %v566
  %v695 = vsub.f32 %v54, %v567
  %v696 = vsub.f32 %v55, %v568
  %v697 = vsub.f32 %v56, %v569
  %v698 = vsub.f32 %v57, %v570
  %v699 = vsub.f32 %v58, %v571
  %v700 = vsub.f32 %v59, %v572
  %v701 = vsub.f32 %v60, %v573
  %v702 = vsub.f32 %v61, %v574
  %v703 = vsub.f32 %v62, %v575
  %v704 = vsub.f32 %v63, %v576
  %v705 = vsub.f32 %v64, %v577
  %v706 = vsub.f32 %v65, %v578
  %v707 = vsub.f32 %v66, %v579
  %v708 = vsub.f32 %v67, %v580
  %v709 = vsub.f32 %v68, %v581
  %v710 = vsub.f32 %v69, %v582
  %v711 = vsub.f32 %v70, %v583
  %v712 = vsub.f32 %v71, %v584
  %v713 = vsub.f32 %v72, %v585
  %v714 = vsub.f32 %v73, %v586
  %v715 = vsub.f32 %v74, %v587
  %v716 = vsub.f32 %v75, %v588
  %v717 = vsub.f32 %v76, %v589
  %v718 = vsub.f32 %v77, %v590
  %v719 = vsub.f32 %v78, %v591
  %v720 = vsub.f32 %v79, %v592
  %v721 = vsub.f32 %v80, %v593
  %v722 = vsub.f32 %v81, %v594
  %v723 = vsub.f32 %v82, %v595
  %v724 = vsub.f32 %v83, %v596
  %v725 = vsub.f32 %v84, %v597
  %v726 = vsub.f32 %v85, %v598
  %v727 = vsub.f32 %v86, %v599
  %v728 = vsub.f32 %v87, %v600
  %v729 = vsub.f32 %v88, %v601
  %v730 = vsub.f32 %v89, %v602
  %v731 = vsub.f32 %v90, %v603
  %v732 = vsub.f32 %v91, %v604
  %v733 = vsub.f32 %v92, %v605
  %v734 = vsub.f32 %v93, %v606
  %v735 = vsub.f32 %v94, %v607
  %v736 = vsub.f32 %v95, %v608
  %v737 = vsub.f32 %v96, %v609
  %v738 = vsub.f32 %v97, %v610
  %v739 = vsub.f32 %v98, %v611
  %v740 = vsub.f32 %v99, %v612
  %v741 = vsub.f32 %v100, %v613
  %v742 = vsub.f32 %v101, %v614
  %v743 = vsub.f32 %v102, %v615
  %v744 = vsub.f32 %v103, %v616
  %v745 = vsub.f32 %v104, %v617
  %v746 = vsub.f32 %v105, %v618
  %v747 = vsub.f32 %v106, %v619
  %v748 = vsub.f32 %v107, %v620
  %v749 = vsub.f32 %v108, %v621
  %v750 = vsub.f32 %v109, %v622
  %v751 = vsub.f32 %v110, %v623
  %v752 = vsub.f32 %v111, %v624
  %v753 = vsub.f32 %v112, %v625
  %v754 = vsub.f32 %v113, %v626
  %v755 = vsub.f32 %v114, %v627
  %v756 = vsub.f32 %v115, %v628
  %v757 = vsub.f32 %v116, %v629
  %v758 = vsub.f32 %v117, %v630
  %v759 = vsub.f32 %v118, %v631
  %v760 = vsub.f32 %v119, %v632
  %v761 = vsub.f32 %v120, %v633
  %v762 = vsub.f32 %v121, %v634
  %v763 = vsub.f32 %v122, %v635
  %v764 = vsub.f32 %v123, %v636
  %v765 = vsub.f32 %v124, %v637
  %v766 = vsub.f32 %v125, %v638
  %v767 = vsub.f32 %v126, %v639
  %v768 = vsub.f32 %v127, %v640
  %v769 = vsub.f32 %v128, %v641
  %v770 = vsub.f32 %v129, %v642
  %v771 = vsub.f32 %v130, %v643
  %v772 = vsub.f32 %v131, %v644
  %v773 = vsub.f32 %v132, %v645
  %v774 = vsub.f32 %v133, %v646
  %v775 = vsub.f32 %v134, %v647
  %v776 = vsub.f32 %v135, %v648
  %v777 = vsub.f32 %v136, %v649
  %v778 = vsub.f32 %v137, %v650
  %v779 = vsub.f32 %v138, %v651
  %v780 = vsub.f32 %v139, %v652
  %v781 = vsub.f32 %v140, %v653
  %v782 = vsub.f32 %v141, %v654
  %v783 = vsub.f32 %v142, %v655
  %v784 = vmul.f32 %v656, %v656
  %v785 = vmul.f32 %v657, %v657
  %v786 = vmul.f32 %v658, %v658
  %v787 = vmul.f32 %v659, %v659
  %v788 = vmul.f32 %v660, %v660
  %v789 = vmul.f32 %v661, %v661
  %v790 = vmul.f32 %v662, %v662
  %v791 = vmul.f32 %v663, %v663
  %v792 = vmul.f32 %v664, %v664
  %v793 = vmul.f32 %v665, %v665
  %v794 = vmul.f32 %v666, %v666
  %v795 = vmul.f32 %v667, %v667
  %v796 = vmul.f32 %v668, %v668
  %v797 = vmul.f32 %v669, %v669
  %v798 = vmul.f32 %v670, %v670
  %v799 = vmul.f32 %v671, %v671
  %v800 = vmul.f32 %v672, %v672
  %v801 = vmul.f32 %v673, %v673
  %v802 = vmul.f32 %v674, %v674
  %v803 = vmul.f32 %v675, %v675
  %v804 = vmul.f32 %v676, %v676
  %v805 = vmul.f32 %v677, %v677
  %v806 = vmul.f32 %v678, %v678
  %v807 = vmul.f32 %v679, %v679
  %v808 = vmul.f32 %v680, %v680
  %v809 = vmul.f32 %v681, %v681
  %v810 = vmul.f32 %v682, %v682
  %v811 = vmul.f32 %v683, %v683
  %v812 = vmul.f32 %v684, %v684
  %v813 = vmul.f32 %v685, %v685
  %v814 = vmul.f32 %v686, %v686
  %v815 = vmul.f32 %v687, %v687
  %v816 = vmul.f32 %v688, %v688
  %v817 = vmul.f32 %v689, %v689
  %v818 = vmul.f32 %v690, %v690
  %v819 = vmul.f32 %v691, %v691
  %v820 = vmul.f32 %v692, %v692
  %v821 = vmul.f32 %v693, %v693
  %v822 = vmul.f32 %v694, %v694
  %v823 = vmul.f32 %v695, %v695
  %v824 = vmul.f32 %v696, %v696
  %v825 = vmul.f32 %v697, %v697
  %v826 = vmul.f32 %v698, %v698
  %v827 = vmul.f32 %v699, %v699
  %v828 = vmul.f32 %v700, %v700
  %v829 = vmul.f32 %v701, %v701
  %v830 = vmul.f32 %v702, %v702
  %v831 = vmul.f32 %v703, %v703
  %v832 = vmul.f32 %v704, %v704
  %v833 = vmul.f32 %v705, %v705
  %v834 = vmul.f32 %v706, %v706
  %v835 = vmul.f32 %v707, %v707
  %v836 = vmul.f32 %v708, %v708
  %v837 = vmul.f32 %v709, %v709
  %v838 = vmul.f32 %v710, %v710
  %v839 = vmul.f32 %v711, %v711
  %v840 = vmul.f32 %v712, %v712
  %v841 = vmul.f32 %v713, %v713
  %v842 = vmul.f32 %v714, %v714
  %v843 = vmul.f32 %v715, %v715
  %v844 = vmul.f32 %v716, %v716
  %v845 = vmul.f32 %v717, %v717
  %v846 = vmul.f32 %v718, %v718
  %v847 = vmul.f32 %v719, %v719
  %v848 = vmul.f32 %v720, %v720
  %v849 = vmul.f32 %v721, %v721
  %v850 = vmul.f32 %v722, %v722
  %v851 = vmul.f32 %v723, %v723
  %v852 = vmul.f32 %v724, %v724
  %v853 = vmul.f32 %v725, %v725
  %v854 = vmul.f32 %v726, %v726
  %v855 = vmul.f32 %v727, %v727
  %v856 = vmul.f32 %v728, %v728
  %v857 = vmul.f32 %v729, %v729
  %v858 = vmul.f32 %v730, %v730
  %v859 = vmul.f32 %v731, %v731
  %v860 = vmul.f32 %v732, %v732
  %v861 = vmul.f32 %v733, %v733
  %v862 = vmul.f32 %v734, %v734
  %v863 = vmul.f32 %v735, %v735
  %v864 = vmul.f32 %v736, %v736
  %v865 = vmul.f32 %v737, %v737
  %v866 = vmul.f32 %v738, %v738
  %v867 = vmul.f32 %v739, %v739
  %v868 = vmul.f32 %v740, %v740
  %v869 = vmul.f32 %v741, %v741
  %v870 = vmul.f32 %v742, %v742
  %v871 = vmul.f32 %v743, %v743
  %v872 = vmul.f32 %v744, %v744
  %v873 = vmul.f32 %v745, %v745
  %v874 = vmul.f32 %v746, %v746
  %v875 = vmul.f32 %v747, %v747
  %v876 = vmul.f32 %v748, %v748
  %v877 = vmul.f32 %v749, %v749
  %v878 = vmul.f32 %v750, %v750
  %v879 = vmul.f32 %v751, %v751
  %v880 = vmul.f32 %v752, %v752
  %v881 = vmul.f32 %v753, %v753
  %v882 = vmul.f32 %v754, %v754
  %v883 = vmul.f32 %v755, %v755
  %v884 = vmul.f32 %v756, %v756
  %v885 = vmul.f32 %v757, %v757
  %v886 = vmul.f32 %v758, %v758
  %v887 = vmul.f32 %v759, %v759
  %v888 = vmul.f32 %v760, %v760
  %v889 = vmul.f32 %v761, %v761
  %v890 = vmul.f32 %v762, %v762
  %v891 = vmul.f32 %v763, %v763
  %v892 = vmul.f32 %v764, %v764
  %v893 = vmul.f32 %v765, %v765
  %v894 = vmul.f32 %v766, %v766
  %v895 = vmul.f32 %v767, %v767
  %v896 = vmul.f32 %v768, %v768
  %v897 = vmul.f32 %v769, %v769
  %v898 = vmul.f32 %v770, %v770
  %v899 = vmul.f32 %v771, %v771
  %v900 = vmul.f32 %v772, %v772
  %v901 = vmul.f32 %v773, %v773
  %v902 = vmul.f32 %v774, %v774
  %v903 = vmul.f32 %v775, %v775
  %v904 = vmul.f32 %v776, %v776
  %v905 = vmul.f32 %v777, %v777
  %v906 = vmul.f32 %v778, %v778
  %v907 = vmul.f32 %v779, %v779
  %v908 = vmul.f32 %v780, %v780
  %v909 = vmul.f32 %v781, %v781
  %v910 = vmul.f32 %v782, %v782
  %v911 = vmul.f32 %v783, %v783
  %v912 = vsel %vm143, %v784, 0.0
  %913 = vadd.xlane.f32.xlu0 %v912
  %v914 = vpop.xlane.xlu0 %913
  %v915 = vsel %vm143, %v785, 0.0
  %916 = vadd.xlane.f32.xlu0 %v915
  %v917 = vpop.xlane.xlu0 %916
  %v918 = vsel %vm143, %v786, 0.0
  %919 = vadd.xlane.f32.xlu0 %v918
  %v920 = vpop.xlane.xlu0 %919
  %v921 = vsel %vm143, %v787, 0.0
  %922 = vadd.xlane.f32.xlu0 %v921
  %v923 = vpop.xlane.xlu0 %922
  %v924 = vsel %vm143, %v788, 0.0
  %925 = vadd.xlane.f32.xlu0 %v924
  %v926 = vpop.xlane.xlu0 %925
  %v927 = vsel %vm143, %v789, 0.0
  %928 = vadd.xlane.f32.xlu0 %v927
  %v929 = vpop.xlane.xlu0 %928
  %v930 = vsel %vm143, %v790, 0.0
  %931 = vadd.xlane.f32.xlu0 %v930
  %v932 = vpop.xlane.xlu0 %931
  %v933 = vsel %vm143, %v791, 0.0
  %934 = vadd.xlane.f32.xlu0 %v933
  %v935 = vpop.xlane.xlu0 %934
  %v936 = vsel %vm143, %v792, 0.0
  %937 = vadd.xlane.f32.xlu0 %v936
  %v938 = vpop.xlane.xlu0 %937
  %v939 = vsel %vm143, %v793, 0.0
  %940 = vadd.xlane.f32.xlu0 %v939
  %v941 = vpop.xlane.xlu0 %940
  %v942 = vsel %vm143, %v794, 0.0
  %943 = vadd.xlane.f32.xlu0 %v942
  %v944 = vpop.xlane.xlu0 %943
  %v945 = vsel %vm143, %v795, 0.0
  %946 = vadd.xlane.f32.xlu0 %v945
  %v947 = vpop.xlane.xlu0 %946
  %v948 = vsel %vm143, %v796, 0.0
  %949 = vadd.xlane.f32.xlu0 %v948
  %v950 = vpop.xlane.xlu0 %949
  %v951 = vsel %vm143, %v797, 0.0
  %952 = vadd.xlane.f32.xlu0 %v951
  %v953 = vpop.xlane.xlu0 %952
  %v954 = vsel %vm143, %v798, 0.0
  %955 = vadd.xlane.f32.xlu0 %v954
  %v956 = vpop.xlane.xlu0 %955
  %v957 = vsel %vm143, %v799, 0.0
  %958 = vadd.xlane.f32.xlu0 %v957
  %v959 = vpop.xlane.xlu0 %958
  %v960 = vsel %vm143, %v800, 0.0
  %961 = vadd.xlane.f32.xlu0 %v960
  %v962 = vpop.xlane.xlu0 %961
  %v963 = vsel %vm143, %v801, 0.0
  %964 = vadd.xlane.f32.xlu0 %v963
  %v965 = vpop.xlane.xlu0 %964
  %v966 = vsel %vm143, %v802, 0.0
  %967 = vadd.xlane.f32.xlu0 %v966
  %v968 = vpop.xlane.xlu0 %967
  %v969 = vsel %vm143, %v803, 0.0
  %970 = vadd.xlane.f32.xlu0 %v969
  %v971 = vpop.xlane.xlu0 %970
  %v972 = vsel %vm143, %v804, 0.0
  %973 = vadd.xlane.f32.xlu0 %v972
  %v974 = vpop.xlane.xlu0 %973
  %v975 = vsel %vm143, %v805, 0.0
  %976 = vadd.xlane.f32.xlu0 %v975
  %v977 = vpop.xlane.xlu0 %976
  %v978 = vsel %vm143, %v806, 0.0
  %979 = vadd.xlane.f32.xlu0 %v978
  %v980 = vpop.xlane.xlu0 %979
  %v981 = vsel %vm143, %v807, 0.0
  %982 = vadd.xlane.f32.xlu0 %v981
  %v983 = vpop.xlane.xlu0 %982
  %v984 = vsel %vm143, %v808, 0.0
  %985 = vadd.xlane.f32.xlu0 %v984
  %v986 = vpop.xlane.xlu0 %985
  %v987 = vsel %vm143, %v809, 0.0
  %988 = vadd.xlane.f32.xlu0 %v987
  %v989 = vpop.xlane.xlu0 %988
  %v990 = vsel %vm143, %v810, 0.0
  %991 = vadd.xlane.f32.xlu0 %v990
  %v992 = vpop.xlane.xlu0 %991
  %v993 = vsel %vm143, %v811, 0.0
  %994 = vadd.xlane.f32.xlu0 %v993
  %v995 = vpop.xlane.xlu0 %994
  %v996 = vsel %vm143, %v812, 0.0
  %997 = vadd.xlane.f32.xlu0 %v996
  %v998 = vpop.xlane.xlu0 %997
  %v999 = vsel %vm143, %v813, 0.0
  %1000 = vadd.xlane.f32.xlu0 %v999
  %v1001 = vpop.xlane.xlu0 %1000
  %v1002 = vsel %vm143, %v814, 0.0
  %1003 = vadd.xlane.f32.xlu0 %v1002
  %v1004 = vpop.xlane.xlu0 %1003
  %v1005 = vsel %vm143, %v815, 0.0
  %1006 = vadd.xlane.f32.xlu0 %v1005
  %v1007 = vpop.xlane.xlu0 %1006
  %v1008 = vsel %vm143, %v816, 0.0
  %1009 = vadd.xlane.f32.xlu0 %v1008
  %v1010 = vpop.xlane.xlu0 %1009
  %v1011 = vsel %vm143, %v817, 0.0
  %1012 = vadd.xlane.f32.xlu0 %v1011
  %v1013 = vpop.xlane.xlu0 %1012
  %v1014 = vsel %vm143, %v818, 0.0
  %1015 = vadd.xlane.f32.xlu0 %v1014
  %v1016 = vpop.xlane.xlu0 %1015
  %v1017 = vsel %vm143, %v819, 0.0
  %1018 = vadd.xlane.f32.xlu0 %v1017
  %v1019 = vpop.xlane.xlu0 %1018
  %v1020 = vsel %vm143, %v820, 0.0
  %1021 = vadd.xlane.f32.xlu0 %v1020
  %v1022 = vpop.xlane.xlu0 %1021
  %v1023 = vsel %vm143, %v821, 0.0
  %1024 = vadd.xlane.f32.xlu0 %v1023
  %v1025 = vpop.xlane.xlu0 %1024
  %v1026 = vsel %vm143, %v822, 0.0
  %1027 = vadd.xlane.f32.xlu0 %v1026
  %v1028 = vpop.xlane.xlu0 %1027
  %v1029 = vsel %vm143, %v823, 0.0
  %1030 = vadd.xlane.f32.xlu0 %v1029
  %v1031 = vpop.xlane.xlu0 %1030
  %v1032 = vsel %vm143, %v824, 0.0
  %1033 = vadd.xlane.f32.xlu0 %v1032
  %v1034 = vpop.xlane.xlu0 %1033
  %v1035 = vsel %vm143, %v825, 0.0
  %1036 = vadd.xlane.f32.xlu0 %v1035
  %v1037 = vpop.xlane.xlu0 %1036
  %v1038 = vsel %vm143, %v826, 0.0
  %1039 = vadd.xlane.f32.xlu0 %v1038
  %v1040 = vpop.xlane.xlu0 %1039
  %v1041 = vsel %vm143, %v827, 0.0
  %1042 = vadd.xlane.f32.xlu0 %v1041
  %v1043 = vpop.xlane.xlu0 %1042
  %v1044 = vsel %vm143, %v828, 0.0
  %1045 = vadd.xlane.f32.xlu0 %v1044
  %v1046 = vpop.xlane.xlu0 %1045
  %v1047 = vsel %vm143, %v829, 0.0
  %1048 = vadd.xlane.f32.xlu0 %v1047
  %v1049 = vpop.xlane.xlu0 %1048
  %v1050 = vsel %vm143, %v830, 0.0
  %1051 = vadd.xlane.f32.xlu0 %v1050
  %v1052 = vpop.xlane.xlu0 %1051
  %v1053 = vsel %vm143, %v831, 0.0
  %1054 = vadd.xlane.f32.xlu0 %v1053
  %v1055 = vpop.xlane.xlu0 %1054
  %v1056 = vsel %vm143, %v832, 0.0
  %1057 = vadd.xlane.f32.xlu0 %v1056
  %v1058 = vpop.xlane.xlu0 %1057
  %v1059 = vsel %vm143, %v833, 0.0
  %1060 = vadd.xlane.f32.xlu0 %v1059
  %v1061 = vpop.xlane.xlu0 %1060
  %v1062 = vsel %vm143, %v834, 0.0
  %1063 = vadd.xlane.f32.xlu0 %v1062
  %v1064 = vpop.xlane.xlu0 %1063
  %v1065 = vsel %vm143, %v835, 0.0
  %1066 = vadd.xlane.f32.xlu0 %v1065
  %v1067 = vpop.xlane.xlu0 %1066
  %v1068 = vsel %vm143, %v836, 0.0
  %1069 = vadd.xlane.f32.xlu0 %v1068
  %v1070 = vpop.xlane.xlu0 %1069
  %v1071 = vsel %vm143, %v837, 0.0
  %1072 = vadd.xlane.f32.xlu0 %v1071
  %v1073 = vpop.xlane.xlu0 %1072
  %v1074 = vsel %vm143, %v838, 0.0
  %1075 = vadd.xlane.f32.xlu0 %v1074
  %v1076 = vpop.xlane.xlu0 %1075
  %v1077 = vsel %vm143, %v839, 0.0
  %1078 = vadd.xlane.f32.xlu0 %v1077
  %v1079 = vpop.xlane.xlu0 %1078
  %v1080 = vsel %vm143, %v840, 0.0
  %1081 = vadd.xlane.f32.xlu0 %v1080
  %v1082 = vpop.xlane.xlu0 %1081
  %v1083 = vsel %vm143, %v841, 0.0
  %1084 = vadd.xlane.f32.xlu0 %v1083
  %v1085 = vpop.xlane.xlu0 %1084
  %v1086 = vsel %vm143, %v842, 0.0
  %1087 = vadd.xlane.f32.xlu0 %v1086
  %v1088 = vpop.xlane.xlu0 %1087
  %v1089 = vsel %vm143, %v843, 0.0
  %1090 = vadd.xlane.f32.xlu0 %v1089
  %v1091 = vpop.xlane.xlu0 %1090
  %v1092 = vsel %vm143, %v844, 0.0
  %1093 = vadd.xlane.f32.xlu0 %v1092
  %v1094 = vpop.xlane.xlu0 %1093
  %v1095 = vsel %vm143, %v845, 0.0
  %1096 = vadd.xlane.f32.xlu0 %v1095
  %v1097 = vpop.xlane.xlu0 %1096
  %v1098 = vsel %vm143, %v846, 0.0
  %1099 = vadd.xlane.f32.xlu0 %v1098
  %v1100 = vpop.xlane.xlu0 %1099
  %v1101 = vsel %vm143, %v847, 0.0
  %1102 = vadd.xlane.f32.xlu0 %v1101
  %v1103 = vpop.xlane.xlu0 %1102
  %v1104 = vsel %vm143, %v848, 0.0
  %1105 = vadd.xlane.f32.xlu0 %v1104
  %v1106 = vpop.xlane.xlu0 %1105
  %v1107 = vsel %vm143, %v849, 0.0
  %1108 = vadd.xlane.f32.xlu0 %v1107
  %v1109 = vpop.xlane.xlu0 %1108
  %v1110 = vsel %vm143, %v850, 0.0
  %1111 = vadd.xlane.f32.xlu0 %v1110
  %v1112 = vpop.xlane.xlu0 %1111
  %v1113 = vsel %vm143, %v851, 0.0
  %1114 = vadd.xlane.f32.xlu0 %v1113
  %v1115 = vpop.xlane.xlu0 %1114
  %v1116 = vsel %vm143, %v852, 0.0
  %1117 = vadd.xlane.f32.xlu0 %v1116
  %v1118 = vpop.xlane.xlu0 %1117
  %v1119 = vsel %vm143, %v853, 0.0
  %1120 = vadd.xlane.f32.xlu0 %v1119
  %v1121 = vpop.xlane.xlu0 %1120
  %v1122 = vsel %vm143, %v854, 0.0
  %1123 = vadd.xlane.f32.xlu0 %v1122
  %v1124 = vpop.xlane.xlu0 %1123
  %v1125 = vsel %vm143, %v855, 0.0
  %1126 = vadd.xlane.f32.xlu0 %v1125
  %v1127 = vpop.xlane.xlu0 %1126
  %v1128 = vsel %vm143, %v856, 0.0
  %1129 = vadd.xlane.f32.xlu0 %v1128
  %v1130 = vpop.xlane.xlu0 %1129
  %v1131 = vsel %vm143, %v857, 0.0
  %1132 = vadd.xlane.f32.xlu0 %v1131
  %v1133 = vpop.xlane.xlu0 %1132
  %v1134 = vsel %vm143, %v858, 0.0
  %1135 = vadd.xlane.f32.xlu0 %v1134
  %v1136 = vpop.xlane.xlu0 %1135
  %v1137 = vsel %vm143, %v859, 0.0
  %1138 = vadd.xlane.f32.xlu0 %v1137
  %v1139 = vpop.xlane.xlu0 %1138
  %v1140 = vsel %vm143, %v860, 0.0
  %1141 = vadd.xlane.f32.xlu0 %v1140
  %v1142 = vpop.xlane.xlu0 %1141
  %v1143 = vsel %vm143, %v861, 0.0
  %1144 = vadd.xlane.f32.xlu0 %v1143
  %v1145 = vpop.xlane.xlu0 %1144
  %v1146 = vsel %vm143, %v862, 0.0
  %1147 = vadd.xlane.f32.xlu0 %v1146
  %v1148 = vpop.xlane.xlu0 %1147
  %v1149 = vsel %vm143, %v863, 0.0
  %1150 = vadd.xlane.f32.xlu0 %v1149
  %v1151 = vpop.xlane.xlu0 %1150
  %v1152 = vsel %vm143, %v864, 0.0
  %1153 = vadd.xlane.f32.xlu0 %v1152
  %v1154 = vpop.xlane.xlu0 %1153
  %v1155 = vsel %vm143, %v865, 0.0
  %1156 = vadd.xlane.f32.xlu0 %v1155
  %v1157 = vpop.xlane.xlu0 %1156
  %v1158 = vsel %vm143, %v866, 0.0
  %1159 = vadd.xlane.f32.xlu0 %v1158
  %v1160 = vpop.xlane.xlu0 %1159
  %v1161 = vsel %vm143, %v867, 0.0
  %1162 = vadd.xlane.f32.xlu0 %v1161
  %v1163 = vpop.xlane.xlu0 %1162
  %v1164 = vsel %vm143, %v868, 0.0
  %1165 = vadd.xlane.f32.xlu0 %v1164
  %v1166 = vpop.xlane.xlu0 %1165
  %v1167 = vsel %vm143, %v869, 0.0
  %1168 = vadd.xlane.f32.xlu0 %v1167
  %v1169 = vpop.xlane.xlu0 %1168
  %v1170 = vsel %vm143, %v870, 0.0
  %1171 = vadd.xlane.f32.xlu0 %v1170
  %v1172 = vpop.xlane.xlu0 %1171
  %v1173 = vsel %vm143, %v871, 0.0
  %1174 = vadd.xlane.f32.xlu0 %v1173
  %v1175 = vpop.xlane.xlu0 %1174
  %v1176 = vsel %vm143, %v872, 0.0
  %1177 = vadd.xlane.f32.xlu0 %v1176
  %v1178 = vpop.xlane.xlu0 %1177
  %v1179 = vsel %vm143, %v873, 0.0
  %1180 = vadd.xlane.f32.xlu0 %v1179
  %v1181 = vpop.xlane.xlu0 %1180
  %v1182 = vsel %vm143, %v874, 0.0
  %1183 = vadd.xlane.f32.xlu0 %v1182
  %v1184 = vpop.xlane.xlu0 %1183
  %v1185 = vsel %vm143, %v875, 0.0
  %1186 = vadd.xlane.f32.xlu0 %v1185
  %v1187 = vpop.xlane.xlu0 %1186
  %v1188 = vsel %vm143, %v876, 0.0
  %1189 = vadd.xlane.f32.xlu0 %v1188
  %v1190 = vpop.xlane.xlu0 %1189
  %v1191 = vsel %vm143, %v877, 0.0
  %1192 = vadd.xlane.f32.xlu0 %v1191
  %v1193 = vpop.xlane.xlu0 %1192
  %v1194 = vsel %vm143, %v878, 0.0
  %1195 = vadd.xlane.f32.xlu0 %v1194
  %v1196 = vpop.xlane.xlu0 %1195
  %v1197 = vsel %vm143, %v879, 0.0
  %1198 = vadd.xlane.f32.xlu0 %v1197
  %v1199 = vpop.xlane.xlu0 %1198
  %v1200 = vsel %vm143, %v880, 0.0
  %1201 = vadd.xlane.f32.xlu0 %v1200
  %v1202 = vpop.xlane.xlu0 %1201
  %v1203 = vsel %vm143, %v881, 0.0
  %1204 = vadd.xlane.f32.xlu0 %v1203
  %v1205 = vpop.xlane.xlu0 %1204
  %v1206 = vsel %vm143, %v882, 0.0
  %1207 = vadd.xlane.f32.xlu0 %v1206
  %v1208 = vpop.xlane.xlu0 %1207
  %v1209 = vsel %vm143, %v883, 0.0
  %1210 = vadd.xlane.f32.xlu0 %v1209
  %v1211 = vpop.xlane.xlu0 %1210
  %v1212 = vsel %vm143, %v884, 0.0
  %1213 = vadd.xlane.f32.xlu0 %v1212
  %v1214 = vpop.xlane.xlu0 %1213
  %v1215 = vsel %vm143, %v885, 0.0
  %1216 = vadd.xlane.f32.xlu0 %v1215
  %v1217 = vpop.xlane.xlu0 %1216
  %v1218 = vsel %vm143, %v886, 0.0
  %1219 = vadd.xlane.f32.xlu0 %v1218
  %v1220 = vpop.xlane.xlu0 %1219
  %v1221 = vsel %vm143, %v887, 0.0
  %1222 = vadd.xlane.f32.xlu0 %v1221
  %v1223 = vpop.xlane.xlu0 %1222
  %v1224 = vsel %vm143, %v888, 0.0
  %1225 = vadd.xlane.f32.xlu0 %v1224
  %v1226 = vpop.xlane.xlu0 %1225
  %v1227 = vsel %vm143, %v889, 0.0
  %1228 = vadd.xlane.f32.xlu0 %v1227
  %v1229 = vpop.xlane.xlu0 %1228
  %v1230 = vsel %vm143, %v890, 0.0
  %1231 = vadd.xlane.f32.xlu0 %v1230
  %v1232 = vpop.xlane.xlu0 %1231
  %v1233 = vsel %vm143, %v891, 0.0
  %1234 = vadd.xlane.f32.xlu0 %v1233
  %v1235 = vpop.xlane.xlu0 %1234
  %v1236 = vsel %vm143, %v892, 0.0
  %1237 = vadd.xlane.f32.xlu0 %v1236
  %v1238 = vpop.xlane.xlu0 %1237
  %v1239 = vsel %vm143, %v893, 0.0
  %1240 = vadd.xlane.f32.xlu0 %v1239
  %v1241 = vpop.xlane.xlu0 %1240
  %v1242 = vsel %vm143, %v894, 0.0
  %1243 = vadd.xlane.f32.xlu0 %v1242
  %v1244 = vpop.xlane.xlu0 %1243
  %v1245 = vsel %vm143, %v895, 0.0
  %1246 = vadd.xlane.f32.xlu0 %v1245
  %v1247 = vpop.xlane.xlu0 %1246
  %v1248 = vsel %vm143, %v896, 0.0
  %1249 = vadd.xlane.f32.xlu0 %v1248
  %v1250 = vpop.xlane.xlu0 %1249
  %v1251 = vsel %vm143, %v897, 0.0
  %1252 = vadd.xlane.f32.xlu0 %v1251
  %v1253 = vpop.xlane.xlu0 %1252
  %v1254 = vsel %vm143, %v898, 0.0
  %1255 = vadd.xlane.f32.xlu0 %v1254
  %v1256 = vpop.xlane.xlu0 %1255
  %v1257 = vsel %vm143, %v899, 0.0
  %1258 = vadd.xlane.f32.xlu0 %v1257
  %v1259 = vpop.xlane.xlu0 %1258
  %v1260 = vsel %vm143, %v900, 0.0
  %1261 = vadd.xlane.f32.xlu0 %v1260
  %v1262 = vpop.xlane.xlu0 %1261
  %v1263 = vsel %vm143, %v901, 0.0
  %1264 = vadd.xlane.f32.xlu0 %v1263
  %v1265 = vpop.xlane.xlu0 %1264
  %v1266 = vsel %vm143, %v902, 0.0
  %1267 = vadd.xlane.f32.xlu0 %v1266
  %v1268 = vpop.xlane.xlu0 %1267
  %v1269 = vsel %vm143, %v903, 0.0
  %1270 = vadd.xlane.f32.xlu0 %v1269
  %v1271 = vpop.xlane.xlu0 %1270
  %v1272 = vsel %vm143, %v904, 0.0
  %1273 = vadd.xlane.f32.xlu0 %v1272
  %v1274 = vpop.xlane.xlu0 %1273
  %v1275 = vsel %vm143, %v905, 0.0
  %1276 = vadd.xlane.f32.xlu0 %v1275
  %v1277 = vpop.xlane.xlu0 %1276
  %v1278 = vsel %vm143, %v906, 0.0
  %1279 = vadd.xlane.f32.xlu0 %v1278
  %v1280 = vpop.xlane.xlu0 %1279
  %v1281 = vsel %vm143, %v907, 0.0
  %1282 = vadd.xlane.f32.xlu0 %v1281
  %v1283 = vpop.xlane.xlu0 %1282
  %v1284 = vsel %vm143, %v908, 0.0
  %1285 = vadd.xlane.f32.xlu0 %v1284
  %v1286 = vpop.xlane.xlu0 %1285
  %v1287 = vsel %vm143, %v909, 0.0
  %1288 = vadd.xlane.f32.xlu0 %v1287
  %v1289 = vpop.xlane.xlu0 %1288
  %v1290 = vsel %vm143, %v910, 0.0
  %1291 = vadd.xlane.f32.xlu0 %v1290
  %v1292 = vpop.xlane.xlu0 %1291
  %v1293 = vsel %vm143, %v911, 0.0
  %1294 = vadd.xlane.f32.xlu0 %v1293
  %v1295 = vpop.xlane.xlu0 %1294
  %v1296 = vmul.f32 %v914, 0.010526316
  %v1297 = vmul.f32 %v917, 0.010526316
  %v1298 = vmul.f32 %v920, 0.010526316
  %v1299 = vmul.f32 %v923, 0.010526316
  %v1300 = vmul.f32 %v926, 0.010526316
  %v1301 = vmul.f32 %v929, 0.010526316
  %v1302 = vmul.f32 %v932, 0.010526316
  %v1303 = vmul.f32 %v935, 0.010526316
  %v1304 = vmul.f32 %v938, 0.010526316
  %v1305 = vmul.f32 %v941, 0.010526316
  %v1306 = vmul.f32 %v944, 0.010526316
  %v1307 = vmul.f32 %v947, 0.010526316
  %v1308 = vmul.f32 %v950, 0.010526316
  %v1309 = vmul.f32 %v953, 0.010526316
  %v1310 = vmul.f32 %v956, 0.010526316
  %v1311 = vmul.f32 %v959, 0.010526316
  %v1312 = vmul.f32 %v962, 0.010526316
  %v1313 = vmul.f32 %v965, 0.010526316
  %v1314 = vmul.f32 %v968, 0.010526316
  %v1315 = vmul.f32 %v971, 0.010526316
  %v1316 = vmul.f32 %v974, 0.010526316
  %v1317 = vmul.f32 %v977, 0.010526316
  %v1318 = vmul.f32 %v980, 0.010526316
  %v1319 = vmul.f32 %v983, 0.010526316
  %v1320 = vmul.f32 %v986, 0.010526316
  %v1321 = vmul.f32 %v989, 0.010526316
  %v1322 = vmul.f32 %v992, 0.010526316
  %v1323 = vmul.f32 %v995, 0.010526316
  %v1324 = vmul.f32 %v998, 0.010526316
  %v1325 = vmul.f32 %v1001, 0.010526316
  %v1326 = vmul.f32 %v1004, 0.010526316
  %v1327 = vmul.f32 %v1007, 0.010526316
  %v1328 = vmul.f32 %v1010, 0.010526316
  %v1329 = vmul.f32 %v1013, 0.010526316
  %v1330 = vmul.f32 %v1016, 0.010526316
  %v1331 = vmul.f32 %v1019, 0.010526316
  %v1332 = vmul.f32 %v1022, 0.010526316
  %v1333 = vmul.f32 %v1025, 0.010526316
  %v1334 = vmul.f32 %v1028, 0.010526316
  %v1335 = vmul.f32 %v1031, 0.010526316
  %v1336 = vmul.f32 %v1034, 0.010526316
  %v1337 = vmul.f32 %v1037, 0.010526316
  %v1338 = vmul.f32 %v1040, 0.010526316
  %v1339 = vmul.f32 %v1043, 0.010526316
  %v1340 = vmul.f32 %v1046, 0.010526316
  %v1341 = vmul.f32 %v1049, 0.010526316
  %v1342 = vmul.f32 %v1052, 0.010526316
  %v1343 = vmul.f32 %v1055, 0.010526316
  %v1344 = vmul.f32 %v1058, 0.010526316
  %v1345 = vmul.f32 %v1061, 0.010526316
  %v1346 = vmul.f32 %v1064, 0.010526316
  %v1347 = vmul.f32 %v1067, 0.010526316
  %v1348 = vmul.f32 %v1070, 0.010526316
  %v1349 = vmul.f32 %v1073, 0.010526316
  %v1350 = vmul.f32 %v1076, 0.010526316
  %v1351 = vmul.f32 %v1079, 0.010526316
  %v1352 = vmul.f32 %v1082, 0.010526316
  %v1353 = vmul.f32 %v1085, 0.010526316
  %v1354 = vmul.f32 %v1088, 0.010526316
  %v1355 = vmul.f32 %v1091, 0.010526316
  %v1356 = vmul.f32 %v1094, 0.010526316
  %v1357 = vmul.f32 %v1097, 0.010526316
  %v1358 = vmul.f32 %v1100, 0.010526316
  %v1359 = vmul.f32 %v1103, 0.010526316
  %v1360 = vmul.f32 %v1106, 0.010526316
  %v1361 = vmul.f32 %v1109, 0.010526316
  %v1362 = vmul.f32 %v1112, 0.010526316
  %v1363 = vmul.f32 %v1115, 0.010526316
  %v1364 = vmul.f32 %v1118, 0.010526316
  %v1365 = vmul.f32 %v1121, 0.010526316
  %v1366 = vmul.f32 %v1124, 0.010526316
  %v1367 = vmul.f32 %v1127, 0.010526316
  %v1368 = vmul.f32 %v1130, 0.010526316
  %v1369 = vmul.f32 %v1133, 0.010526316
  %v1370 = vmul.f32 %v1136, 0.010526316
  %v1371 = vmul.f32 %v1139, 0.010526316
  %v1372 = vmul.f32 %v1142, 0.010526316
  %v1373 = vmul.f32 %v1145, 0.010526316
  %v1374 = vmul.f32 %v1148, 0.010526316
  %v1375 = vmul.f32 %v1151, 0.010526316
  %v1376 = vmul.f32 %v1154, 0.010526316
  %v1377 = vmul.f32 %v1157, 0.010526316
  %v1378 = vmul.f32 %v1160, 0.010526316
  %v1379 = vmul.f32 %v1163, 0.010526316
  %v1380 = vmul.f32 %v1166, 0.010526316
  %v1381 = vmul.f32 %v1169, 0.010526316
  %v1382 = vmul.f32 %v1172, 0.010526316
  %v1383 = vmul.f32 %v1175, 0.010526316
  %v1384 = vmul.f32 %v1178, 0.010526316
  %v1385 = vmul.f32 %v1181, 0.010526316
  %v1386 = vmul.f32 %v1184, 0.010526316
  %v1387 = vmul.f32 %v1187, 0.010526316
  %v1388 = vmul.f32 %v1190, 0.010526316
  %v1389 = vmul.f32 %v1193, 0.010526316
  %v1390 = vmul.f32 %v1196, 0.010526316
  %v1391 = vmul.f32 %v1199, 0.010526316
  %v1392 = vmul.f32 %v1202, 0.010526316
  %v1393 = vmul.f32 %v1205, 0.010526316
  %v1394 = vmul.f32 %v1208, 0.010526316
  %v1395 = vmul.f32 %v1211, 0.010526316
  %v1396 = vmul.f32 %v1214, 0.010526316
  %v1397 = vmul.f32 %v1217, 0.010526316
  %v1398 = vmul.f32 %v1220, 0.010526316
  %v1399 = vmul.f32 %v1223, 0.010526316
  %v1400 = vmul.f32 %v1226, 0.010526316
  %v1401 = vmul.f32 %v1229, 0.010526316
  %v1402 = vmul.f32 %v1232, 0.010526316
  %v1403 = vmul.f32 %v1235, 0.010526316
  %v1404 = vmul.f32 %v1238, 0.010526316
  %v1405 = vmul.f32 %v1241, 0.010526316
  %v1406 = vmul.f32 %v1244, 0.010526316
  %v1407 = vmul.f32 %v1247, 0.010526316
  %v1408 = vmul.f32 %v1250, 0.010526316
  %v1409 = vmul.f32 %v1253, 0.010526316
  %v1410 = vmul.f32 %v1256, 0.010526316
  %v1411 = vmul.f32 %v1259, 0.010526316
  %v1412 = vmul.f32 %v1262, 0.010526316
  %v1413 = vmul.f32 %v1265, 0.010526316
  %v1414 = vmul.f32 %v1268, 0.010526316
  %v1415 = vmul.f32 %v1271, 0.010526316
  %v1416 = vmul.f32 %v1274, 0.010526316
  %v1417 = vmul.f32 %v1277, 0.010526316
  %v1418 = vmul.f32 %v1280, 0.010526316
  %v1419 = vmul.f32 %v1283, 0.010526316
  %v1420 = vmul.f32 %v1286, 0.010526316
  %v1421 = vmul.f32 %v1289, 0.010526316
  %v1422 = vmul.f32 %v1292, 0.010526316
  %v1423 = vmul.f32 %v1295, 0.010526316
  %v1424 = vrsqrt.pop %v1296
  %v1425 = vmul.f32 %v1424, %v1296
  %v1426 = vmul.f32 %v1425, %v1424
  %v1427 = vmul.f32 0.5, %v1426
  %v1428 = vsub.f32 1.5, %v1427
  %v1429 = vmul.f32 %v1424, %v1428
  %v1430 = vmul.f32 %v1296, %v1429
  %vm1431 = vcmp.eq.f32.partialorder %v1296, inf
  %v1432 = vsel %vm1431, %v1296, %v1430
  %vm1433 = vcmp.eq.f32.partialorder %v1296, 0.0
  %v1434 = vand.u32 %v1296, 2147483648
  %v1435 = vsel %vm1433, %v1434, %v1432
  %v1436 = vrsqrt.pop %v1297
  %v1437 = vmul.f32 %v1436, %v1297
  %v1438 = vmul.f32 %v1437, %v1436
  %v1439 = vmul.f32 0.5, %v1438
  %v1440 = vsub.f32 1.5, %v1439
  %v1441 = vmul.f32 %v1436, %v1440
  %v1442 = vmul.f32 %v1297, %v1441
  %vm1443 = vcmp.eq.f32.partialorder %v1297, inf
  %v1444 = vsel %vm1443, %v1297, %v1442
  %vm1445 = vcmp.eq.f32.partialorder %v1297, 0.0
  %v1446 = vand.u32 %v1297, 2147483648
  %v1447 = vsel %vm1445, %v1446, %v1444
  %v1448 = vrsqrt.pop %v1298
  %v1449 = vmul.f32 %v1448, %v1298
  %v1450 = vmul.f32 %v1449, %v1448
  %v1451 = vmul.f32 0.5, %v1450
  %v1452 = vsub.f32 1.5, %v1451
  %v1453 = vmul.f32 %v1448, %v1452
  %v1454 = vmul.f32 %v1298, %v1453
  %vm1455 = vcmp.eq.f32.partialorder %v1298, inf
  %v1456 = vsel %vm1455, %v1298, %v1454
  %vm1457 = vcmp.eq.f32.partialorder %v1298, 0.0
  %v1458 = vand.u32 %v1298, 2147483648
  %v1459 = vsel %vm1457, %v1458, %v1456
  %v1460 = vrsqrt.pop %v1299
  %v1461 = vmul.f32 %v1460, %v1299
  %v1462 = vmul.f32 %v1461, %v1460
  %v1463 = vmul.f32 0.5, %v1462
  %v1464 = vsub.f32 1.5, %v1463
  %v1465 = vmul.f32 %v1460, %v1464
  %v1466 = vmul.f32 %v1299, %v1465
  %vm1467 = vcmp.eq.f32.partialorder %v1299, inf
  %v1468 = vsel %vm1467, %v1299, %v1466
  %vm1469 = vcmp.eq.f32.partialorder %v1299, 0.0
  %v1470 = vand.u32 %v1299, 2147483648
  %v1471 = vsel %vm1469, %v1470, %v1468
  %v1472 = vrsqrt.pop %v1300
  %v1473 = vmul.f32 %v1472, %v1300
  %v1474 = vmul.f32 %v1473, %v1472
  %v1475 = vmul.f32 0.5, %v1474
  %v1476 = vsub.f32 1.5, %v1475
  %v1477 = vmul.f32 %v1472, %v1476
  %v1478 = vmul.f32 %v1300, %v1477
  %vm1479 = vcmp.eq.f32.partialorder %v1300, inf
  %v1480 = vsel %vm1479, %v1300, %v1478
  %vm1481 = vcmp.eq.f32.partialorder %v1300, 0.0
  %v1482 = vand.u32 %v1300, 2147483648
  %v1483 = vsel %vm1481, %v1482, %v1480
  %v1484 = vrsqrt.pop %v1301
  %v1485 = vmul.f32 %v1484, %v1301
  %v1486 = vmul.f32 %v1485, %v1484
  %v1487 = vmul.f32 0.5, %v1486
  %v1488 = vsub.f32 1.5, %v1487
  %v1489 = vmul.f32 %v1484, %v1488
  %v1490 = vmul.f32 %v1301, %v1489
  %vm1491 = vcmp.eq.f32.partialorder %v1301, inf
  %v1492 = vsel %vm1491, %v1301, %v1490
  %vm1493 = vcmp.eq.f32.partialorder %v1301, 0.0
  %v1494 = vand.u32 %v1301, 2147483648
  %v1495 = vsel %vm1493, %v1494, %v1492
  %v1496 = vrsqrt.pop %v1302
  %v1497 = vmul.f32 %v1496, %v1302
  %v1498 = vmul.f32 %v1497, %v1496
  %v1499 = vmul.f32 0.5, %v1498
  %v1500 = vsub.f32 1.5, %v1499
  %v1501 = vmul.f32 %v1496, %v1500
  %v1502 = vmul.f32 %v1302, %v1501
  %vm1503 = vcmp.eq.f32.partialorder %v1302, inf
  %v1504 = vsel %vm1503, %v1302, %v1502
  %vm1505 = vcmp.eq.f32.partialorder %v1302, 0.0
  %v1506 = vand.u32 %v1302, 2147483648
  %v1507 = vsel %vm1505, %v1506, %v1504
  %v1508 = vrsqrt.pop %v1303
  %v1509 = vmul.f32 %v1508, %v1303
  %v1510 = vmul.f32 %v1509, %v1508
  %v1511 = vmul.f32 0.5, %v1510
  %v1512 = vsub.f32 1.5, %v1511
  %v1513 = vmul.f32 %v1508, %v1512
  %v1514 = vmul.f32 %v1303, %v1513
  %vm1515 = vcmp.eq.f32.partialorder %v1303, inf
  %v1516 = vsel %vm1515, %v1303, %v1514
  %vm1517 = vcmp.eq.f32.partialorder %v1303, 0.0
  %v1518 = vand.u32 %v1303, 2147483648
  %v1519 = vsel %vm1517, %v1518, %v1516
  %v1520 = vrsqrt.pop %v1304
  %v1521 = vmul.f32 %v1520, %v1304
  %v1522 = vmul.f32 %v1521, %v1520
  %v1523 = vmul.f32 0.5, %v1522
  %v1524 = vsub.f32 1.5, %v1523
  %v1525 = vmul.f32 %v1520, %v1524
  %v1526 = vmul.f32 %v1304, %v1525
  %vm1527 = vcmp.eq.f32.partialorder %v1304, inf
  %v1528 = vsel %vm1527, %v1304, %v1526
  %vm1529 = vcmp.eq.f32.partialorder %v1304, 0.0
  %v1530 = vand.u32 %v1304, 2147483648
  %v1531 = vsel %vm1529, %v1530, %v1528
  %v1532 = vrsqrt.pop %v1305
  %v1533 = vmul.f32 %v1532, %v1305
  %v1534 = vmul.f32 %v1533, %v1532
  %v1535 = vmul.f32 0.5, %v1534
  %v1536 = vsub.f32 1.5, %v1535
  %v1537 = vmul.f32 %v1532, %v1536
  %v1538 = vmul.f32 %v1305, %v1537
  %vm1539 = vcmp.eq.f32.partialorder %v1305, inf
  %v1540 = vsel %vm1539, %v1305, %v1538
  %vm1541 = vcmp.eq.f32.partialorder %v1305, 0.0
  %v1542 = vand.u32 %v1305, 2147483648
  %v1543 = vsel %vm1541, %v1542, %v1540
  %v1544 = vrsqrt.pop %v1306
  %v1545 = vmul.f32 %v1544, %v1306
  %v1546 = vmul.f32 %v1545, %v1544
  %v1547 = vmul.f32 0.5, %v1546
  %v1548 = vsub.f32 1.5, %v1547
  %v1549 = vmul.f32 %v1544, %v1548
  %v1550 = vmul.f32 %v1306, %v1549
  %vm1551 = vcmp.eq.f32.partialorder %v1306, inf
  %v1552 = vsel %vm1551, %v1306, %v1550
  %vm1553 = vcmp.eq.f32.partialorder %v1306, 0.0
  %v1554 = vand.u32 %v1306, 2147483648
  %v1555 = vsel %vm1553, %v1554, %v1552
  %v1556 = vrsqrt.pop %v1307
  %v1557 = vmul.f32 %v1556, %v1307
  %v1558 = vmul.f32 %v1557, %v1556
  %v1559 = vmul.f32 0.5, %v1558
  %v1560 = vsub.f32 1.5, %v1559
  %v1561 = vmul.f32 %v1556, %v1560
  %v1562 = vmul.f32 %v1307, %v1561
  %vm1563 = vcmp.eq.f32.partialorder %v1307, inf
  %v1564 = vsel %vm1563, %v1307, %v1562
  %vm1565 = vcmp.eq.f32.partialorder %v1307, 0.0
  %v1566 = vand.u32 %v1307, 2147483648
  %v1567 = vsel %vm1565, %v1566, %v1564
  %v1568 = vrsqrt.pop %v1308
  %v1569 = vmul.f32 %v1568, %v1308
  %v1570 = vmul.f32 %v1569, %v1568
  %v1571 = vmul.f32 0.5, %v1570
  %v1572 = vsub.f32 1.5, %v1571
  %v1573 = vmul.f32 %v1568, %v1572
  %v1574 = vmul.f32 %v1308, %v1573
  %vm1575 = vcmp.eq.f32.partialorder %v1308, inf
  %v1576 = vsel %vm1575, %v1308, %v1574
  %vm1577 = vcmp.eq.f32.partialorder %v1308, 0.0
  %v1578 = vand.u32 %v1308, 2147483648
  %v1579 = vsel %vm1577, %v1578, %v1576
  %v1580 = vrsqrt.pop %v1309
  %v1581 = vmul.f32 %v1580, %v1309
  %v1582 = vmul.f32 %v1581, %v1580
  %v1583 = vmul.f32 0.5, %v1582
  %v1584 = vsub.f32 1.5, %v1583
  %v1585 = vmul.f32 %v1580, %v1584
  %v1586 = vmul.f32 %v1309, %v1585
  %vm1587 = vcmp.eq.f32.partialorder %v1309, inf
  %v1588 = vsel %vm1587, %v1309, %v1586
  %vm1589 = vcmp.eq.f32.partialorder %v1309, 0.0
  %v1590 = vand.u32 %v1309, 2147483648
  %v1591 = vsel %vm1589, %v1590, %v1588
  %v1592 = vrsqrt.pop %v1310
  %v1593 = vmul.f32 %v1592, %v1310
  %v1594 = vmul.f32 %v1593, %v1592
  %v1595 = vmul.f32 0.5, %v1594
  %v1596 = vsub.f32 1.5, %v1595
  %v1597 = vmul.f32 %v1592, %v1596
  %v1598 = vmul.f32 %v1310, %v1597
  %vm1599 = vcmp.eq.f32.partialorder %v1310, inf
  %v1600 = vsel %vm1599, %v1310, %v1598
  %vm1601 = vcmp.eq.f32.partialorder %v1310, 0.0
  %v1602 = vand.u32 %v1310, 2147483648
  %v1603 = vsel %vm1601, %v1602, %v1600
  %v1604 = vrsqrt.pop %v1311
  %v1605 = vmul.f32 %v1604, %v1311
  %v1606 = vmul.f32 %v1605, %v1604
  %v1607 = vmul.f32 0.5, %v1606
  %v1608 = vsub.f32 1.5, %v1607
  %v1609 = vmul.f32 %v1604, %v1608
  %v1610 = vmul.f32 %v1311, %v1609
  %vm1611 = vcmp.eq.f32.partialorder %v1311, inf
  %v1612 = vsel %vm1611, %v1311, %v1610
  %vm1613 = vcmp.eq.f32.partialorder %v1311, 0.0
  %v1614 = vand.u32 %v1311, 2147483648
  %v1615 = vsel %vm1613, %v1614, %v1612
  %v1616 = vrsqrt.pop %v1312
  %v1617 = vmul.f32 %v1616, %v1312
  %v1618 = vmul.f32 %v1617, %v1616
  %v1619 = vmul.f32 0.5, %v1618
  %v1620 = vsub.f32 1.5, %v1619
  %v1621 = vmul.f32 %v1616, %v1620
  %v1622 = vmul.f32 %v1312, %v1621
  %vm1623 = vcmp.eq.f32.partialorder %v1312, inf
  %v1624 = vsel %vm1623, %v1312, %v1622
  %vm1625 = vcmp.eq.f32.partialorder %v1312, 0.0
  %v1626 = vand.u32 %v1312, 2147483648
  %v1627 = vsel %vm1625, %v1626, %v1624
  %v1628 = vrsqrt.pop %v1313
  %v1629 = vmul.f32 %v1628, %v1313
  %v1630 = vmul.f32 %v1629, %v1628
  %v1631 = vmul.f32 0.5, %v1630
  %v1632 = vsub.f32 1.5, %v1631
  %v1633 = vmul.f32 %v1628, %v1632
  %v1634 = vmul.f32 %v1313, %v1633
  %vm1635 = vcmp.eq.f32.partialorder %v1313, inf
  %v1636 = vsel %vm1635, %v1313, %v1634
  %vm1637 = vcmp.eq.f32.partialorder %v1313, 0.0
  %v1638 = vand.u32 %v1313, 2147483648
  %v1639 = vsel %vm1637, %v1638, %v1636
  %v1640 = vrsqrt.pop %v1314
  %v1641 = vmul.f32 %v1640, %v1314
  %v1642 = vmul.f32 %v1641, %v1640
  %v1643 = vmul.f32 0.5, %v1642
  %v1644 = vsub.f32 1.5, %v1643
  %v1645 = vmul.f32 %v1640, %v1644
  %v1646 = vmul.f32 %v1314, %v1645
  %vm1647 = vcmp.eq.f32.partialorder %v1314, inf
  %v1648 = vsel %vm1647, %v1314, %v1646
  %vm1649 = vcmp.eq.f32.partialorder %v1314, 0.0
  %v1650 = vand.u32 %v1314, 2147483648
  %v1651 = vsel %vm1649, %v1650, %v1648
  %v1652 = vrsqrt.pop %v1315
  %v1653 = vmul.f32 %v1652, %v1315
  %v1654 = vmul.f32 %v1653, %v1652
  %v1655 = vmul.f32 0.5, %v1654
  %v1656 = vsub.f32 1.5, %v1655
  %v1657 = vmul.f32 %v1652, %v1656
  %v1658 = vmul.f32 %v1315, %v1657
  %vm1659 = vcmp.eq.f32.partialorder %v1315, inf
  %v1660 = vsel %vm1659, %v1315, %v1658
  %vm1661 = vcmp.eq.f32.partialorder %v1315, 0.0
  %v1662 = vand.u32 %v1315, 2147483648
  %v1663 = vsel %vm1661, %v1662, %v1660
  %v1664 = vrsqrt.pop %v1316
  %v1665 = vmul.f32 %v1664, %v1316
  %v1666 = vmul.f32 %v1665, %v1664
  %v1667 = vmul.f32 0.5, %v1666
  %v1668 = vsub.f32 1.5, %v1667
  %v1669 = vmul.f32 %v1664, %v1668
  %v1670 = vmul.f32 %v1316, %v1669
  %vm1671 = vcmp.eq.f32.partialorder %v1316, inf
  %v1672 = vsel %vm1671, %v1316, %v1670
  %vm1673 = vcmp.eq.f32.partialorder %v1316, 0.0
  %v1674 = vand.u32 %v1316, 2147483648
  %v1675 = vsel %vm1673, %v1674, %v1672
  %v1676 = vrsqrt.pop %v1317
  %v1677 = vmul.f32 %v1676, %v1317
  %v1678 = vmul.f32 %v1677, %v1676
  %v1679 = vmul.f32 0.5, %v1678
  %v1680 = vsub.f32 1.5, %v1679
  %v1681 = vmul.f32 %v1676, %v1680
  %v1682 = vmul.f32 %v1317, %v1681
  %vm1683 = vcmp.eq.f32.partialorder %v1317, inf
  %v1684 = vsel %vm1683, %v1317, %v1682
  %vm1685 = vcmp.eq.f32.partialorder %v1317, 0.0
  %v1686 = vand.u32 %v1317, 2147483648
  %v1687 = vsel %vm1685, %v1686, %v1684
  %v1688 = vrsqrt.pop %v1318
  %v1689 = vmul.f32 %v1688, %v1318
  %v1690 = vmul.f32 %v1689, %v1688
  %v1691 = vmul.f32 0.5, %v1690
  %v1692 = vsub.f32 1.5, %v1691
  %v1693 = vmul.f32 %v1688, %v1692
  %v1694 = vmul.f32 %v1318, %v1693
  %vm1695 = vcmp.eq.f32.partialorder %v1318, inf
  %v1696 = vsel %vm1695, %v1318, %v1694
  %vm1697 = vcmp.eq.f32.partialorder %v1318, 0.0
  %v1698 = vand.u32 %v1318, 2147483648
  %v1699 = vsel %vm1697, %v1698, %v1696
  %v1700 = vrsqrt.pop %v1319
  %v1701 = vmul.f32 %v1700, %v1319
  %v1702 = vmul.f32 %v1701, %v1700
  %v1703 = vmul.f32 0.5, %v1702
  %v1704 = vsub.f32 1.5, %v1703
  %v1705 = vmul.f32 %v1700, %v1704
  %v1706 = vmul.f32 %v1319, %v1705
  %vm1707 = vcmp.eq.f32.partialorder %v1319, inf
  %v1708 = vsel %vm1707, %v1319, %v1706
  %vm1709 = vcmp.eq.f32.partialorder %v1319, 0.0
  %v1710 = vand.u32 %v1319, 2147483648
  %v1711 = vsel %vm1709, %v1710, %v1708
  %v1712 = vrsqrt.pop %v1320
  %v1713 = vmul.f32 %v1712, %v1320
  %v1714 = vmul.f32 %v1713, %v1712
  %v1715 = vmul.f32 0.5, %v1714
  %v1716 = vsub.f32 1.5, %v1715
  %v1717 = vmul.f32 %v1712, %v1716
  %v1718 = vmul.f32 %v1320, %v1717
  %vm1719 = vcmp.eq.f32.partialorder %v1320, inf
  %v1720 = vsel %vm1719, %v1320, %v1718
  %vm1721 = vcmp.eq.f32.partialorder %v1320, 0.0
  %v1722 = vand.u32 %v1320, 2147483648
  %v1723 = vsel %vm1721, %v1722, %v1720
  %v1724 = vrsqrt.pop %v1321
  %v1725 = vmul.f32 %v1724, %v1321
  %v1726 = vmul.f32 %v1725, %v1724
  %v1727 = vmul.f32 0.5, %v1726
  %v1728 = vsub.f32 1.5, %v1727
  %v1729 = vmul.f32 %v1724, %v1728
  %v1730 = vmul.f32 %v1321, %v1729
  %vm1731 = vcmp.eq.f32.partialorder %v1321, inf
  %v1732 = vsel %vm1731, %v1321, %v1730
  %vm1733 = vcmp.eq.f32.partialorder %v1321, 0.0
  %v1734 = vand.u32 %v1321, 2147483648
  %v1735 = vsel %vm1733, %v1734, %v1732
  %v1736 = vrsqrt.pop %v1322
  %v1737 = vmul.f32 %v1736, %v1322
  %v1738 = vmul.f32 %v1737, %v1736
  %v1739 = vmul.f32 0.5, %v1738
  %v1740 = vsub.f32 1.5, %v1739
  %v1741 = vmul.f32 %v1736, %v1740
  %v1742 = vmul.f32 %v1322, %v1741
  %vm1743 = vcmp.eq.f32.partialorder %v1322, inf
  %v1744 = vsel %vm1743, %v1322, %v1742
  %vm1745 = vcmp.eq.f32.partialorder %v1322, 0.0
  %v1746 = vand.u32 %v1322, 2147483648
  %v1747 = vsel %vm1745, %v1746, %v1744
  %v1748 = vrsqrt.pop %v1323
  %v1749 = vmul.f32 %v1748, %v1323
  %v1750 = vmul.f32 %v1749, %v1748
  %v1751 = vmul.f32 0.5, %v1750
  %v1752 = vsub.f32 1.5, %v1751
  %v1753 = vmul.f32 %v1748, %v1752
  %v1754 = vmul.f32 %v1323, %v1753
  %vm1755 = vcmp.eq.f32.partialorder %v1323, inf
  %v1756 = vsel %vm1755, %v1323, %v1754
  %vm1757 = vcmp.eq.f32.partialorder %v1323, 0.0
  %v1758 = vand.u32 %v1323, 2147483648
  %v1759 = vsel %vm1757, %v1758, %v1756
  %v1760 = vrsqrt.pop %v1324
  %v1761 = vmul.f32 %v1760, %v1324
  %v1762 = vmul.f32 %v1761, %v1760
  %v1763 = vmul.f32 0.5, %v1762
  %v1764 = vsub.f32 1.5, %v1763
  %v1765 = vmul.f32 %v1760, %v1764
  %v1766 = vmul.f32 %v1324, %v1765
  %vm1767 = vcmp.eq.f32.partialorder %v1324, inf
  %v1768 = vsel %vm1767, %v1324, %v1766
  %vm1769 = vcmp.eq.f32.partialorder %v1324, 0.0
  %v1770 = vand.u32 %v1324, 2147483648
  %v1771 = vsel %vm1769, %v1770, %v1768
  %v1772 = vrsqrt.pop %v1325
  %v1773 = vmul.f32 %v1772, %v1325
  %v1774 = vmul.f32 %v1773, %v1772
  %v1775 = vmul.f32 0.5, %v1774
  %v1776 = vsub.f32 1.5, %v1775
  %v1777 = vmul.f32 %v1772, %v1776
  %v1778 = vmul.f32 %v1325, %v1777
  %vm1779 = vcmp.eq.f32.partialorder %v1325, inf
  %v1780 = vsel %vm1779, %v1325, %v1778
  %vm1781 = vcmp.eq.f32.partialorder %v1325, 0.0
  %v1782 = vand.u32 %v1325, 2147483648
  %v1783 = vsel %vm1781, %v1782, %v1780
  %v1784 = vrsqrt.pop %v1326
  %v1785 = vmul.f32 %v1784, %v1326
  %v1786 = vmul.f32 %v1785, %v1784
  %v1787 = vmul.f32 0.5, %v1786
  %v1788 = vsub.f32 1.5, %v1787
  %v1789 = vmul.f32 %v1784, %v1788
  %v1790 = vmul.f32 %v1326, %v1789
  %vm1791 = vcmp.eq.f32.partialorder %v1326, inf
  %v1792 = vsel %vm1791, %v1326, %v1790
  %vm1793 = vcmp.eq.f32.partialorder %v1326, 0.0
  %v1794 = vand.u32 %v1326, 2147483648
  %v1795 = vsel %vm1793, %v1794, %v1792
  %v1796 = vrsqrt.pop %v1327
  %v1797 = vmul.f32 %v1796, %v1327
  %v1798 = vmul.f32 %v1797, %v1796
  %v1799 = vmul.f32 0.5, %v1798
  %v1800 = vsub.f32 1.5, %v1799
  %v1801 = vmul.f32 %v1796, %v1800
  %v1802 = vmul.f32 %v1327, %v1801
  %vm1803 = vcmp.eq.f32.partialorder %v1327, inf
  %v1804 = vsel %vm1803, %v1327, %v1802
  %vm1805 = vcmp.eq.f32.partialorder %v1327, 0.0
  %v1806 = vand.u32 %v1327, 2147483648
  %v1807 = vsel %vm1805, %v1806, %v1804
  %v1808 = vrsqrt.pop %v1328
  %v1809 = vmul.f32 %v1808, %v1328
  %v1810 = vmul.f32 %v1809, %v1808
  %v1811 = vmul.f32 0.5, %v1810
  %v1812 = vsub.f32 1.5, %v1811
  %v1813 = vmul.f32 %v1808, %v1812
  %v1814 = vmul.f32 %v1328, %v1813
  %vm1815 = vcmp.eq.f32.partialorder %v1328, inf
  %v1816 = vsel %vm1815, %v1328, %v1814
  %vm1817 = vcmp.eq.f32.partialorder %v1328, 0.0
  %v1818 = vand.u32 %v1328, 2147483648
  %v1819 = vsel %vm1817, %v1818, %v1816
  %v1820 = vrsqrt.pop %v1329
  %v1821 = vmul.f32 %v1820, %v1329
  %v1822 = vmul.f32 %v1821, %v1820
  %v1823 = vmul.f32 0.5, %v1822
  %v1824 = vsub.f32 1.5, %v1823
  %v1825 = vmul.f32 %v1820, %v1824
  %v1826 = vmul.f32 %v1329, %v1825
  %vm1827 = vcmp.eq.f32.partialorder %v1329, inf
  %v1828 = vsel %vm1827, %v1329, %v1826
  %vm1829 = vcmp.eq.f32.partialorder %v1329, 0.0
  %v1830 = vand.u32 %v1329, 2147483648
  %v1831 = vsel %vm1829, %v1830, %v1828
  %v1832 = vrsqrt.pop %v1330
  %v1833 = vmul.f32 %v1832, %v1330
  %v1834 = vmul.f32 %v1833, %v1832
  %v1835 = vmul.f32 0.5, %v1834
  %v1836 = vsub.f32 1.5, %v1835
  %v1837 = vmul.f32 %v1832, %v1836
  %v1838 = vmul.f32 %v1330, %v1837
  %vm1839 = vcmp.eq.f32.partialorder %v1330, inf
  %v1840 = vsel %vm1839, %v1330, %v1838
  %vm1841 = vcmp.eq.f32.partialorder %v1330, 0.0
  %v1842 = vand.u32 %v1330, 2147483648
  %v1843 = vsel %vm1841, %v1842, %v1840
  %v1844 = vrsqrt.pop %v1331
  %v1845 = vmul.f32 %v1844, %v1331
  %v1846 = vmul.f32 %v1845, %v1844
  %v1847 = vmul.f32 0.5, %v1846
  %v1848 = vsub.f32 1.5, %v1847
  %v1849 = vmul.f32 %v1844, %v1848
  %v1850 = vmul.f32 %v1331, %v1849
  %vm1851 = vcmp.eq.f32.partialorder %v1331, inf
  %v1852 = vsel %vm1851, %v1331, %v1850
  %vm1853 = vcmp.eq.f32.partialorder %v1331, 0.0
  %v1854 = vand.u32 %v1331, 2147483648
  %v1855 = vsel %vm1853, %v1854, %v1852
  %v1856 = vrsqrt.pop %v1332
  %v1857 = vmul.f32 %v1856, %v1332
  %v1858 = vmul.f32 %v1857, %v1856
  %v1859 = vmul.f32 0.5, %v1858
  %v1860 = vsub.f32 1.5, %v1859
  %v1861 = vmul.f32 %v1856, %v1860
  %v1862 = vmul.f32 %v1332, %v1861
  %vm1863 = vcmp.eq.f32.partialorder %v1332, inf
  %v1864 = vsel %vm1863, %v1332, %v1862
  %vm1865 = vcmp.eq.f32.partialorder %v1332, 0.0
  %v1866 = vand.u32 %v1332, 2147483648
  %v1867 = vsel %vm1865, %v1866, %v1864
  %v1868 = vrsqrt.pop %v1333
  %v1869 = vmul.f32 %v1868, %v1333
  %v1870 = vmul.f32 %v1869, %v1868
  %v1871 = vmul.f32 0.5, %v1870
  %v1872 = vsub.f32 1.5, %v1871
  %v1873 = vmul.f32 %v1868, %v1872
  %v1874 = vmul.f32 %v1333, %v1873
  %vm1875 = vcmp.eq.f32.partialorder %v1333, inf
  %v1876 = vsel %vm1875, %v1333, %v1874
  %vm1877 = vcmp.eq.f32.partialorder %v1333, 0.0
  %v1878 = vand.u32 %v1333, 2147483648
  %v1879 = vsel %vm1877, %v1878, %v1876
  %v1880 = vrsqrt.pop %v1334
  %v1881 = vmul.f32 %v1880, %v1334
  %v1882 = vmul.f32 %v1881, %v1880
  %v1883 = vmul.f32 0.5, %v1882
  %v1884 = vsub.f32 1.5, %v1883
  %v1885 = vmul.f32 %v1880, %v1884
  %v1886 = vmul.f32 %v1334, %v1885
  %vm1887 = vcmp.eq.f32.partialorder %v1334, inf
  %v1888 = vsel %vm1887, %v1334, %v1886
  %vm1889 = vcmp.eq.f32.partialorder %v1334, 0.0
  %v1890 = vand.u32 %v1334, 2147483648
  %v1891 = vsel %vm1889, %v1890, %v1888
  %v1892 = vrsqrt.pop %v1335
  %v1893 = vmul.f32 %v1892, %v1335
  %v1894 = vmul.f32 %v1893, %v1892
  %v1895 = vmul.f32 0.5, %v1894
  %v1896 = vsub.f32 1.5, %v1895
  %v1897 = vmul.f32 %v1892, %v1896
  %v1898 = vmul.f32 %v1335, %v1897
  %vm1899 = vcmp.eq.f32.partialorder %v1335, inf
  %v1900 = vsel %vm1899, %v1335, %v1898
  %vm1901 = vcmp.eq.f32.partialorder %v1335, 0.0
  %v1902 = vand.u32 %v1335, 2147483648
  %v1903 = vsel %vm1901, %v1902, %v1900
  %v1904 = vrsqrt.pop %v1336
  %v1905 = vmul.f32 %v1904, %v1336
  %v1906 = vmul.f32 %v1905, %v1904
  %v1907 = vmul.f32 0.5, %v1906
  %v1908 = vsub.f32 1.5, %v1907
  %v1909 = vmul.f32 %v1904, %v1908
  %v1910 = vmul.f32 %v1336, %v1909
  %vm1911 = vcmp.eq.f32.partialorder %v1336, inf
  %v1912 = vsel %vm1911, %v1336, %v1910
  %vm1913 = vcmp.eq.f32.partialorder %v1336, 0.0
  %v1914 = vand.u32 %v1336, 2147483648
  %v1915 = vsel %vm1913, %v1914, %v1912
  %v1916 = vrsqrt.pop %v1337
  %v1917 = vmul.f32 %v1916, %v1337
  %v1918 = vmul.f32 %v1917, %v1916
  %v1919 = vmul.f32 0.5, %v1918
  %v1920 = vsub.f32 1.5, %v1919
  %v1921 = vmul.f32 %v1916, %v1920
  %v1922 = vmul.f32 %v1337, %v1921
  %vm1923 = vcmp.eq.f32.partialorder %v1337, inf
  %v1924 = vsel %vm1923, %v1337, %v1922
  %vm1925 = vcmp.eq.f32.partialorder %v1337, 0.0
  %v1926 = vand.u32 %v1337, 2147483648
  %v1927 = vsel %vm1925, %v1926, %v1924
  %v1928 = vrsqrt.pop %v1338
  %v1929 = vmul.f32 %v1928, %v1338
  %v1930 = vmul.f32 %v1929, %v1928
  %v1931 = vmul.f32 0.5, %v1930
  %v1932 = vsub.f32 1.5, %v1931
  %v1933 = vmul.f32 %v1928, %v1932
  %v1934 = vmul.f32 %v1338, %v1933
  %vm1935 = vcmp.eq.f32.partialorder %v1338, inf
  %v1936 = vsel %vm1935, %v1338, %v1934
  %vm1937 = vcmp.eq.f32.partialorder %v1338, 0.0
  %v1938 = vand.u32 %v1338, 2147483648
  %v1939 = vsel %vm1937, %v1938, %v1936
  %v1940 = vrsqrt.pop %v1339
  %v1941 = vmul.f32 %v1940, %v1339
  %v1942 = vmul.f32 %v1941, %v1940
  %v1943 = vmul.f32 0.5, %v1942
  %v1944 = vsub.f32 1.5, %v1943
  %v1945 = vmul.f32 %v1940, %v1944
  %v1946 = vmul.f32 %v1339, %v1945
  %vm1947 = vcmp.eq.f32.partialorder %v1339, inf
  %v1948 = vsel %vm1947, %v1339, %v1946
  %vm1949 = vcmp.eq.f32.partialorder %v1339, 0.0
  %v1950 = vand.u32 %v1339, 2147483648
  %v1951 = vsel %vm1949, %v1950, %v1948
  %v1952 = vrsqrt.pop %v1340
  %v1953 = vmul.f32 %v1952, %v1340
  %v1954 = vmul.f32 %v1953, %v1952
  %v1955 = vmul.f32 0.5, %v1954
  %v1956 = vsub.f32 1.5, %v1955
  %v1957 = vmul.f32 %v1952, %v1956
  %v1958 = vmul.f32 %v1340, %v1957
  %vm1959 = vcmp.eq.f32.partialorder %v1340, inf
  %v1960 = vsel %vm1959, %v1340, %v1958
  %vm1961 = vcmp.eq.f32.partialorder %v1340, 0.0
  %v1962 = vand.u32 %v1340, 2147483648
  %v1963 = vsel %vm1961, %v1962, %v1960
  %v1964 = vrsqrt.pop %v1341
  %v1965 = vmul.f32 %v1964, %v1341
  %v1966 = vmul.f32 %v1965, %v1964
  %v1967 = vmul.f32 0.5, %v1966
  %v1968 = vsub.f32 1.5, %v1967
  %v1969 = vmul.f32 %v1964, %v1968
  %v1970 = vmul.f32 %v1341, %v1969
  %vm1971 = vcmp.eq.f32.partialorder %v1341, inf
  %v1972 = vsel %vm1971, %v1341, %v1970
  %vm1973 = vcmp.eq.f32.partialorder %v1341, 0.0
  %v1974 = vand.u32 %v1341, 2147483648
  %v1975 = vsel %vm1973, %v1974, %v1972
  %v1976 = vrsqrt.pop %v1342
  %v1977 = vmul.f32 %v1976, %v1342
  %v1978 = vmul.f32 %v1977, %v1976
  %v1979 = vmul.f32 0.5, %v1978
  %v1980 = vsub.f32 1.5, %v1979
  %v1981 = vmul.f32 %v1976, %v1980
  %v1982 = vmul.f32 %v1342, %v1981
  %vm1983 = vcmp.eq.f32.partialorder %v1342, inf
  %v1984 = vsel %vm1983, %v1342, %v1982
  %vm1985 = vcmp.eq.f32.partialorder %v1342, 0.0
  %v1986 = vand.u32 %v1342, 2147483648
  %v1987 = vsel %vm1985, %v1986, %v1984
  %v1988 = vrsqrt.pop %v1343
  %v1989 = vmul.f32 %v1988, %v1343
  %v1990 = vmul.f32 %v1989, %v1988
  %v1991 = vmul.f32 0.5, %v1990
  %v1992 = vsub.f32 1.5, %v1991
  %v1993 = vmul.f32 %v1988, %v1992
  %v1994 = vmul.f32 %v1343, %v1993
  %vm1995 = vcmp.eq.f32.partialorder %v1343, inf
  %v1996 = vsel %vm1995, %v1343, %v1994
  %vm1997 = vcmp.eq.f32.partialorder %v1343, 0.0
  %v1998 = vand.u32 %v1343, 2147483648
  %v1999 = vsel %vm1997, %v1998, %v1996
  %v2000 = vrsqrt.pop %v1344
  %v2001 = vmul.f32 %v2000, %v1344
  %v2002 = vmul.f32 %v2001, %v2000
  %v2003 = vmul.f32 0.5, %v2002
  %v2004 = vsub.f32 1.5, %v2003
  %v2005 = vmul.f32 %v2000, %v2004
  %v2006 = vmul.f32 %v1344, %v2005
  %vm2007 = vcmp.eq.f32.partialorder %v1344, inf
  %v2008 = vsel %vm2007, %v1344, %v2006
  %vm2009 = vcmp.eq.f32.partialorder %v1344, 0.0
  %v2010 = vand.u32 %v1344, 2147483648
  %v2011 = vsel %vm2009, %v2010, %v2008
  %v2012 = vrsqrt.pop %v1345
  %v2013 = vmul.f32 %v2012, %v1345
  %v2014 = vmul.f32 %v2013, %v2012
  %v2015 = vmul.f32 0.5, %v2014
  %v2016 = vsub.f32 1.5, %v2015
  %v2017 = vmul.f32 %v2012, %v2016
  %v2018 = vmul.f32 %v1345, %v2017
  %vm2019 = vcmp.eq.f32.partialorder %v1345, inf
  %v2020 = vsel %vm2019, %v1345, %v2018
  %vm2021 = vcmp.eq.f32.partialorder %v1345, 0.0
  %v2022 = vand.u32 %v1345, 2147483648
  %v2023 = vsel %vm2021, %v2022, %v2020
  %v2024 = vrsqrt.pop %v1346
  %v2025 = vmul.f32 %v2024, %v1346
  %v2026 = vmul.f32 %v2025, %v2024
  %v2027 = vmul.f32 0.5, %v2026
  %v2028 = vsub.f32 1.5, %v2027
  %v2029 = vmul.f32 %v2024, %v2028
  %v2030 = vmul.f32 %v1346, %v2029
  %vm2031 = vcmp.eq.f32.partialorder %v1346, inf
  %v2032 = vsel %vm2031, %v1346, %v2030
  %vm2033 = vcmp.eq.f32.partialorder %v1346, 0.0
  %v2034 = vand.u32 %v1346, 2147483648
  %v2035 = vsel %vm2033, %v2034, %v2032
  %v2036 = vrsqrt.pop %v1347
  %v2037 = vmul.f32 %v2036, %v1347
  %v2038 = vmul.f32 %v2037, %v2036
  %v2039 = vmul.f32 0.5, %v2038
  %v2040 = vsub.f32 1.5, %v2039
  %v2041 = vmul.f32 %v2036, %v2040
  %v2042 = vmul.f32 %v1347, %v2041
  %vm2043 = vcmp.eq.f32.partialorder %v1347, inf
  %v2044 = vsel %vm2043, %v1347, %v2042
  %vm2045 = vcmp.eq.f32.partialorder %v1347, 0.0
  %v2046 = vand.u32 %v1347, 2147483648
  %v2047 = vsel %vm2045, %v2046, %v2044
  %v2048 = vrsqrt.pop %v1348
  %v2049 = vmul.f32 %v2048, %v1348
  %v2050 = vmul.f32 %v2049, %v2048
  %v2051 = vmul.f32 0.5, %v2050
  %v2052 = vsub.f32 1.5, %v2051
  %v2053 = vmul.f32 %v2048, %v2052
  %v2054 = vmul.f32 %v1348, %v2053
  %vm2055 = vcmp.eq.f32.partialorder %v1348, inf
  %v2056 = vsel %vm2055, %v1348, %v2054
  %vm2057 = vcmp.eq.f32.partialorder %v1348, 0.0
  %v2058 = vand.u32 %v1348, 2147483648
  %v2059 = vsel %vm2057, %v2058, %v2056
  %v2060 = vrsqrt.pop %v1349
  %v2061 = vmul.f32 %v2060, %v1349
  %v2062 = vmul.f32 %v2061, %v2060
  %v2063 = vmul.f32 0.5, %v2062
  %v2064 = vsub.f32 1.5, %v2063
  %v2065 = vmul.f32 %v2060, %v2064
  %v2066 = vmul.f32 %v1349, %v2065
  %vm2067 = vcmp.eq.f32.partialorder %v1349, inf
  %v2068 = vsel %vm2067, %v1349, %v2066
  %vm2069 = vcmp.eq.f32.partialorder %v1349, 0.0
  %v2070 = vand.u32 %v1349, 2147483648
  %v2071 = vsel %vm2069, %v2070, %v2068
  %v2072 = vrsqrt.pop %v1350
  %v2073 = vmul.f32 %v2072, %v1350
  %v2074 = vmul.f32 %v2073, %v2072
  %v2075 = vmul.f32 0.5, %v2074
  %v2076 = vsub.f32 1.5, %v2075
  %v2077 = vmul.f32 %v2072, %v2076
  %v2078 = vmul.f32 %v1350, %v2077
  %vm2079 = vcmp.eq.f32.partialorder %v1350, inf
  %v2080 = vsel %vm2079, %v1350, %v2078
  %vm2081 = vcmp.eq.f32.partialorder %v1350, 0.0
  %v2082 = vand.u32 %v1350, 2147483648
  %v2083 = vsel %vm2081, %v2082, %v2080
  %v2084 = vrsqrt.pop %v1351
  %v2085 = vmul.f32 %v2084, %v1351
  %v2086 = vmul.f32 %v2085, %v2084
  %v2087 = vmul.f32 0.5, %v2086
  %v2088 = vsub.f32 1.5, %v2087
  %v2089 = vmul.f32 %v2084, %v2088
  %v2090 = vmul.f32 %v1351, %v2089
  %vm2091 = vcmp.eq.f32.partialorder %v1351, inf
  %v2092 = vsel %vm2091, %v1351, %v2090
  %vm2093 = vcmp.eq.f32.partialorder %v1351, 0.0
  %v2094 = vand.u32 %v1351, 2147483648
  %v2095 = vsel %vm2093, %v2094, %v2092
  %v2096 = vrsqrt.pop %v1352
  %v2097 = vmul.f32 %v2096, %v1352
  %v2098 = vmul.f32 %v2097, %v2096
  %v2099 = vmul.f32 0.5, %v2098
  %v2100 = vsub.f32 1.5, %v2099
  %v2101 = vmul.f32 %v2096, %v2100
  %v2102 = vmul.f32 %v1352, %v2101
  %vm2103 = vcmp.eq.f32.partialorder %v1352, inf
  %v2104 = vsel %vm2103, %v1352, %v2102
  %vm2105 = vcmp.eq.f32.partialorder %v1352, 0.0
  %v2106 = vand.u32 %v1352, 2147483648
  %v2107 = vsel %vm2105, %v2106, %v2104
  %v2108 = vrsqrt.pop %v1353
  %v2109 = vmul.f32 %v2108, %v1353
  %v2110 = vmul.f32 %v2109, %v2108
  %v2111 = vmul.f32 0.5, %v2110
  %v2112 = vsub.f32 1.5, %v2111
  %v2113 = vmul.f32 %v2108, %v2112
  %v2114 = vmul.f32 %v1353, %v2113
  %vm2115 = vcmp.eq.f32.partialorder %v1353, inf
  %v2116 = vsel %vm2115, %v1353, %v2114
  %vm2117 = vcmp.eq.f32.partialorder %v1353, 0.0
  %v2118 = vand.u32 %v1353, 2147483648
  %v2119 = vsel %vm2117, %v2118, %v2116
  %v2120 = vrsqrt.pop %v1354
  %v2121 = vmul.f32 %v2120, %v1354
  %v2122 = vmul.f32 %v2121, %v2120
  %v2123 = vmul.f32 0.5, %v2122
  %v2124 = vsub.f32 1.5, %v2123
  %v2125 = vmul.f32 %v2120, %v2124
  %v2126 = vmul.f32 %v1354, %v2125
  %vm2127 = vcmp.eq.f32.partialorder %v1354, inf
  %v2128 = vsel %vm2127, %v1354, %v2126
  %vm2129 = vcmp.eq.f32.partialorder %v1354, 0.0
  %v2130 = vand.u32 %v1354, 2147483648
  %v2131 = vsel %vm2129, %v2130, %v2128
  %v2132 = vrsqrt.pop %v1355
  %v2133 = vmul.f32 %v2132, %v1355
  %v2134 = vmul.f32 %v2133, %v2132
  %v2135 = vmul.f32 0.5, %v2134
  %v2136 = vsub.f32 1.5, %v2135
  %v2137 = vmul.f32 %v2132, %v2136
  %v2138 = vmul.f32 %v1355, %v2137
  %vm2139 = vcmp.eq.f32.partialorder %v1355, inf
  %v2140 = vsel %vm2139, %v1355, %v2138
  %vm2141 = vcmp.eq.f32.partialorder %v1355, 0.0
  %v2142 = vand.u32 %v1355, 2147483648
  %v2143 = vsel %vm2141, %v2142, %v2140
  %v2144 = vrsqrt.pop %v1356
  %v2145 = vmul.f32 %v2144, %v1356
  %v2146 = vmul.f32 %v2145, %v2144
  %v2147 = vmul.f32 0.5, %v2146
  %v2148 = vsub.f32 1.5, %v2147
  %v2149 = vmul.f32 %v2144, %v2148
  %v2150 = vmul.f32 %v1356, %v2149
  %vm2151 = vcmp.eq.f32.partialorder %v1356, inf
  %v2152 = vsel %vm2151, %v1356, %v2150
  %vm2153 = vcmp.eq.f32.partialorder %v1356, 0.0
  %v2154 = vand.u32 %v1356, 2147483648
  %v2155 = vsel %vm2153, %v2154, %v2152
  %v2156 = vrsqrt.pop %v1357
  %v2157 = vmul.f32 %v2156, %v1357
  %v2158 = vmul.f32 %v2157, %v2156
  %v2159 = vmul.f32 0.5, %v2158
  %v2160 = vsub.f32 1.5, %v2159
  %v2161 = vmul.f32 %v2156, %v2160
  %v2162 = vmul.f32 %v1357, %v2161
  %vm2163 = vcmp.eq.f32.partialorder %v1357, inf
  %v2164 = vsel %vm2163, %v1357, %v2162
  %vm2165 = vcmp.eq.f32.partialorder %v1357, 0.0
  %v2166 = vand.u32 %v1357, 2147483648
  %v2167 = vsel %vm2165, %v2166, %v2164
  %v2168 = vrsqrt.pop %v1358
  %v2169 = vmul.f32 %v2168, %v1358
  %v2170 = vmul.f32 %v2169, %v2168
  %v2171 = vmul.f32 0.5, %v2170
  %v2172 = vsub.f32 1.5, %v2171
  %v2173 = vmul.f32 %v2168, %v2172
  %v2174 = vmul.f32 %v1358, %v2173
  %vm2175 = vcmp.eq.f32.partialorder %v1358, inf
  %v2176 = vsel %vm2175, %v1358, %v2174
  %vm2177 = vcmp.eq.f32.partialorder %v1358, 0.0
  %v2178 = vand.u32 %v1358, 2147483648
  %v2179 = vsel %vm2177, %v2178, %v2176
  %v2180 = vrsqrt.pop %v1359
  %v2181 = vmul.f32 %v2180, %v1359
  %v2182 = vmul.f32 %v2181, %v2180
  %v2183 = vmul.f32 0.5, %v2182
  %v2184 = vsub.f32 1.5, %v2183
  %v2185 = vmul.f32 %v2180, %v2184
  %v2186 = vmul.f32 %v1359, %v2185
  %vm2187 = vcmp.eq.f32.partialorder %v1359, inf
  %v2188 = vsel %vm2187, %v1359, %v2186
  %vm2189 = vcmp.eq.f32.partialorder %v1359, 0.0
  %v2190 = vand.u32 %v1359, 2147483648
  %v2191 = vsel %vm2189, %v2190, %v2188
  %v2192 = vrsqrt.pop %v1360
  %v2193 = vmul.f32 %v2192, %v1360
  %v2194 = vmul.f32 %v2193, %v2192
  %v2195 = vmul.f32 0.5, %v2194
  %v2196 = vsub.f32 1.5, %v2195
  %v2197 = vmul.f32 %v2192, %v2196
  %v2198 = vmul.f32 %v1360, %v2197
  %vm2199 = vcmp.eq.f32.partialorder %v1360, inf
  %v2200 = vsel %vm2199, %v1360, %v2198
  %vm2201 = vcmp.eq.f32.partialorder %v1360, 0.0
  %v2202 = vand.u32 %v1360, 2147483648
  %v2203 = vsel %vm2201, %v2202, %v2200
  %v2204 = vrsqrt.pop %v1361
  %v2205 = vmul.f32 %v2204, %v1361
  %v2206 = vmul.f32 %v2205, %v2204
  %v2207 = vmul.f32 0.5, %v2206
  %v2208 = vsub.f32 1.5, %v2207
  %v2209 = vmul.f32 %v2204, %v2208
  %v2210 = vmul.f32 %v1361, %v2209
  %vm2211 = vcmp.eq.f32.partialorder %v1361, inf
  %v2212 = vsel %vm2211, %v1361, %v2210
  %vm2213 = vcmp.eq.f32.partialorder %v1361, 0.0
  %v2214 = vand.u32 %v1361, 2147483648
  %v2215 = vsel %vm2213, %v2214, %v2212
  %v2216 = vrsqrt.pop %v1362
  %v2217 = vmul.f32 %v2216, %v1362
  %v2218 = vmul.f32 %v2217, %v2216
  %v2219 = vmul.f32 0.5, %v2218
  %v2220 = vsub.f32 1.5, %v2219
  %v2221 = vmul.f32 %v2216, %v2220
  %v2222 = vmul.f32 %v1362, %v2221
  %vm2223 = vcmp.eq.f32.partialorder %v1362, inf
  %v2224 = vsel %vm2223, %v1362, %v2222
  %vm2225 = vcmp.eq.f32.partialorder %v1362, 0.0
  %v2226 = vand.u32 %v1362, 2147483648
  %v2227 = vsel %vm2225, %v2226, %v2224
  %v2228 = vrsqrt.pop %v1363
  %v2229 = vmul.f32 %v2228, %v1363
  %v2230 = vmul.f32 %v2229, %v2228
  %v2231 = vmul.f32 0.5, %v2230
  %v2232 = vsub.f32 1.5, %v2231
  %v2233 = vmul.f32 %v2228, %v2232
  %v2234 = vmul.f32 %v1363, %v2233
  %vm2235 = vcmp.eq.f32.partialorder %v1363, inf
  %v2236 = vsel %vm2235, %v1363, %v2234
  %vm2237 = vcmp.eq.f32.partialorder %v1363, 0.0
  %v2238 = vand.u32 %v1363, 2147483648
  %v2239 = vsel %vm2237, %v2238, %v2236
  %v2240 = vrsqrt.pop %v1364
  %v2241 = vmul.f32 %v2240, %v1364
  %v2242 = vmul.f32 %v2241, %v2240
  %v2243 = vmul.f32 0.5, %v2242
  %v2244 = vsub.f32 1.5, %v2243
  %v2245 = vmul.f32 %v2240, %v2244
  %v2246 = vmul.f32 %v1364, %v2245
  %vm2247 = vcmp.eq.f32.partialorder %v1364, inf
  %v2248 = vsel %vm2247, %v1364, %v2246
  %vm2249 = vcmp.eq.f32.partialorder %v1364, 0.0
  %v2250 = vand.u32 %v1364, 2147483648
  %v2251 = vsel %vm2249, %v2250, %v2248
  %v2252 = vrsqrt.pop %v1365
  %v2253 = vmul.f32 %v2252, %v1365
  %v2254 = vmul.f32 %v2253, %v2252
  %v2255 = vmul.f32 0.5, %v2254
  %v2256 = vsub.f32 1.5, %v2255
  %v2257 = vmul.f32 %v2252, %v2256
  %v2258 = vmul.f32 %v1365, %v2257
  %vm2259 = vcmp.eq.f32.partialorder %v1365, inf
  %v2260 = vsel %vm2259, %v1365, %v2258
  %vm2261 = vcmp.eq.f32.partialorder %v1365, 0.0
  %v2262 = vand.u32 %v1365, 2147483648
  %v2263 = vsel %vm2261, %v2262, %v2260
  %v2264 = vrsqrt.pop %v1366
  %v2265 = vmul.f32 %v2264, %v1366
  %v2266 = vmul.f32 %v2265, %v2264
  %v2267 = vmul.f32 0.5, %v2266
  %v2268 = vsub.f32 1.5, %v2267
  %v2269 = vmul.f32 %v2264, %v2268
  %v2270 = vmul.f32 %v1366, %v2269
  %vm2271 = vcmp.eq.f32.partialorder %v1366, inf
  %v2272 = vsel %vm2271, %v1366, %v2270
  %vm2273 = vcmp.eq.f32.partialorder %v1366, 0.0
  %v2274 = vand.u32 %v1366, 2147483648
  %v2275 = vsel %vm2273, %v2274, %v2272
  %v2276 = vrsqrt.pop %v1367
  %v2277 = vmul.f32 %v2276, %v1367
  %v2278 = vmul.f32 %v2277, %v2276
  %v2279 = vmul.f32 0.5, %v2278
  %v2280 = vsub.f32 1.5, %v2279
  %v2281 = vmul.f32 %v2276, %v2280
  %v2282 = vmul.f32 %v1367, %v2281
  %vm2283 = vcmp.eq.f32.partialorder %v1367, inf
  %v2284 = vsel %vm2283, %v1367, %v2282
  %vm2285 = vcmp.eq.f32.partialorder %v1367, 0.0
  %v2286 = vand.u32 %v1367, 2147483648
  %v2287 = vsel %vm2285, %v2286, %v2284
  %v2288 = vrsqrt.pop %v1368
  %v2289 = vmul.f32 %v2288, %v1368
  %v2290 = vmul.f32 %v2289, %v2288
  %v2291 = vmul.f32 0.5, %v2290
  %v2292 = vsub.f32 1.5, %v2291
  %v2293 = vmul.f32 %v2288, %v2292
  %v2294 = vmul.f32 %v1368, %v2293
  %vm2295 = vcmp.eq.f32.partialorder %v1368, inf
  %v2296 = vsel %vm2295, %v1368, %v2294
  %vm2297 = vcmp.eq.f32.partialorder %v1368, 0.0
  %v2298 = vand.u32 %v1368, 2147483648
  %v2299 = vsel %vm2297, %v2298, %v2296
  %v2300 = vrsqrt.pop %v1369
  %v2301 = vmul.f32 %v2300, %v1369
  %v2302 = vmul.f32 %v2301, %v2300
  %v2303 = vmul.f32 0.5, %v2302
  %v2304 = vsub.f32 1.5, %v2303
  %v2305 = vmul.f32 %v2300, %v2304
  %v2306 = vmul.f32 %v1369, %v2305
  %vm2307 = vcmp.eq.f32.partialorder %v1369, inf
  %v2308 = vsel %vm2307, %v1369, %v2306
  %vm2309 = vcmp.eq.f32.partialorder %v1369, 0.0
  %v2310 = vand.u32 %v1369, 2147483648
  %v2311 = vsel %vm2309, %v2310, %v2308
  %v2312 = vrsqrt.pop %v1370
  %v2313 = vmul.f32 %v2312, %v1370
  %v2314 = vmul.f32 %v2313, %v2312
  %v2315 = vmul.f32 0.5, %v2314
  %v2316 = vsub.f32 1.5, %v2315
  %v2317 = vmul.f32 %v2312, %v2316
  %v2318 = vmul.f32 %v1370, %v2317
  %vm2319 = vcmp.eq.f32.partialorder %v1370, inf
  %v2320 = vsel %vm2319, %v1370, %v2318
  %vm2321 = vcmp.eq.f32.partialorder %v1370, 0.0
  %v2322 = vand.u32 %v1370, 2147483648
  %v2323 = vsel %vm2321, %v2322, %v2320
  %v2324 = vrsqrt.pop %v1371
  %v2325 = vmul.f32 %v2324, %v1371
  %v2326 = vmul.f32 %v2325, %v2324
  %v2327 = vmul.f32 0.5, %v2326
  %v2328 = vsub.f32 1.5, %v2327
  %v2329 = vmul.f32 %v2324, %v2328
  %v2330 = vmul.f32 %v1371, %v2329
  %vm2331 = vcmp.eq.f32.partialorder %v1371, inf
  %v2332 = vsel %vm2331, %v1371, %v2330
  %vm2333 = vcmp.eq.f32.partialorder %v1371, 0.0
  %v2334 = vand.u32 %v1371, 2147483648
  %v2335 = vsel %vm2333, %v2334, %v2332
  %v2336 = vrsqrt.pop %v1372
  %v2337 = vmul.f32 %v2336, %v1372
  %v2338 = vmul.f32 %v2337, %v2336
  %v2339 = vmul.f32 0.5, %v2338
  %v2340 = vsub.f32 1.5, %v2339
  %v2341 = vmul.f32 %v2336, %v2340
  %v2342 = vmul.f32 %v1372, %v2341
  %vm2343 = vcmp.eq.f32.partialorder %v1372, inf
  %v2344 = vsel %vm2343, %v1372, %v2342
  %vm2345 = vcmp.eq.f32.partialorder %v1372, 0.0
  %v2346 = vand.u32 %v1372, 2147483648
  %v2347 = vsel %vm2345, %v2346, %v2344
  %v2348 = vrsqrt.pop %v1373
  %v2349 = vmul.f32 %v2348, %v1373
  %v2350 = vmul.f32 %v2349, %v2348
  %v2351 = vmul.f32 0.5, %v2350
  %v2352 = vsub.f32 1.5, %v2351
  %v2353 = vmul.f32 %v2348, %v2352
  %v2354 = vmul.f32 %v1373, %v2353
  %vm2355 = vcmp.eq.f32.partialorder %v1373, inf
  %v2356 = vsel %vm2355, %v1373, %v2354
  %vm2357 = vcmp.eq.f32.partialorder %v1373, 0.0
  %v2358 = vand.u32 %v1373, 2147483648
  %v2359 = vsel %vm2357, %v2358, %v2356
  %v2360 = vrsqrt.pop %v1374
  %v2361 = vmul.f32 %v2360, %v1374
  %v2362 = vmul.f32 %v2361, %v2360
  %v2363 = vmul.f32 0.5, %v2362
  %v2364 = vsub.f32 1.5, %v2363
  %v2365 = vmul.f32 %v2360, %v2364
  %v2366 = vmul.f32 %v1374, %v2365
  %vm2367 = vcmp.eq.f32.partialorder %v1374, inf
  %v2368 = vsel %vm2367, %v1374, %v2366
  %vm2369 = vcmp.eq.f32.partialorder %v1374, 0.0
  %v2370 = vand.u32 %v1374, 2147483648
  %v2371 = vsel %vm2369, %v2370, %v2368
  %v2372 = vrsqrt.pop %v1375
  %v2373 = vmul.f32 %v2372, %v1375
  %v2374 = vmul.f32 %v2373, %v2372
  %v2375 = vmul.f32 0.5, %v2374
  %v2376 = vsub.f32 1.5, %v2375
  %v2377 = vmul.f32 %v2372, %v2376
  %v2378 = vmul.f32 %v1375, %v2377
  %vm2379 = vcmp.eq.f32.partialorder %v1375, inf
  %v2380 = vsel %vm2379, %v1375, %v2378
  %vm2381 = vcmp.eq.f32.partialorder %v1375, 0.0
  %v2382 = vand.u32 %v1375, 2147483648
  %v2383 = vsel %vm2381, %v2382, %v2380
  %v2384 = vrsqrt.pop %v1376
  %v2385 = vmul.f32 %v2384, %v1376
  %v2386 = vmul.f32 %v2385, %v2384
  %v2387 = vmul.f32 0.5, %v2386
  %v2388 = vsub.f32 1.5, %v2387
  %v2389 = vmul.f32 %v2384, %v2388
  %v2390 = vmul.f32 %v1376, %v2389
  %vm2391 = vcmp.eq.f32.partialorder %v1376, inf
  %v2392 = vsel %vm2391, %v1376, %v2390
  %vm2393 = vcmp.eq.f32.partialorder %v1376, 0.0
  %v2394 = vand.u32 %v1376, 2147483648
  %v2395 = vsel %vm2393, %v2394, %v2392
  %v2396 = vrsqrt.pop %v1377
  %v2397 = vmul.f32 %v2396, %v1377
  %v2398 = vmul.f32 %v2397, %v2396
  %v2399 = vmul.f32 0.5, %v2398
  %v2400 = vsub.f32 1.5, %v2399
  %v2401 = vmul.f32 %v2396, %v2400
  %v2402 = vmul.f32 %v1377, %v2401
  %vm2403 = vcmp.eq.f32.partialorder %v1377, inf
  %v2404 = vsel %vm2403, %v1377, %v2402
  %vm2405 = vcmp.eq.f32.partialorder %v1377, 0.0
  %v2406 = vand.u32 %v1377, 2147483648
  %v2407 = vsel %vm2405, %v2406, %v2404
  %v2408 = vrsqrt.pop %v1378
  %v2409 = vmul.f32 %v2408, %v1378
  %v2410 = vmul.f32 %v2409, %v2408
  %v2411 = vmul.f32 0.5, %v2410
  %v2412 = vsub.f32 1.5, %v2411
  %v2413 = vmul.f32 %v2408, %v2412
  %v2414 = vmul.f32 %v1378, %v2413
  %vm2415 = vcmp.eq.f32.partialorder %v1378, inf
  %v2416 = vsel %vm2415, %v1378, %v2414
  %vm2417 = vcmp.eq.f32.partialorder %v1378, 0.0
  %v2418 = vand.u32 %v1378, 2147483648
  %v2419 = vsel %vm2417, %v2418, %v2416
  %v2420 = vrsqrt.pop %v1379
  %v2421 = vmul.f32 %v2420, %v1379
  %v2422 = vmul.f32 %v2421, %v2420
  %v2423 = vmul.f32 0.5, %v2422
  %v2424 = vsub.f32 1.5, %v2423
  %v2425 = vmul.f32 %v2420, %v2424
  %v2426 = vmul.f32 %v1379, %v2425
  %vm2427 = vcmp.eq.f32.partialorder %v1379, inf
  %v2428 = vsel %vm2427, %v1379, %v2426
  %vm2429 = vcmp.eq.f32.partialorder %v1379, 0.0
  %v2430 = vand.u32 %v1379, 2147483648
  %v2431 = vsel %vm2429, %v2430, %v2428
  %v2432 = vrsqrt.pop %v1380
  %v2433 = vmul.f32 %v2432, %v1380
  %v2434 = vmul.f32 %v2433, %v2432
  %v2435 = vmul.f32 0.5, %v2434
  %v2436 = vsub.f32 1.5, %v2435
  %v2437 = vmul.f32 %v2432, %v2436
  %v2438 = vmul.f32 %v1380, %v2437
  %vm2439 = vcmp.eq.f32.partialorder %v1380, inf
  %v2440 = vsel %vm2439, %v1380, %v2438
  %vm2441 = vcmp.eq.f32.partialorder %v1380, 0.0
  %v2442 = vand.u32 %v1380, 2147483648
  %v2443 = vsel %vm2441, %v2442, %v2440
  %v2444 = vrsqrt.pop %v1381
  %v2445 = vmul.f32 %v2444, %v1381
  %v2446 = vmul.f32 %v2445, %v2444
  %v2447 = vmul.f32 0.5, %v2446
  %v2448 = vsub.f32 1.5, %v2447
  %v2449 = vmul.f32 %v2444, %v2448
  %v2450 = vmul.f32 %v1381, %v2449
  %vm2451 = vcmp.eq.f32.partialorder %v1381, inf
  %v2452 = vsel %vm2451, %v1381, %v2450
  %vm2453 = vcmp.eq.f32.partialorder %v1381, 0.0
  %v2454 = vand.u32 %v1381, 2147483648
  %v2455 = vsel %vm2453, %v2454, %v2452
  %v2456 = vrsqrt.pop %v1382
  %v2457 = vmul.f32 %v2456, %v1382
  %v2458 = vmul.f32 %v2457, %v2456
  %v2459 = vmul.f32 0.5, %v2458
  %v2460 = vsub.f32 1.5, %v2459
  %v2461 = vmul.f32 %v2456, %v2460
  %v2462 = vmul.f32 %v1382, %v2461
  %vm2463 = vcmp.eq.f32.partialorder %v1382, inf
  %v2464 = vsel %vm2463, %v1382, %v2462
  %vm2465 = vcmp.eq.f32.partialorder %v1382, 0.0
  %v2466 = vand.u32 %v1382, 2147483648
  %v2467 = vsel %vm2465, %v2466, %v2464
  %v2468 = vrsqrt.pop %v1383
  %v2469 = vmul.f32 %v2468, %v1383
  %v2470 = vmul.f32 %v2469, %v2468
  %v2471 = vmul.f32 0.5, %v2470
  %v2472 = vsub.f32 1.5, %v2471
  %v2473 = vmul.f32 %v2468, %v2472
  %v2474 = vmul.f32 %v1383, %v2473
  %vm2475 = vcmp.eq.f32.partialorder %v1383, inf
  %v2476 = vsel %vm2475, %v1383, %v2474
  %vm2477 = vcmp.eq.f32.partialorder %v1383, 0.0
  %v2478 = vand.u32 %v1383, 2147483648
  %v2479 = vsel %vm2477, %v2478, %v2476
  %v2480 = vrsqrt.pop %v1384
  %v2481 = vmul.f32 %v2480, %v1384
  %v2482 = vmul.f32 %v2481, %v2480
  %v2483 = vmul.f32 0.5, %v2482
  %v2484 = vsub.f32 1.5, %v2483
  %v2485 = vmul.f32 %v2480, %v2484
  %v2486 = vmul.f32 %v1384, %v2485
  %vm2487 = vcmp.eq.f32.partialorder %v1384, inf
  %v2488 = vsel %vm2487, %v1384, %v2486
  %vm2489 = vcmp.eq.f32.partialorder %v1384, 0.0
  %v2490 = vand.u32 %v1384, 2147483648
  %v2491 = vsel %vm2489, %v2490, %v2488
  %v2492 = vrsqrt.pop %v1385
  %v2493 = vmul.f32 %v2492, %v1385
  %v2494 = vmul.f32 %v2493, %v2492
  %v2495 = vmul.f32 0.5, %v2494
  %v2496 = vsub.f32 1.5, %v2495
  %v2497 = vmul.f32 %v2492, %v2496
  %v2498 = vmul.f32 %v1385, %v2497
  %vm2499 = vcmp.eq.f32.partialorder %v1385, inf
  %v2500 = vsel %vm2499, %v1385, %v2498
  %vm2501 = vcmp.eq.f32.partialorder %v1385, 0.0
  %v2502 = vand.u32 %v1385, 2147483648
  %v2503 = vsel %vm2501, %v2502, %v2500
  %v2504 = vrsqrt.pop %v1386
  %v2505 = vmul.f32 %v2504, %v1386
  %v2506 = vmul.f32 %v2505, %v2504
  %v2507 = vmul.f32 0.5, %v2506
  %v2508 = vsub.f32 1.5, %v2507
  %v2509 = vmul.f32 %v2504, %v2508
  %v2510 = vmul.f32 %v1386, %v2509
  %vm2511 = vcmp.eq.f32.partialorder %v1386, inf
  %v2512 = vsel %vm2511, %v1386, %v2510
  %vm2513 = vcmp.eq.f32.partialorder %v1386, 0.0
  %v2514 = vand.u32 %v1386, 2147483648
  %v2515 = vsel %vm2513, %v2514, %v2512
  %v2516 = vrsqrt.pop %v1387
  %v2517 = vmul.f32 %v2516, %v1387
  %v2518 = vmul.f32 %v2517, %v2516
  %v2519 = vmul.f32 0.5, %v2518
  %v2520 = vsub.f32 1.5, %v2519
  %v2521 = vmul.f32 %v2516, %v2520
  %v2522 = vmul.f32 %v1387, %v2521
  %vm2523 = vcmp.eq.f32.partialorder %v1387, inf
  %v2524 = vsel %vm2523, %v1387, %v2522
  %vm2525 = vcmp.eq.f32.partialorder %v1387, 0.0
  %v2526 = vand.u32 %v1387, 2147483648
  %v2527 = vsel %vm2525, %v2526, %v2524
  %v2528 = vrsqrt.pop %v1388
  %v2529 = vmul.f32 %v2528, %v1388
  %v2530 = vmul.f32 %v2529, %v2528
  %v2531 = vmul.f32 0.5, %v2530
  %v2532 = vsub.f32 1.5, %v2531
  %v2533 = vmul.f32 %v2528, %v2532
  %v2534 = vmul.f32 %v1388, %v2533
  %vm2535 = vcmp.eq.f32.partialorder %v1388, inf
  %v2536 = vsel %vm2535, %v1388, %v2534
  %vm2537 = vcmp.eq.f32.partialorder %v1388, 0.0
  %v2538 = vand.u32 %v1388, 2147483648
  %v2539 = vsel %vm2537, %v2538, %v2536
  %v2540 = vrsqrt.pop %v1389
  %v2541 = vmul.f32 %v2540, %v1389
  %v2542 = vmul.f32 %v2541, %v2540
  %v2543 = vmul.f32 0.5, %v2542
  %v2544 = vsub.f32 1.5, %v2543
  %v2545 = vmul.f32 %v2540, %v2544
  %v2546 = vmul.f32 %v1389, %v2545
  %vm2547 = vcmp.eq.f32.partialorder %v1389, inf
  %v2548 = vsel %vm2547, %v1389, %v2546
  %vm2549 = vcmp.eq.f32.partialorder %v1389, 0.0
  %v2550 = vand.u32 %v1389, 2147483648
  %v2551 = vsel %vm2549, %v2550, %v2548
  %v2552 = vrsqrt.pop %v1390
  %v2553 = vmul.f32 %v2552, %v1390
  %v2554 = vmul.f32 %v2553, %v2552
  %v2555 = vmul.f32 0.5, %v2554
  %v2556 = vsub.f32 1.5, %v2555
  %v2557 = vmul.f32 %v2552, %v2556
  %v2558 = vmul.f32 %v1390, %v2557
  %vm2559 = vcmp.eq.f32.partialorder %v1390, inf
  %v2560 = vsel %vm2559, %v1390, %v2558
  %vm2561 = vcmp.eq.f32.partialorder %v1390, 0.0
  %v2562 = vand.u32 %v1390, 2147483648
  %v2563 = vsel %vm2561, %v2562, %v2560
  %v2564 = vrsqrt.pop %v1391
  %v2565 = vmul.f32 %v2564, %v1391
  %v2566 = vmul.f32 %v2565, %v2564
  %v2567 = vmul.f32 0.5, %v2566
  %v2568 = vsub.f32 1.5, %v2567
  %v2569 = vmul.f32 %v2564, %v2568
  %v2570 = vmul.f32 %v1391, %v2569
  %vm2571 = vcmp.eq.f32.partialorder %v1391, inf
  %v2572 = vsel %vm2571, %v1391, %v2570
  %vm2573 = vcmp.eq.f32.partialorder %v1391, 0.0
  %v2574 = vand.u32 %v1391, 2147483648
  %v2575 = vsel %vm2573, %v2574, %v2572
  %v2576 = vrsqrt.pop %v1392
  %v2577 = vmul.f32 %v2576, %v1392
  %v2578 = vmul.f32 %v2577, %v2576
  %v2579 = vmul.f32 0.5, %v2578
  %v2580 = vsub.f32 1.5, %v2579
  %v2581 = vmul.f32 %v2576, %v2580
  %v2582 = vmul.f32 %v1392, %v2581
  %vm2583 = vcmp.eq.f32.partialorder %v1392, inf
  %v2584 = vsel %vm2583, %v1392, %v2582
  %vm2585 = vcmp.eq.f32.partialorder %v1392, 0.0
  %v2586 = vand.u32 %v1392, 2147483648
  %v2587 = vsel %vm2585, %v2586, %v2584
  %v2588 = vrsqrt.pop %v1393
  %v2589 = vmul.f32 %v2588, %v1393
  %v2590 = vmul.f32 %v2589, %v2588
  %v2591 = vmul.f32 0.5, %v2590
  %v2592 = vsub.f32 1.5, %v2591
  %v2593 = vmul.f32 %v2588, %v2592
  %v2594 = vmul.f32 %v1393, %v2593
  %vm2595 = vcmp.eq.f32.partialorder %v1393, inf
  %v2596 = vsel %vm2595, %v1393, %v2594
  %vm2597 = vcmp.eq.f32.partialorder %v1393, 0.0
  %v2598 = vand.u32 %v1393, 2147483648
  %v2599 = vsel %vm2597, %v2598, %v2596
  %v2600 = vrsqrt.pop %v1394
  %v2601 = vmul.f32 %v2600, %v1394
  %v2602 = vmul.f32 %v2601, %v2600
  %v2603 = vmul.f32 0.5, %v2602
  %v2604 = vsub.f32 1.5, %v2603
  %v2605 = vmul.f32 %v2600, %v2604
  %v2606 = vmul.f32 %v1394, %v2605
  %vm2607 = vcmp.eq.f32.partialorder %v1394, inf
  %v2608 = vsel %vm2607, %v1394, %v2606
  %vm2609 = vcmp.eq.f32.partialorder %v1394, 0.0
  %v2610 = vand.u32 %v1394, 2147483648
  %v2611 = vsel %vm2609, %v2610, %v2608
  %v2612 = vrsqrt.pop %v1395
  %v2613 = vmul.f32 %v2612, %v1395
  %v2614 = vmul.f32 %v2613, %v2612
  %v2615 = vmul.f32 0.5, %v2614
  %v2616 = vsub.f32 1.5, %v2615
  %v2617 = vmul.f32 %v2612, %v2616
  %v2618 = vmul.f32 %v1395, %v2617
  %vm2619 = vcmp.eq.f32.partialorder %v1395, inf
  %v2620 = vsel %vm2619, %v1395, %v2618
  %vm2621 = vcmp.eq.f32.partialorder %v1395, 0.0
  %v2622 = vand.u32 %v1395, 2147483648
  %v2623 = vsel %vm2621, %v2622, %v2620
  %v2624 = vrsqrt.pop %v1396
  %v2625 = vmul.f32 %v2624, %v1396
  %v2626 = vmul.f32 %v2625, %v2624
  %v2627 = vmul.f32 0.5, %v2626
  %v2628 = vsub.f32 1.5, %v2627
  %v2629 = vmul.f32 %v2624, %v2628
  %v2630 = vmul.f32 %v1396, %v2629
  %vm2631 = vcmp.eq.f32.partialorder %v1396, inf
  %v2632 = vsel %vm2631, %v1396, %v2630
  %vm2633 = vcmp.eq.f32.partialorder %v1396, 0.0
  %v2634 = vand.u32 %v1396, 2147483648
  %v2635 = vsel %vm2633, %v2634, %v2632
  %v2636 = vrsqrt.pop %v1397
  %v2637 = vmul.f32 %v2636, %v1397
  %v2638 = vmul.f32 %v2637, %v2636
  %v2639 = vmul.f32 0.5, %v2638
  %v2640 = vsub.f32 1.5, %v2639
  %v2641 = vmul.f32 %v2636, %v2640
  %v2642 = vmul.f32 %v1397, %v2641
  %vm2643 = vcmp.eq.f32.partialorder %v1397, inf
  %v2644 = vsel %vm2643, %v1397, %v2642
  %vm2645 = vcmp.eq.f32.partialorder %v1397, 0.0
  %v2646 = vand.u32 %v1397, 2147483648
  %v2647 = vsel %vm2645, %v2646, %v2644
  %v2648 = vrsqrt.pop %v1398
  %v2649 = vmul.f32 %v2648, %v1398
  %v2650 = vmul.f32 %v2649, %v2648
  %v2651 = vmul.f32 0.5, %v2650
  %v2652 = vsub.f32 1.5, %v2651
  %v2653 = vmul.f32 %v2648, %v2652
  %v2654 = vmul.f32 %v1398, %v2653
  %vm2655 = vcmp.eq.f32.partialorder %v1398, inf
  %v2656 = vsel %vm2655, %v1398, %v2654
  %vm2657 = vcmp.eq.f32.partialorder %v1398, 0.0
  %v2658 = vand.u32 %v1398, 2147483648
  %v2659 = vsel %vm2657, %v2658, %v2656
  %v2660 = vrsqrt.pop %v1399
  %v2661 = vmul.f32 %v2660, %v1399
  %v2662 = vmul.f32 %v2661, %v2660
  %v2663 = vmul.f32 0.5, %v2662
  %v2664 = vsub.f32 1.5, %v2663
  %v2665 = vmul.f32 %v2660, %v2664
  %v2666 = vmul.f32 %v1399, %v2665
  %vm2667 = vcmp.eq.f32.partialorder %v1399, inf
  %v2668 = vsel %vm2667, %v1399, %v2666
  %vm2669 = vcmp.eq.f32.partialorder %v1399, 0.0
  %v2670 = vand.u32 %v1399, 2147483648
  %v2671 = vsel %vm2669, %v2670, %v2668
  %v2672 = vrsqrt.pop %v1400
  %v2673 = vmul.f32 %v2672, %v1400
  %v2674 = vmul.f32 %v2673, %v2672
  %v2675 = vmul.f32 0.5, %v2674
  %v2676 = vsub.f32 1.5, %v2675
  %v2677 = vmul.f32 %v2672, %v2676
  %v2678 = vmul.f32 %v1400, %v2677
  %vm2679 = vcmp.eq.f32.partialorder %v1400, inf
  %v2680 = vsel %vm2679, %v1400, %v2678
  %vm2681 = vcmp.eq.f32.partialorder %v1400, 0.0
  %v2682 = vand.u32 %v1400, 2147483648
  %v2683 = vsel %vm2681, %v2682, %v2680
  %v2684 = vrsqrt.pop %v1401
  %v2685 = vmul.f32 %v2684, %v1401
  %v2686 = vmul.f32 %v2685, %v2684
  %v2687 = vmul.f32 0.5, %v2686
  %v2688 = vsub.f32 1.5, %v2687
  %v2689 = vmul.f32 %v2684, %v2688
  %v2690 = vmul.f32 %v1401, %v2689
  %vm2691 = vcmp.eq.f32.partialorder %v1401, inf
  %v2692 = vsel %vm2691, %v1401, %v2690
  %vm2693 = vcmp.eq.f32.partialorder %v1401, 0.0
  %v2694 = vand.u32 %v1401, 2147483648
  %v2695 = vsel %vm2693, %v2694, %v2692
  %v2696 = vrsqrt.pop %v1402
  %v2697 = vmul.f32 %v2696, %v1402
  %v2698 = vmul.f32 %v2697, %v2696
  %v2699 = vmul.f32 0.5, %v2698
  %v2700 = vsub.f32 1.5, %v2699
  %v2701 = vmul.f32 %v2696, %v2700
  %v2702 = vmul.f32 %v1402, %v2701
  %vm2703 = vcmp.eq.f32.partialorder %v1402, inf
  %v2704 = vsel %vm2703, %v1402, %v2702
  %vm2705 = vcmp.eq.f32.partialorder %v1402, 0.0
  %v2706 = vand.u32 %v1402, 2147483648
  %v2707 = vsel %vm2705, %v2706, %v2704
  %v2708 = vrsqrt.pop %v1403
  %v2709 = vmul.f32 %v2708, %v1403
  %v2710 = vmul.f32 %v2709, %v2708
  %v2711 = vmul.f32 0.5, %v2710
  %v2712 = vsub.f32 1.5, %v2711
  %v2713 = vmul.f32 %v2708, %v2712
  %v2714 = vmul.f32 %v1403, %v2713
  %vm2715 = vcmp.eq.f32.partialorder %v1403, inf
  %v2716 = vsel %vm2715, %v1403, %v2714
  %vm2717 = vcmp.eq.f32.partialorder %v1403, 0.0
  %v2718 = vand.u32 %v1403, 2147483648
  %v2719 = vsel %vm2717, %v2718, %v2716
  %v2720 = vrsqrt.pop %v1404
  %v2721 = vmul.f32 %v2720, %v1404
  %v2722 = vmul.f32 %v2721, %v2720
  %v2723 = vmul.f32 0.5, %v2722
  %v2724 = vsub.f32 1.5, %v2723
  %v2725 = vmul.f32 %v2720, %v2724
  %v2726 = vmul.f32 %v1404, %v2725
  %vm2727 = vcmp.eq.f32.partialorder %v1404, inf
  %v2728 = vsel %vm2727, %v1404, %v2726
  %vm2729 = vcmp.eq.f32.partialorder %v1404, 0.0
  %v2730 = vand.u32 %v1404, 2147483648
  %v2731 = vsel %vm2729, %v2730, %v2728
  %v2732 = vrsqrt.pop %v1405
  %v2733 = vmul.f32 %v2732, %v1405
  %v2734 = vmul.f32 %v2733, %v2732
  %v2735 = vmul.f32 0.5, %v2734
  %v2736 = vsub.f32 1.5, %v2735
  %v2737 = vmul.f32 %v2732, %v2736
  %v2738 = vmul.f32 %v1405, %v2737
  %vm2739 = vcmp.eq.f32.partialorder %v1405, inf
  %v2740 = vsel %vm2739, %v1405, %v2738
  %vm2741 = vcmp.eq.f32.partialorder %v1405, 0.0
  %v2742 = vand.u32 %v1405, 2147483648
  %v2743 = vsel %vm2741, %v2742, %v2740
  %v2744 = vrsqrt.pop %v1406
  %v2745 = vmul.f32 %v2744, %v1406
  %v2746 = vmul.f32 %v2745, %v2744
  %v2747 = vmul.f32 0.5, %v2746
  %v2748 = vsub.f32 1.5, %v2747
  %v2749 = vmul.f32 %v2744, %v2748
  %v2750 = vmul.f32 %v1406, %v2749
  %vm2751 = vcmp.eq.f32.partialorder %v1406, inf
  %v2752 = vsel %vm2751, %v1406, %v2750
  %vm2753 = vcmp.eq.f32.partialorder %v1406, 0.0
  %v2754 = vand.u32 %v1406, 2147483648
  %v2755 = vsel %vm2753, %v2754, %v2752
  %v2756 = vrsqrt.pop %v1407
  %v2757 = vmul.f32 %v2756, %v1407
  %v2758 = vmul.f32 %v2757, %v2756
  %v2759 = vmul.f32 0.5, %v2758
  %v2760 = vsub.f32 1.5, %v2759
  %v2761 = vmul.f32 %v2756, %v2760
  %v2762 = vmul.f32 %v1407, %v2761
  %vm2763 = vcmp.eq.f32.partialorder %v1407, inf
  %v2764 = vsel %vm2763, %v1407, %v2762
  %vm2765 = vcmp.eq.f32.partialorder %v1407, 0.0
  %v2766 = vand.u32 %v1407, 2147483648
  %v2767 = vsel %vm2765, %v2766, %v2764
  %v2768 = vrsqrt.pop %v1408
  %v2769 = vmul.f32 %v2768, %v1408
  %v2770 = vmul.f32 %v2769, %v2768
  %v2771 = vmul.f32 0.5, %v2770
  %v2772 = vsub.f32 1.5, %v2771
  %v2773 = vmul.f32 %v2768, %v2772
  %v2774 = vmul.f32 %v1408, %v2773
  %vm2775 = vcmp.eq.f32.partialorder %v1408, inf
  %v2776 = vsel %vm2775, %v1408, %v2774
  %vm2777 = vcmp.eq.f32.partialorder %v1408, 0.0
  %v2778 = vand.u32 %v1408, 2147483648
  %v2779 = vsel %vm2777, %v2778, %v2776
  %v2780 = vrsqrt.pop %v1409
  %v2781 = vmul.f32 %v2780, %v1409
  %v2782 = vmul.f32 %v2781, %v2780
  %v2783 = vmul.f32 0.5, %v2782
  %v2784 = vsub.f32 1.5, %v2783
  %v2785 = vmul.f32 %v2780, %v2784
  %v2786 = vmul.f32 %v1409, %v2785
  %vm2787 = vcmp.eq.f32.partialorder %v1409, inf
  %v2788 = vsel %vm2787, %v1409, %v2786
  %vm2789 = vcmp.eq.f32.partialorder %v1409, 0.0
  %v2790 = vand.u32 %v1409, 2147483648
  %v2791 = vsel %vm2789, %v2790, %v2788
  %v2792 = vrsqrt.pop %v1410
  %v2793 = vmul.f32 %v2792, %v1410
  %v2794 = vmul.f32 %v2793, %v2792
  %v2795 = vmul.f32 0.5, %v2794
  %v2796 = vsub.f32 1.5, %v2795
  %v2797 = vmul.f32 %v2792, %v2796
  %v2798 = vmul.f32 %v1410, %v2797
  %vm2799 = vcmp.eq.f32.partialorder %v1410, inf
  %v2800 = vsel %vm2799, %v1410, %v2798
  %vm2801 = vcmp.eq.f32.partialorder %v1410, 0.0
  %v2802 = vand.u32 %v1410, 2147483648
  %v2803 = vsel %vm2801, %v2802, %v2800
  %v2804 = vrsqrt.pop %v1411
  %v2805 = vmul.f32 %v2804, %v1411
  %v2806 = vmul.f32 %v2805, %v2804
  %v2807 = vmul.f32 0.5, %v2806
  %v2808 = vsub.f32 1.5, %v2807
  %v2809 = vmul.f32 %v2804, %v2808
  %v2810 = vmul.f32 %v1411, %v2809
  %vm2811 = vcmp.eq.f32.partialorder %v1411, inf
  %v2812 = vsel %vm2811, %v1411, %v2810
  %vm2813 = vcmp.eq.f32.partialorder %v1411, 0.0
  %v2814 = vand.u32 %v1411, 2147483648
  %v2815 = vsel %vm2813, %v2814, %v2812
  %v2816 = vrsqrt.pop %v1412
  %v2817 = vmul.f32 %v2816, %v1412
  %v2818 = vmul.f32 %v2817, %v2816
  %v2819 = vmul.f32 0.5, %v2818
  %v2820 = vsub.f32 1.5, %v2819
  %v2821 = vmul.f32 %v2816, %v2820
  %v2822 = vmul.f32 %v1412, %v2821
  %vm2823 = vcmp.eq.f32.partialorder %v1412, inf
  %v2824 = vsel %vm2823, %v1412, %v2822
  %vm2825 = vcmp.eq.f32.partialorder %v1412, 0.0
  %v2826 = vand.u32 %v1412, 2147483648
  %v2827 = vsel %vm2825, %v2826, %v2824
  %v2828 = vrsqrt.pop %v1413
  %v2829 = vmul.f32 %v2828, %v1413
  %v2830 = vmul.f32 %v2829, %v2828
  %v2831 = vmul.f32 0.5, %v2830
  %v2832 = vsub.f32 1.5, %v2831
  %v2833 = vmul.f32 %v2828, %v2832
  %v2834 = vmul.f32 %v1413, %v2833
  %vm2835 = vcmp.eq.f32.partialorder %v1413, inf
  %v2836 = vsel %vm2835, %v1413, %v2834
  %vm2837 = vcmp.eq.f32.partialorder %v1413, 0.0
  %v2838 = vand.u32 %v1413, 2147483648
  %v2839 = vsel %vm2837, %v2838, %v2836
  %v2840 = vrsqrt.pop %v1414
  %v2841 = vmul.f32 %v2840, %v1414
  %v2842 = vmul.f32 %v2841, %v2840
  %v2843 = vmul.f32 0.5, %v2842
  %v2844 = vsub.f32 1.5, %v2843
  %v2845 = vmul.f32 %v2840, %v2844
  %v2846 = vmul.f32 %v1414, %v2845
  %vm2847 = vcmp.eq.f32.partialorder %v1414, inf
  %v2848 = vsel %vm2847, %v1414, %v2846
  %vm2849 = vcmp.eq.f32.partialorder %v1414, 0.0
  %v2850 = vand.u32 %v1414, 2147483648
  %v2851 = vsel %vm2849, %v2850, %v2848
  %v2852 = vrsqrt.pop %v1415
  %v2853 = vmul.f32 %v2852, %v1415
  %v2854 = vmul.f32 %v2853, %v2852
  %v2855 = vmul.f32 0.5, %v2854
  %v2856 = vsub.f32 1.5, %v2855
  %v2857 = vmul.f32 %v2852, %v2856
  %v2858 = vmul.f32 %v1415, %v2857
  %vm2859 = vcmp.eq.f32.partialorder %v1415, inf
  %v2860 = vsel %vm2859, %v1415, %v2858
  %vm2861 = vcmp.eq.f32.partialorder %v1415, 0.0
  %v2862 = vand.u32 %v1415, 2147483648
  %v2863 = vsel %vm2861, %v2862, %v2860
  %v2864 = vrsqrt.pop %v1416
  %v2865 = vmul.f32 %v2864, %v1416
  %v2866 = vmul.f32 %v2865, %v2864
  %v2867 = vmul.f32 0.5, %v2866
  %v2868 = vsub.f32 1.5, %v2867
  %v2869 = vmul.f32 %v2864, %v2868
  %v2870 = vmul.f32 %v1416, %v2869
  %vm2871 = vcmp.eq.f32.partialorder %v1416, inf
  %v2872 = vsel %vm2871, %v1416, %v2870
  %vm2873 = vcmp.eq.f32.partialorder %v1416, 0.0
  %v2874 = vand.u32 %v1416, 2147483648
  %v2875 = vsel %vm2873, %v2874, %v2872
  %v2876 = vrsqrt.pop %v1417
  %v2877 = vmul.f32 %v2876, %v1417
  %v2878 = vmul.f32 %v2877, %v2876
  %v2879 = vmul.f32 0.5, %v2878
  %v2880 = vsub.f32 1.5, %v2879
  %v2881 = vmul.f32 %v2876, %v2880
  %v2882 = vmul.f32 %v1417, %v2881
  %vm2883 = vcmp.eq.f32.partialorder %v1417, inf
  %v2884 = vsel %vm2883, %v1417, %v2882
  %vm2885 = vcmp.eq.f32.partialorder %v1417, 0.0
  %v2886 = vand.u32 %v1417, 2147483648
  %v2887 = vsel %vm2885, %v2886, %v2884
  %v2888 = vrsqrt.pop %v1418
  %v2889 = vmul.f32 %v2888, %v1418
  %v2890 = vmul.f32 %v2889, %v2888
  %v2891 = vmul.f32 0.5, %v2890
  %v2892 = vsub.f32 1.5, %v2891
  %v2893 = vmul.f32 %v2888, %v2892
  %v2894 = vmul.f32 %v1418, %v2893
  %vm2895 = vcmp.eq.f32.partialorder %v1418, inf
  %v2896 = vsel %vm2895, %v1418, %v2894
  %vm2897 = vcmp.eq.f32.partialorder %v1418, 0.0
  %v2898 = vand.u32 %v1418, 2147483648
  %v2899 = vsel %vm2897, %v2898, %v2896
  %v2900 = vrsqrt.pop %v1419
  %v2901 = vmul.f32 %v2900, %v1419
  %v2902 = vmul.f32 %v2901, %v2900
  %v2903 = vmul.f32 0.5, %v2902
  %v2904 = vsub.f32 1.5, %v2903
  %v2905 = vmul.f32 %v2900, %v2904
  %v2906 = vmul.f32 %v1419, %v2905
  %vm2907 = vcmp.eq.f32.partialorder %v1419, inf
  %v2908 = vsel %vm2907, %v1419, %v2906
  %vm2909 = vcmp.eq.f32.partialorder %v1419, 0.0
  %v2910 = vand.u32 %v1419, 2147483648
  %v2911 = vsel %vm2909, %v2910, %v2908
  %v2912 = vrsqrt.pop %v1420
  %v2913 = vmul.f32 %v2912, %v1420
  %v2914 = vmul.f32 %v2913, %v2912
  %v2915 = vmul.f32 0.5, %v2914
  %v2916 = vsub.f32 1.5, %v2915
  %v2917 = vmul.f32 %v2912, %v2916
  %v2918 = vmul.f32 %v1420, %v2917
  %vm2919 = vcmp.eq.f32.partialorder %v1420, inf
  %v2920 = vsel %vm2919, %v1420, %v2918
  %vm2921 = vcmp.eq.f32.partialorder %v1420, 0.0
  %v2922 = vand.u32 %v1420, 2147483648
  %v2923 = vsel %vm2921, %v2922, %v2920
  %v2924 = vrsqrt.pop %v1421
  %v2925 = vmul.f32 %v2924, %v1421
  %v2926 = vmul.f32 %v2925, %v2924
  %v2927 = vmul.f32 0.5, %v2926
  %v2928 = vsub.f32 1.5, %v2927
  %v2929 = vmul.f32 %v2924, %v2928
  %v2930 = vmul.f32 %v1421, %v2929
  %vm2931 = vcmp.eq.f32.partialorder %v1421, inf
  %v2932 = vsel %vm2931, %v1421, %v2930
  %vm2933 = vcmp.eq.f32.partialorder %v1421, 0.0
  %v2934 = vand.u32 %v1421, 2147483648
  %v2935 = vsel %vm2933, %v2934, %v2932
  %v2936 = vrsqrt.pop %v1422
  %v2937 = vmul.f32 %v2936, %v1422
  %v2938 = vmul.f32 %v2937, %v2936
  %v2939 = vmul.f32 0.5, %v2938
  %v2940 = vsub.f32 1.5, %v2939
  %v2941 = vmul.f32 %v2936, %v2940
  %v2942 = vmul.f32 %v1422, %v2941
  %vm2943 = vcmp.eq.f32.partialorder %v1422, inf
  %v2944 = vsel %vm2943, %v1422, %v2942
  %vm2945 = vcmp.eq.f32.partialorder %v1422, 0.0
  %v2946 = vand.u32 %v1422, 2147483648
  %v2947 = vsel %vm2945, %v2946, %v2944
  %v2948 = vrsqrt.pop %v1423
  %v2949 = vmul.f32 %v2948, %v1423
  %v2950 = vmul.f32 %v2949, %v2948
  %v2951 = vmul.f32 0.5, %v2950
  %v2952 = vsub.f32 1.5, %v2951
  %v2953 = vmul.f32 %v2948, %v2952
  %v2954 = vmul.f32 %v1423, %v2953
  %vm2955 = vcmp.eq.f32.partialorder %v1423, inf
  %v2956 = vsel %vm2955, %v1423, %v2954
  %vm2957 = vcmp.eq.f32.partialorder %v1423, 0.0
  %v2958 = vand.u32 %v1423, 2147483648
  %v2959 = vsel %vm2957, %v2958, %v2956
  %v2960 = vadd.f32 %v1435, 1e-06
  %v2961 = vadd.f32 %v1447, 1e-06
  %v2962 = vadd.f32 %v1459, 1e-06
  %v2963 = vadd.f32 %v1471, 1e-06
  %v2964 = vadd.f32 %v1483, 1e-06
  %v2965 = vadd.f32 %v1495, 1e-06
  %v2966 = vadd.f32 %v1507, 1e-06
  %v2967 = vadd.f32 %v1519, 1e-06
  %v2968 = vadd.f32 %v1531, 1e-06
  %v2969 = vadd.f32 %v1543, 1e-06
  %v2970 = vadd.f32 %v1555, 1e-06
  %v2971 = vadd.f32 %v1567, 1e-06
  %v2972 = vadd.f32 %v1579, 1e-06
  %v2973 = vadd.f32 %v1591, 1e-06
  %v2974 = vadd.f32 %v1603, 1e-06
  %v2975 = vadd.f32 %v1615, 1e-06
  %v2976 = vadd.f32 %v1627, 1e-06
  %v2977 = vadd.f32 %v1639, 1e-06
  %v2978 = vadd.f32 %v1651, 1e-06
  %v2979 = vadd.f32 %v1663, 1e-06
  %v2980 = vadd.f32 %v1675, 1e-06
  %v2981 = vadd.f32 %v1687, 1e-06
  %v2982 = vadd.f32 %v1699, 1e-06
  %v2983 = vadd.f32 %v1711, 1e-06
  %v2984 = vadd.f32 %v1723, 1e-06
  %v2985 = vadd.f32 %v1735, 1e-06
  %v2986 = vadd.f32 %v1747, 1e-06
  %v2987 = vadd.f32 %v1759, 1e-06
  %v2988 = vadd.f32 %v1771, 1e-06
  %v2989 = vadd.f32 %v1783, 1e-06
  %v2990 = vadd.f32 %v1795, 1e-06
  %v2991 = vadd.f32 %v1807, 1e-06
  %v2992 = vadd.f32 %v1819, 1e-06
  %v2993 = vadd.f32 %v1831, 1e-06
  %v2994 = vadd.f32 %v1843, 1e-06
  %v2995 = vadd.f32 %v1855, 1e-06
  %v2996 = vadd.f32 %v1867, 1e-06
  %v2997 = vadd.f32 %v1879, 1e-06
  %v2998 = vadd.f32 %v1891, 1e-06
  %v2999 = vadd.f32 %v1903, 1e-06
  %v3000 = vadd.f32 %v1915, 1e-06
  %v3001 = vadd.f32 %v1927, 1e-06
  %v3002 = vadd.f32 %v1939, 1e-06
  %v3003 = vadd.f32 %v1951, 1e-06
  %v3004 = vadd.f32 %v1963, 1e-06
  %v3005 = vadd.f32 %v1975, 1e-06
  %v3006 = vadd.f32 %v1987, 1e-06
  %v3007 = vadd.f32 %v1999, 1e-06
  %v3008 = vadd.f32 %v2011, 1e-06
  %v3009 = vadd.f32 %v2023, 1e-06
  %v3010 = vadd.f32 %v2035, 1e-06
  %v3011 = vadd.f32 %v2047, 1e-06
  %v3012 = vadd.f32 %v2059, 1e-06
  %v3013 = vadd.f32 %v2071, 1e-06
  %v3014 = vadd.f32 %v2083, 1e-06
  %v3015 = vadd.f32 %v2095, 1e-06
  %v3016 = vadd.f32 %v2107, 1e-06
  %v3017 = vadd.f32 %v2119, 1e-06
  %v3018 = vadd.f32 %v2131, 1e-06
  %v3019 = vadd.f32 %v2143, 1e-06
  %v3020 = vadd.f32 %v2155, 1e-06
  %v3021 = vadd.f32 %v2167, 1e-06
  %v3022 = vadd.f32 %v2179, 1e-06
  %v3023 = vadd.f32 %v2191, 1e-06
  %v3024 = vadd.f32 %v2203, 1e-06
  %v3025 = vadd.f32 %v2215, 1e-06
  %v3026 = vadd.f32 %v2227, 1e-06
  %v3027 = vadd.f32 %v2239, 1e-06
  %v3028 = vadd.f32 %v2251, 1e-06
  %v3029 = vadd.f32 %v2263, 1e-06
  %v3030 = vadd.f32 %v2275, 1e-06
  %v3031 = vadd.f32 %v2287, 1e-06
  %v3032 = vadd.f32 %v2299, 1e-06
  %v3033 = vadd.f32 %v2311, 1e-06
  %v3034 = vadd.f32 %v2323, 1e-06
  %v3035 = vadd.f32 %v2335, 1e-06
  %v3036 = vadd.f32 %v2347, 1e-06
  %v3037 = vadd.f32 %v2359, 1e-06
  %v3038 = vadd.f32 %v2371, 1e-06
  %v3039 = vadd.f32 %v2383, 1e-06
  %v3040 = vadd.f32 %v2395, 1e-06
  %v3041 = vadd.f32 %v2407, 1e-06
  %v3042 = vadd.f32 %v2419, 1e-06
  %v3043 = vadd.f32 %v2431, 1e-06
  %v3044 = vadd.f32 %v2443, 1e-06
  %v3045 = vadd.f32 %v2455, 1e-06
  %v3046 = vadd.f32 %v2467, 1e-06
  %v3047 = vadd.f32 %v2479, 1e-06
  %v3048 = vadd.f32 %v2491, 1e-06
  %v3049 = vadd.f32 %v2503, 1e-06
  %v3050 = vadd.f32 %v2515, 1e-06
  %v3051 = vadd.f32 %v2527, 1e-06
  %v3052 = vadd.f32 %v2539, 1e-06
  %v3053 = vadd.f32 %v2551, 1e-06
  %v3054 = vadd.f32 %v2563, 1e-06
  %v3055 = vadd.f32 %v2575, 1e-06
  %v3056 = vadd.f32 %v2587, 1e-06
  %v3057 = vadd.f32 %v2599, 1e-06
  %v3058 = vadd.f32 %v2611, 1e-06
  %v3059 = vadd.f32 %v2623, 1e-06
  %v3060 = vadd.f32 %v2635, 1e-06
  %v3061 = vadd.f32 %v2647, 1e-06
  %v3062 = vadd.f32 %v2659, 1e-06
  %v3063 = vadd.f32 %v2671, 1e-06
  %v3064 = vadd.f32 %v2683, 1e-06
  %v3065 = vadd.f32 %v2695, 1e-06
  %v3066 = vadd.f32 %v2707, 1e-06
  %v3067 = vadd.f32 %v2719, 1e-06
  %v3068 = vadd.f32 %v2731, 1e-06
  %v3069 = vadd.f32 %v2743, 1e-06
  %v3070 = vadd.f32 %v2755, 1e-06
  %v3071 = vadd.f32 %v2767, 1e-06
  %v3072 = vadd.f32 %v2779, 1e-06
  %v3073 = vadd.f32 %v2791, 1e-06
  %v3074 = vadd.f32 %v2803, 1e-06
  %v3075 = vadd.f32 %v2815, 1e-06
  %v3076 = vadd.f32 %v2827, 1e-06
  %v3077 = vadd.f32 %v2839, 1e-06
  %v3078 = vadd.f32 %v2851, 1e-06
  %v3079 = vadd.f32 %v2863, 1e-06
  %v3080 = vadd.f32 %v2875, 1e-06
  %v3081 = vadd.f32 %v2887, 1e-06
  %v3082 = vadd.f32 %v2899, 1e-06
  %v3083 = vadd.f32 %v2911, 1e-06
  %v3084 = vadd.f32 %v2923, 1e-06
  %v3085 = vadd.f32 %v2935, 1e-06
  %v3086 = vadd.f32 %v2947, 1e-06
  %v3087 = vadd.f32 %v2959, 1e-06
  %v3088 = vrcp.pop %v2960
  %v3089 = vmul.f32 %v2960, %v3088
  %v3090 = vsub.f32 1.0, %v3089
  %v3091 = vmul.f32 %v3088, %v3090
  %v3092 = vadd.f32 %v3088, %v3091
  %vm3093 = vweird.f32 %v2960
  %vm3094 = vweird.f32 %v3088
  %vm3095 = vmor %vm3093, %vm3094
  %v3096 = vsel %vm3095, %v3088, %v3092
  %v3097 = vand.u32 2147483647, %v2960
  %vm3098 = vcmp.eq.f32.partialorder %v3097, 8.507059e+37
  %v3099 = vand.u32 %v2960, 2147483648
  %v3100 = vor.u32 1.1754944e-38, %v3099
  %v3101 = vsel %vm3098, %v3100, %v3096
  %v3102 = vmul.f32 1.0, %v3101
  %v3103 = vrcp.pop %v2961
  %v3104 = vmul.f32 %v2961, %v3103
  %v3105 = vsub.f32 1.0, %v3104
  %v3106 = vmul.f32 %v3103, %v3105
  %v3107 = vadd.f32 %v3103, %v3106
  %vm3108 = vweird.f32 %v2961
  %vm3109 = vweird.f32 %v3103
  %vm3110 = vmor %vm3108, %vm3109
  %v3111 = vsel %vm3110, %v3103, %v3107
  %v3112 = vand.u32 2147483647, %v2961
  %vm3113 = vcmp.eq.f32.partialorder %v3112, 8.507059e+37
  %v3114 = vand.u32 %v2961, 2147483648
  %v3115 = vor.u32 1.1754944e-38, %v3114
  %v3116 = vsel %vm3113, %v3115, %v3111
  %v3117 = vmul.f32 1.0, %v3116
  %v3118 = vrcp.pop %v2962
  %v3119 = vmul.f32 %v2962, %v3118
  %v3120 = vsub.f32 1.0, %v3119
  %v3121 = vmul.f32 %v3118, %v3120
  %v3122 = vadd.f32 %v3118, %v3121
  %vm3123 = vweird.f32 %v2962
  %vm3124 = vweird.f32 %v3118
  %vm3125 = vmor %vm3123, %vm3124
  %v3126 = vsel %vm3125, %v3118, %v3122
  %v3127 = vand.u32 2147483647, %v2962
  %vm3128 = vcmp.eq.f32.partialorder %v3127, 8.507059e+37
  %v3129 = vand.u32 %v2962, 2147483648
  %v3130 = vor.u32 1.1754944e-38, %v3129
  %v3131 = vsel %vm3128, %v3130, %v3126
  %v3132 = vmul.f32 1.0, %v3131
  %v3133 = vrcp.pop %v2963
  %v3134 = vmul.f32 %v2963, %v3133
  %v3135 = vsub.f32 1.0, %v3134
  %v3136 = vmul.f32 %v3133, %v3135
  %v3137 = vadd.f32 %v3133, %v3136
  %vm3138 = vweird.f32 %v2963
  %vm3139 = vweird.f32 %v3133
  %vm3140 = vmor %vm3138, %vm3139
  %v3141 = vsel %vm3140, %v3133, %v3137
  %v3142 = vand.u32 2147483647, %v2963
  %vm3143 = vcmp.eq.f32.partialorder %v3142, 8.507059e+37
  %v3144 = vand.u32 %v2963, 2147483648
  %v3145 = vor.u32 1.1754944e-38, %v3144
  %v3146 = vsel %vm3143, %v3145, %v3141
  %v3147 = vmul.f32 1.0, %v3146
  %v3148 = vrcp.pop %v2964
  %v3149 = vmul.f32 %v2964, %v3148
  %v3150 = vsub.f32 1.0, %v3149
  %v3151 = vmul.f32 %v3148, %v3150
  %v3152 = vadd.f32 %v3148, %v3151
  %vm3153 = vweird.f32 %v2964
  %vm3154 = vweird.f32 %v3148
  %vm3155 = vmor %vm3153, %vm3154
  %v3156 = vsel %vm3155, %v3148, %v3152
  %v3157 = vand.u32 2147483647, %v2964
  %vm3158 = vcmp.eq.f32.partialorder %v3157, 8.507059e+37
  %v3159 = vand.u32 %v2964, 2147483648
  %v3160 = vor.u32 1.1754944e-38, %v3159
  %v3161 = vsel %vm3158, %v3160, %v3156
  %v3162 = vmul.f32 1.0, %v3161
  %v3163 = vrcp.pop %v2965
  %v3164 = vmul.f32 %v2965, %v3163
  %v3165 = vsub.f32 1.0, %v3164
  %v3166 = vmul.f32 %v3163, %v3165
  %v3167 = vadd.f32 %v3163, %v3166
  %vm3168 = vweird.f32 %v2965
  %vm3169 = vweird.f32 %v3163
  %vm3170 = vmor %vm3168, %vm3169
  %v3171 = vsel %vm3170, %v3163, %v3167
  %v3172 = vand.u32 2147483647, %v2965
  %vm3173 = vcmp.eq.f32.partialorder %v3172, 8.507059e+37
  %v3174 = vand.u32 %v2965, 2147483648
  %v3175 = vor.u32 1.1754944e-38, %v3174
  %v3176 = vsel %vm3173, %v3175, %v3171
  %v3177 = vmul.f32 1.0, %v3176
  %v3178 = vrcp.pop %v2966
  %v3179 = vmul.f32 %v2966, %v3178
  %v3180 = vsub.f32 1.0, %v3179
  %v3181 = vmul.f32 %v3178, %v3180
  %v3182 = vadd.f32 %v3178, %v3181
  %vm3183 = vweird.f32 %v2966
  %vm3184 = vweird.f32 %v3178
  %vm3185 = vmor %vm3183, %vm3184
  %v3186 = vsel %vm3185, %v3178, %v3182
  %v3187 = vand.u32 2147483647, %v2966
  %vm3188 = vcmp.eq.f32.partialorder %v3187, 8.507059e+37
  %v3189 = vand.u32 %v2966, 2147483648
  %v3190 = vor.u32 1.1754944e-38, %v3189
  %v3191 = vsel %vm3188, %v3190, %v3186
  %v3192 = vmul.f32 1.0, %v3191
  %v3193 = vrcp.pop %v2967
  %v3194 = vmul.f32 %v2967, %v3193
  %v3195 = vsub.f32 1.0, %v3194
  %v3196 = vmul.f32 %v3193, %v3195
  %v3197 = vadd.f32 %v3193, %v3196
  %vm3198 = vweird.f32 %v2967
  %vm3199 = vweird.f32 %v3193
  %vm3200 = vmor %vm3198, %vm3199
  %v3201 = vsel %vm3200, %v3193, %v3197
  %v3202 = vand.u32 2147483647, %v2967
  %vm3203 = vcmp.eq.f32.partialorder %v3202, 8.507059e+37
  %v3204 = vand.u32 %v2967, 2147483648
  %v3205 = vor.u32 1.1754944e-38, %v3204
  %v3206 = vsel %vm3203, %v3205, %v3201
  %v3207 = vmul.f32 1.0, %v3206
  %v3208 = vrcp.pop %v2968
  %v3209 = vmul.f32 %v2968, %v3208
  %v3210 = vsub.f32 1.0, %v3209
  %v3211 = vmul.f32 %v3208, %v3210
  %v3212 = vadd.f32 %v3208, %v3211
  %vm3213 = vweird.f32 %v2968
  %vm3214 = vweird.f32 %v3208
  %vm3215 = vmor %vm3213, %vm3214
  %v3216 = vsel %vm3215, %v3208, %v3212
  %v3217 = vand.u32 2147483647, %v2968
  %vm3218 = vcmp.eq.f32.partialorder %v3217, 8.507059e+37
  %v3219 = vand.u32 %v2968, 2147483648
  %v3220 = vor.u32 1.1754944e-38, %v3219
  %v3221 = vsel %vm3218, %v3220, %v3216
  %v3222 = vmul.f32 1.0, %v3221
  %v3223 = vrcp.pop %v2969
  %v3224 = vmul.f32 %v2969, %v3223
  %v3225 = vsub.f32 1.0, %v3224
  %v3226 = vmul.f32 %v3223, %v3225
  %v3227 = vadd.f32 %v3223, %v3226
  %vm3228 = vweird.f32 %v2969
  %vm3229 = vweird.f32 %v3223
  %vm3230 = vmor %vm3228, %vm3229
  %v3231 = vsel %vm3230, %v3223, %v3227
  %v3232 = vand.u32 2147483647, %v2969
  %vm3233 = vcmp.eq.f32.partialorder %v3232, 8.507059e+37
  %v3234 = vand.u32 %v2969, 2147483648
  %v3235 = vor.u32 1.1754944e-38, %v3234
  %v3236 = vsel %vm3233, %v3235, %v3231
  %v3237 = vmul.f32 1.0, %v3236
  %v3238 = vrcp.pop %v2970
  %v3239 = vmul.f32 %v2970, %v3238
  %v3240 = vsub.f32 1.0, %v3239
  %v3241 = vmul.f32 %v3238, %v3240
  %v3242 = vadd.f32 %v3238, %v3241
  %vm3243 = vweird.f32 %v2970
  %vm3244 = vweird.f32 %v3238
  %vm3245 = vmor %vm3243, %vm3244
  %v3246 = vsel %vm3245, %v3238, %v3242
  %v3247 = vand.u32 2147483647, %v2970
  %vm3248 = vcmp.eq.f32.partialorder %v3247, 8.507059e+37
  %v3249 = vand.u32 %v2970, 2147483648
  %v3250 = vor.u32 1.1754944e-38, %v3249
  %v3251 = vsel %vm3248, %v3250, %v3246
  %v3252 = vmul.f32 1.0, %v3251
  %v3253 = vrcp.pop %v2971
  %v3254 = vmul.f32 %v2971, %v3253
  %v3255 = vsub.f32 1.0, %v3254
  %v3256 = vmul.f32 %v3253, %v3255
  %v3257 = vadd.f32 %v3253, %v3256
  %vm3258 = vweird.f32 %v2971
  %vm3259 = vweird.f32 %v3253
  %vm3260 = vmor %vm3258, %vm3259
  %v3261 = vsel %vm3260, %v3253, %v3257
  %v3262 = vand.u32 2147483647, %v2971
  %vm3263 = vcmp.eq.f32.partialorder %v3262, 8.507059e+37
  %v3264 = vand.u32 %v2971, 2147483648
  %v3265 = vor.u32 1.1754944e-38, %v3264
  %v3266 = vsel %vm3263, %v3265, %v3261
  %v3267 = vmul.f32 1.0, %v3266
  %v3268 = vrcp.pop %v2972
  %v3269 = vmul.f32 %v2972, %v3268
  %v3270 = vsub.f32 1.0, %v3269
  %v3271 = vmul.f32 %v3268, %v3270
  %v3272 = vadd.f32 %v3268, %v3271
  %vm3273 = vweird.f32 %v2972
  %vm3274 = vweird.f32 %v3268
  %vm3275 = vmor %vm3273, %vm3274
  %v3276 = vsel %vm3275, %v3268, %v3272
  %v3277 = vand.u32 2147483647, %v2972
  %vm3278 = vcmp.eq.f32.partialorder %v3277, 8.507059e+37
  %v3279 = vand.u32 %v2972, 2147483648
  %v3280 = vor.u32 1.1754944e-38, %v3279
  %v3281 = vsel %vm3278, %v3280, %v3276
  %v3282 = vmul.f32 1.0, %v3281
  %v3283 = vrcp.pop %v2973
  %v3284 = vmul.f32 %v2973, %v3283
  %v3285 = vsub.f32 1.0, %v3284
  %v3286 = vmul.f32 %v3283, %v3285
  %v3287 = vadd.f32 %v3283, %v3286
  %vm3288 = vweird.f32 %v2973
  %vm3289 = vweird.f32 %v3283
  %vm3290 = vmor %vm3288, %vm3289
  %v3291 = vsel %vm3290, %v3283, %v3287
  %v3292 = vand.u32 2147483647, %v2973
  %vm3293 = vcmp.eq.f32.partialorder %v3292, 8.507059e+37
  %v3294 = vand.u32 %v2973, 2147483648
  %v3295 = vor.u32 1.1754944e-38, %v3294
  %v3296 = vsel %vm3293, %v3295, %v3291
  %v3297 = vmul.f32 1.0, %v3296
  %v3298 = vrcp.pop %v2974
  %v3299 = vmul.f32 %v2974, %v3298
  %v3300 = vsub.f32 1.0, %v3299
  %v3301 = vmul.f32 %v3298, %v3300
  %v3302 = vadd.f32 %v3298, %v3301
  %vm3303 = vweird.f32 %v2974
  %vm3304 = vweird.f32 %v3298
  %vm3305 = vmor %vm3303, %vm3304
  %v3306 = vsel %vm3305, %v3298, %v3302
  %v3307 = vand.u32 2147483647, %v2974
  %vm3308 = vcmp.eq.f32.partialorder %v3307, 8.507059e+37
  %v3309 = vand.u32 %v2974, 2147483648
  %v3310 = vor.u32 1.1754944e-38, %v3309
  %v3311 = vsel %vm3308, %v3310, %v3306
  %v3312 = vmul.f32 1.0, %v3311
  %v3313 = vrcp.pop %v2975
  %v3314 = vmul.f32 %v2975, %v3313
  %v3315 = vsub.f32 1.0, %v3314
  %v3316 = vmul.f32 %v3313, %v3315
  %v3317 = vadd.f32 %v3313, %v3316
  %vm3318 = vweird.f32 %v2975
  %vm3319 = vweird.f32 %v3313
  %vm3320 = vmor %vm3318, %vm3319
  %v3321 = vsel %vm3320, %v3313, %v3317
  %v3322 = vand.u32 2147483647, %v2975
  %vm3323 = vcmp.eq.f32.partialorder %v3322, 8.507059e+37
  %v3324 = vand.u32 %v2975, 2147483648
  %v3325 = vor.u32 1.1754944e-38, %v3324
  %v3326 = vsel %vm3323, %v3325, %v3321
  %v3327 = vmul.f32 1.0, %v3326
  %v3328 = vrcp.pop %v2976
  %v3329 = vmul.f32 %v2976, %v3328
  %v3330 = vsub.f32 1.0, %v3329
  %v3331 = vmul.f32 %v3328, %v3330
  %v3332 = vadd.f32 %v3328, %v3331
  %vm3333 = vweird.f32 %v2976
  %vm3334 = vweird.f32 %v3328
  %vm3335 = vmor %vm3333, %vm3334
  %v3336 = vsel %vm3335, %v3328, %v3332
  %v3337 = vand.u32 2147483647, %v2976
  %vm3338 = vcmp.eq.f32.partialorder %v3337, 8.507059e+37
  %v3339 = vand.u32 %v2976, 2147483648
  %v3340 = vor.u32 1.1754944e-38, %v3339
  %v3341 = vsel %vm3338, %v3340, %v3336
  %v3342 = vmul.f32 1.0, %v3341
  %v3343 = vrcp.pop %v2977
  %v3344 = vmul.f32 %v2977, %v3343
  %v3345 = vsub.f32 1.0, %v3344
  %v3346 = vmul.f32 %v3343, %v3345
  %v3347 = vadd.f32 %v3343, %v3346
  %vm3348 = vweird.f32 %v2977
  %vm3349 = vweird.f32 %v3343
  %vm3350 = vmor %vm3348, %vm3349
  %v3351 = vsel %vm3350, %v3343, %v3347
  %v3352 = vand.u32 2147483647, %v2977
  %vm3353 = vcmp.eq.f32.partialorder %v3352, 8.507059e+37
  %v3354 = vand.u32 %v2977, 2147483648
  %v3355 = vor.u32 1.1754944e-38, %v3354
  %v3356 = vsel %vm3353, %v3355, %v3351
  %v3357 = vmul.f32 1.0, %v3356
  %v3358 = vrcp.pop %v2978
  %v3359 = vmul.f32 %v2978, %v3358
  %v3360 = vsub.f32 1.0, %v3359
  %v3361 = vmul.f32 %v3358, %v3360
  %v3362 = vadd.f32 %v3358, %v3361
  %vm3363 = vweird.f32 %v2978
  %vm3364 = vweird.f32 %v3358
  %vm3365 = vmor %vm3363, %vm3364
  %v3366 = vsel %vm3365, %v3358, %v3362
  %v3367 = vand.u32 2147483647, %v2978
  %vm3368 = vcmp.eq.f32.partialorder %v3367, 8.507059e+37
  %v3369 = vand.u32 %v2978, 2147483648
  %v3370 = vor.u32 1.1754944e-38, %v3369
  %v3371 = vsel %vm3368, %v3370, %v3366
  %v3372 = vmul.f32 1.0, %v3371
  %v3373 = vrcp.pop %v2979
  %v3374 = vmul.f32 %v2979, %v3373
  %v3375 = vsub.f32 1.0, %v3374
  %v3376 = vmul.f32 %v3373, %v3375
  %v3377 = vadd.f32 %v3373, %v3376
  %vm3378 = vweird.f32 %v2979
  %vm3379 = vweird.f32 %v3373
  %vm3380 = vmor %vm3378, %vm3379
  %v3381 = vsel %vm3380, %v3373, %v3377
  %v3382 = vand.u32 2147483647, %v2979
  %vm3383 = vcmp.eq.f32.partialorder %v3382, 8.507059e+37
  %v3384 = vand.u32 %v2979, 2147483648
  %v3385 = vor.u32 1.1754944e-38, %v3384
  %v3386 = vsel %vm3383, %v3385, %v3381
  %v3387 = vmul.f32 1.0, %v3386
  %v3388 = vrcp.pop %v2980
  %v3389 = vmul.f32 %v2980, %v3388
  %v3390 = vsub.f32 1.0, %v3389
  %v3391 = vmul.f32 %v3388, %v3390
  %v3392 = vadd.f32 %v3388, %v3391
  %vm3393 = vweird.f32 %v2980
  %vm3394 = vweird.f32 %v3388
  %vm3395 = vmor %vm3393, %vm3394
  %v3396 = vsel %vm3395, %v3388, %v3392
  %v3397 = vand.u32 2147483647, %v2980
  %vm3398 = vcmp.eq.f32.partialorder %v3397, 8.507059e+37
  %v3399 = vand.u32 %v2980, 2147483648
  %v3400 = vor.u32 1.1754944e-38, %v3399
  %v3401 = vsel %vm3398, %v3400, %v3396
  %v3402 = vmul.f32 1.0, %v3401
  %v3403 = vrcp.pop %v2981
  %v3404 = vmul.f32 %v2981, %v3403
  %v3405 = vsub.f32 1.0, %v3404
  %v3406 = vmul.f32 %v3403, %v3405
  %v3407 = vadd.f32 %v3403, %v3406
  %vm3408 = vweird.f32 %v2981
  %vm3409 = vweird.f32 %v3403
  %vm3410 = vmor %vm3408, %vm3409
  %v3411 = vsel %vm3410, %v3403, %v3407
  %v3412 = vand.u32 2147483647, %v2981
  %vm3413 = vcmp.eq.f32.partialorder %v3412, 8.507059e+37
  %v3414 = vand.u32 %v2981, 2147483648
  %v3415 = vor.u32 1.1754944e-38, %v3414
  %v3416 = vsel %vm3413, %v3415, %v3411
  %v3417 = vmul.f32 1.0, %v3416
  %v3418 = vrcp.pop %v2982
  %v3419 = vmul.f32 %v2982, %v3418
  %v3420 = vsub.f32 1.0, %v3419
  %v3421 = vmul.f32 %v3418, %v3420
  %v3422 = vadd.f32 %v3418, %v3421
  %vm3423 = vweird.f32 %v2982
  %vm3424 = vweird.f32 %v3418
  %vm3425 = vmor %vm3423, %vm3424
  %v3426 = vsel %vm3425, %v3418, %v3422
  %v3427 = vand.u32 2147483647, %v2982
  %vm3428 = vcmp.eq.f32.partialorder %v3427, 8.507059e+37
  %v3429 = vand.u32 %v2982, 2147483648
  %v3430 = vor.u32 1.1754944e-38, %v3429
  %v3431 = vsel %vm3428, %v3430, %v3426
  %v3432 = vmul.f32 1.0, %v3431
  %v3433 = vrcp.pop %v2983
  %v3434 = vmul.f32 %v2983, %v3433
  %v3435 = vsub.f32 1.0, %v3434
  %v3436 = vmul.f32 %v3433, %v3435
  %v3437 = vadd.f32 %v3433, %v3436
  %vm3438 = vweird.f32 %v2983
  %vm3439 = vweird.f32 %v3433
  %vm3440 = vmor %vm3438, %vm3439
  %v3441 = vsel %vm3440, %v3433, %v3437
  %v3442 = vand.u32 2147483647, %v2983
  %vm3443 = vcmp.eq.f32.partialorder %v3442, 8.507059e+37
  %v3444 = vand.u32 %v2983, 2147483648
  %v3445 = vor.u32 1.1754944e-38, %v3444
  %v3446 = vsel %vm3443, %v3445, %v3441
  %v3447 = vmul.f32 1.0, %v3446
  %v3448 = vrcp.pop %v2984
  %v3449 = vmul.f32 %v2984, %v3448
  %v3450 = vsub.f32 1.0, %v3449
  %v3451 = vmul.f32 %v3448, %v3450
  %v3452 = vadd.f32 %v3448, %v3451
  %vm3453 = vweird.f32 %v2984
  %vm3454 = vweird.f32 %v3448
  %vm3455 = vmor %vm3453, %vm3454
  %v3456 = vsel %vm3455, %v3448, %v3452
  %v3457 = vand.u32 2147483647, %v2984
  %vm3458 = vcmp.eq.f32.partialorder %v3457, 8.507059e+37
  %v3459 = vand.u32 %v2984, 2147483648
  %v3460 = vor.u32 1.1754944e-38, %v3459
  %v3461 = vsel %vm3458, %v3460, %v3456
  %v3462 = vmul.f32 1.0, %v3461
  %v3463 = vrcp.pop %v2985
  %v3464 = vmul.f32 %v2985, %v3463
  %v3465 = vsub.f32 1.0, %v3464
  %v3466 = vmul.f32 %v3463, %v3465
  %v3467 = vadd.f32 %v3463, %v3466
  %vm3468 = vweird.f32 %v2985
  %vm3469 = vweird.f32 %v3463
  %vm3470 = vmor %vm3468, %vm3469
  %v3471 = vsel %vm3470, %v3463, %v3467
  %v3472 = vand.u32 2147483647, %v2985
  %vm3473 = vcmp.eq.f32.partialorder %v3472, 8.507059e+37
  %v3474 = vand.u32 %v2985, 2147483648
  %v3475 = vor.u32 1.1754944e-38, %v3474
  %v3476 = vsel %vm3473, %v3475, %v3471
  %v3477 = vmul.f32 1.0, %v3476
  %v3478 = vrcp.pop %v2986
  %v3479 = vmul.f32 %v2986, %v3478
  %v3480 = vsub.f32 1.0, %v3479
  %v3481 = vmul.f32 %v3478, %v3480
  %v3482 = vadd.f32 %v3478, %v3481
  %vm3483 = vweird.f32 %v2986
  %vm3484 = vweird.f32 %v3478
  %vm3485 = vmor %vm3483, %vm3484
  %v3486 = vsel %vm3485, %v3478, %v3482
  %v3487 = vand.u32 2147483647, %v2986
  %vm3488 = vcmp.eq.f32.partialorder %v3487, 8.507059e+37
  %v3489 = vand.u32 %v2986, 2147483648
  %v3490 = vor.u32 1.1754944e-38, %v3489
  %v3491 = vsel %vm3488, %v3490, %v3486
  %v3492 = vmul.f32 1.0, %v3491
  %v3493 = vrcp.pop %v2987
  %v3494 = vmul.f32 %v2987, %v3493
  %v3495 = vsub.f32 1.0, %v3494
  %v3496 = vmul.f32 %v3493, %v3495
  %v3497 = vadd.f32 %v3493, %v3496
  %vm3498 = vweird.f32 %v2987
  %vm3499 = vweird.f32 %v3493
  %vm3500 = vmor %vm3498, %vm3499
  %v3501 = vsel %vm3500, %v3493, %v3497
  %v3502 = vand.u32 2147483647, %v2987
  %vm3503 = vcmp.eq.f32.partialorder %v3502, 8.507059e+37
  %v3504 = vand.u32 %v2987, 2147483648
  %v3505 = vor.u32 1.1754944e-38, %v3504
  %v3506 = vsel %vm3503, %v3505, %v3501
  %v3507 = vmul.f32 1.0, %v3506
  %v3508 = vrcp.pop %v2988
  %v3509 = vmul.f32 %v2988, %v3508
  %v3510 = vsub.f32 1.0, %v3509
  %v3511 = vmul.f32 %v3508, %v3510
  %v3512 = vadd.f32 %v3508, %v3511
  %vm3513 = vweird.f32 %v2988
  %vm3514 = vweird.f32 %v3508
  %vm3515 = vmor %vm3513, %vm3514
  %v3516 = vsel %vm3515, %v3508, %v3512
  %v3517 = vand.u32 2147483647, %v2988
  %vm3518 = vcmp.eq.f32.partialorder %v3517, 8.507059e+37
  %v3519 = vand.u32 %v2988, 2147483648
  %v3520 = vor.u32 1.1754944e-38, %v3519
  %v3521 = vsel %vm3518, %v3520, %v3516
  %v3522 = vmul.f32 1.0, %v3521
  %v3523 = vrcp.pop %v2989
  %v3524 = vmul.f32 %v2989, %v3523
  %v3525 = vsub.f32 1.0, %v3524
  %v3526 = vmul.f32 %v3523, %v3525
  %v3527 = vadd.f32 %v3523, %v3526
  %vm3528 = vweird.f32 %v2989
  %vm3529 = vweird.f32 %v3523
  %vm3530 = vmor %vm3528, %vm3529
  %v3531 = vsel %vm3530, %v3523, %v3527
  %v3532 = vand.u32 2147483647, %v2989
  %vm3533 = vcmp.eq.f32.partialorder %v3532, 8.507059e+37
  %v3534 = vand.u32 %v2989, 2147483648
  %v3535 = vor.u32 1.1754944e-38, %v3534
  %v3536 = vsel %vm3533, %v3535, %v3531
  %v3537 = vmul.f32 1.0, %v3536
  %v3538 = vrcp.pop %v2990
  %v3539 = vmul.f32 %v2990, %v3538
  %v3540 = vsub.f32 1.0, %v3539
  %v3541 = vmul.f32 %v3538, %v3540
  %v3542 = vadd.f32 %v3538, %v3541
  %vm3543 = vweird.f32 %v2990
  %vm3544 = vweird.f32 %v3538
  %vm3545 = vmor %vm3543, %vm3544
  %v3546 = vsel %vm3545, %v3538, %v3542
  %v3547 = vand.u32 2147483647, %v2990
  %vm3548 = vcmp.eq.f32.partialorder %v3547, 8.507059e+37
  %v3549 = vand.u32 %v2990, 2147483648
  %v3550 = vor.u32 1.1754944e-38, %v3549
  %v3551 = vsel %vm3548, %v3550, %v3546
  %v3552 = vmul.f32 1.0, %v3551
  %v3553 = vrcp.pop %v2991
  %v3554 = vmul.f32 %v2991, %v3553
  %v3555 = vsub.f32 1.0, %v3554
  %v3556 = vmul.f32 %v3553, %v3555
  %v3557 = vadd.f32 %v3553, %v3556
  %vm3558 = vweird.f32 %v2991
  %vm3559 = vweird.f32 %v3553
  %vm3560 = vmor %vm3558, %vm3559
  %v3561 = vsel %vm3560, %v3553, %v3557
  %v3562 = vand.u32 2147483647, %v2991
  %vm3563 = vcmp.eq.f32.partialorder %v3562, 8.507059e+37
  %v3564 = vand.u32 %v2991, 2147483648
  %v3565 = vor.u32 1.1754944e-38, %v3564
  %v3566 = vsel %vm3563, %v3565, %v3561
  %v3567 = vmul.f32 1.0, %v3566
  %v3568 = vrcp.pop %v2992
  %v3569 = vmul.f32 %v2992, %v3568
  %v3570 = vsub.f32 1.0, %v3569
  %v3571 = vmul.f32 %v3568, %v3570
  %v3572 = vadd.f32 %v3568, %v3571
  %vm3573 = vweird.f32 %v2992
  %vm3574 = vweird.f32 %v3568
  %vm3575 = vmor %vm3573, %vm3574
  %v3576 = vsel %vm3575, %v3568, %v3572
  %v3577 = vand.u32 2147483647, %v2992
  %vm3578 = vcmp.eq.f32.partialorder %v3577, 8.507059e+37
  %v3579 = vand.u32 %v2992, 2147483648
  %v3580 = vor.u32 1.1754944e-38, %v3579
  %v3581 = vsel %vm3578, %v3580, %v3576
  %v3582 = vmul.f32 1.0, %v3581
  %v3583 = vrcp.pop %v2993
  %v3584 = vmul.f32 %v2993, %v3583
  %v3585 = vsub.f32 1.0, %v3584
  %v3586 = vmul.f32 %v3583, %v3585
  %v3587 = vadd.f32 %v3583, %v3586
  %vm3588 = vweird.f32 %v2993
  %vm3589 = vweird.f32 %v3583
  %vm3590 = vmor %vm3588, %vm3589
  %v3591 = vsel %vm3590, %v3583, %v3587
  %v3592 = vand.u32 2147483647, %v2993
  %vm3593 = vcmp.eq.f32.partialorder %v3592, 8.507059e+37
  %v3594 = vand.u32 %v2993, 2147483648
  %v3595 = vor.u32 1.1754944e-38, %v3594
  %v3596 = vsel %vm3593, %v3595, %v3591
  %v3597 = vmul.f32 1.0, %v3596
  %v3598 = vrcp.pop %v2994
  %v3599 = vmul.f32 %v2994, %v3598
  %v3600 = vsub.f32 1.0, %v3599
  %v3601 = vmul.f32 %v3598, %v3600
  %v3602 = vadd.f32 %v3598, %v3601
  %vm3603 = vweird.f32 %v2994
  %vm3604 = vweird.f32 %v3598
  %vm3605 = vmor %vm3603, %vm3604
  %v3606 = vsel %vm3605, %v3598, %v3602
  %v3607 = vand.u32 2147483647, %v2994
  %vm3608 = vcmp.eq.f32.partialorder %v3607, 8.507059e+37
  %v3609 = vand.u32 %v2994, 2147483648
  %v3610 = vor.u32 1.1754944e-38, %v3609
  %v3611 = vsel %vm3608, %v3610, %v3606
  %v3612 = vmul.f32 1.0, %v3611
  %v3613 = vrcp.pop %v2995
  %v3614 = vmul.f32 %v2995, %v3613
  %v3615 = vsub.f32 1.0, %v3614
  %v3616 = vmul.f32 %v3613, %v3615
  %v3617 = vadd.f32 %v3613, %v3616
  %vm3618 = vweird.f32 %v2995
  %vm3619 = vweird.f32 %v3613
  %vm3620 = vmor %vm3618, %vm3619
  %v3621 = vsel %vm3620, %v3613, %v3617
  %v3622 = vand.u32 2147483647, %v2995
  %vm3623 = vcmp.eq.f32.partialorder %v3622, 8.507059e+37
  %v3624 = vand.u32 %v2995, 2147483648
  %v3625 = vor.u32 1.1754944e-38, %v3624
  %v3626 = vsel %vm3623, %v3625, %v3621
  %v3627 = vmul.f32 1.0, %v3626
  %v3628 = vrcp.pop %v2996
  %v3629 = vmul.f32 %v2996, %v3628
  %v3630 = vsub.f32 1.0, %v3629
  %v3631 = vmul.f32 %v3628, %v3630
  %v3632 = vadd.f32 %v3628, %v3631
  %vm3633 = vweird.f32 %v2996
  %vm3634 = vweird.f32 %v3628
  %vm3635 = vmor %vm3633, %vm3634
  %v3636 = vsel %vm3635, %v3628, %v3632
  %v3637 = vand.u32 2147483647, %v2996
  %vm3638 = vcmp.eq.f32.partialorder %v3637, 8.507059e+37
  %v3639 = vand.u32 %v2996, 2147483648
  %v3640 = vor.u32 1.1754944e-38, %v3639
  %v3641 = vsel %vm3638, %v3640, %v3636
  %v3642 = vmul.f32 1.0, %v3641
  %v3643 = vrcp.pop %v2997
  %v3644 = vmul.f32 %v2997, %v3643
  %v3645 = vsub.f32 1.0, %v3644
  %v3646 = vmul.f32 %v3643, %v3645
  %v3647 = vadd.f32 %v3643, %v3646
  %vm3648 = vweird.f32 %v2997
  %vm3649 = vweird.f32 %v3643
  %vm3650 = vmor %vm3648, %vm3649
  %v3651 = vsel %vm3650, %v3643, %v3647
  %v3652 = vand.u32 2147483647, %v2997
  %vm3653 = vcmp.eq.f32.partialorder %v3652, 8.507059e+37
  %v3654 = vand.u32 %v2997, 2147483648
  %v3655 = vor.u32 1.1754944e-38, %v3654
  %v3656 = vsel %vm3653, %v3655, %v3651
  %v3657 = vmul.f32 1.0, %v3656
  %v3658 = vrcp.pop %v2998
  %v3659 = vmul.f32 %v2998, %v3658
  %v3660 = vsub.f32 1.0, %v3659
  %v3661 = vmul.f32 %v3658, %v3660
  %v3662 = vadd.f32 %v3658, %v3661
  %vm3663 = vweird.f32 %v2998
  %vm3664 = vweird.f32 %v3658
  %vm3665 = vmor %vm3663, %vm3664
  %v3666 = vsel %vm3665, %v3658, %v3662
  %v3667 = vand.u32 2147483647, %v2998
  %vm3668 = vcmp.eq.f32.partialorder %v3667, 8.507059e+37
  %v3669 = vand.u32 %v2998, 2147483648
  %v3670 = vor.u32 1.1754944e-38, %v3669
  %v3671 = vsel %vm3668, %v3670, %v3666
  %v3672 = vmul.f32 1.0, %v3671
  %v3673 = vrcp.pop %v2999
  %v3674 = vmul.f32 %v2999, %v3673
  %v3675 = vsub.f32 1.0, %v3674
  %v3676 = vmul.f32 %v3673, %v3675
  %v3677 = vadd.f32 %v3673, %v3676
  %vm3678 = vweird.f32 %v2999
  %vm3679 = vweird.f32 %v3673
  %vm3680 = vmor %vm3678, %vm3679
  %v3681 = vsel %vm3680, %v3673, %v3677
  %v3682 = vand.u32 2147483647, %v2999
  %vm3683 = vcmp.eq.f32.partialorder %v3682, 8.507059e+37
  %v3684 = vand.u32 %v2999, 2147483648
  %v3685 = vor.u32 1.1754944e-38, %v3684
  %v3686 = vsel %vm3683, %v3685, %v3681
  %v3687 = vmul.f32 1.0, %v3686
  %v3688 = vrcp.pop %v3000
  %v3689 = vmul.f32 %v3000, %v3688
  %v3690 = vsub.f32 1.0, %v3689
  %v3691 = vmul.f32 %v3688, %v3690
  %v3692 = vadd.f32 %v3688, %v3691
  %vm3693 = vweird.f32 %v3000
  %vm3694 = vweird.f32 %v3688
  %vm3695 = vmor %vm3693, %vm3694
  %v3696 = vsel %vm3695, %v3688, %v3692
  %v3697 = vand.u32 2147483647, %v3000
  %vm3698 = vcmp.eq.f32.partialorder %v3697, 8.507059e+37
  %v3699 = vand.u32 %v3000, 2147483648
  %v3700 = vor.u32 1.1754944e-38, %v3699
  %v3701 = vsel %vm3698, %v3700, %v3696
  %v3702 = vmul.f32 1.0, %v3701
  %v3703 = vrcp.pop %v3001
  %v3704 = vmul.f32 %v3001, %v3703
  %v3705 = vsub.f32 1.0, %v3704
  %v3706 = vmul.f32 %v3703, %v3705
  %v3707 = vadd.f32 %v3703, %v3706
  %vm3708 = vweird.f32 %v3001
  %vm3709 = vweird.f32 %v3703
  %vm3710 = vmor %vm3708, %vm3709
  %v3711 = vsel %vm3710, %v3703, %v3707
  %v3712 = vand.u32 2147483647, %v3001
  %vm3713 = vcmp.eq.f32.partialorder %v3712, 8.507059e+37
  %v3714 = vand.u32 %v3001, 2147483648
  %v3715 = vor.u32 1.1754944e-38, %v3714
  %v3716 = vsel %vm3713, %v3715, %v3711
  %v3717 = vmul.f32 1.0, %v3716
  %v3718 = vrcp.pop %v3002
  %v3719 = vmul.f32 %v3002, %v3718
  %v3720 = vsub.f32 1.0, %v3719
  %v3721 = vmul.f32 %v3718, %v3720
  %v3722 = vadd.f32 %v3718, %v3721
  %vm3723 = vweird.f32 %v3002
  %vm3724 = vweird.f32 %v3718
  %vm3725 = vmor %vm3723, %vm3724
  %v3726 = vsel %vm3725, %v3718, %v3722
  %v3727 = vand.u32 2147483647, %v3002
  %vm3728 = vcmp.eq.f32.partialorder %v3727, 8.507059e+37
  %v3729 = vand.u32 %v3002, 2147483648
  %v3730 = vor.u32 1.1754944e-38, %v3729
  %v3731 = vsel %vm3728, %v3730, %v3726
  %v3732 = vmul.f32 1.0, %v3731
  %v3733 = vrcp.pop %v3003
  %v3734 = vmul.f32 %v3003, %v3733
  %v3735 = vsub.f32 1.0, %v3734
  %v3736 = vmul.f32 %v3733, %v3735
  %v3737 = vadd.f32 %v3733, %v3736
  %vm3738 = vweird.f32 %v3003
  %vm3739 = vweird.f32 %v3733
  %vm3740 = vmor %vm3738, %vm3739
  %v3741 = vsel %vm3740, %v3733, %v3737
  %v3742 = vand.u32 2147483647, %v3003
  %vm3743 = vcmp.eq.f32.partialorder %v3742, 8.507059e+37
  %v3744 = vand.u32 %v3003, 2147483648
  %v3745 = vor.u32 1.1754944e-38, %v3744
  %v3746 = vsel %vm3743, %v3745, %v3741
  %v3747 = vmul.f32 1.0, %v3746
  %v3748 = vrcp.pop %v3004
  %v3749 = vmul.f32 %v3004, %v3748
  %v3750 = vsub.f32 1.0, %v3749
  %v3751 = vmul.f32 %v3748, %v3750
  %v3752 = vadd.f32 %v3748, %v3751
  %vm3753 = vweird.f32 %v3004
  %vm3754 = vweird.f32 %v3748
  %vm3755 = vmor %vm3753, %vm3754
  %v3756 = vsel %vm3755, %v3748, %v3752
  %v3757 = vand.u32 2147483647, %v3004
  %vm3758 = vcmp.eq.f32.partialorder %v3757, 8.507059e+37
  %v3759 = vand.u32 %v3004, 2147483648
  %v3760 = vor.u32 1.1754944e-38, %v3759
  %v3761 = vsel %vm3758, %v3760, %v3756
  %v3762 = vmul.f32 1.0, %v3761
  %v3763 = vrcp.pop %v3005
  %v3764 = vmul.f32 %v3005, %v3763
  %v3765 = vsub.f32 1.0, %v3764
  %v3766 = vmul.f32 %v3763, %v3765
  %v3767 = vadd.f32 %v3763, %v3766
  %vm3768 = vweird.f32 %v3005
  %vm3769 = vweird.f32 %v3763
  %vm3770 = vmor %vm3768, %vm3769
  %v3771 = vsel %vm3770, %v3763, %v3767
  %v3772 = vand.u32 2147483647, %v3005
  %vm3773 = vcmp.eq.f32.partialorder %v3772, 8.507059e+37
  %v3774 = vand.u32 %v3005, 2147483648
  %v3775 = vor.u32 1.1754944e-38, %v3774
  %v3776 = vsel %vm3773, %v3775, %v3771
  %v3777 = vmul.f32 1.0, %v3776
  %v3778 = vrcp.pop %v3006
  %v3779 = vmul.f32 %v3006, %v3778
  %v3780 = vsub.f32 1.0, %v3779
  %v3781 = vmul.f32 %v3778, %v3780
  %v3782 = vadd.f32 %v3778, %v3781
  %vm3783 = vweird.f32 %v3006
  %vm3784 = vweird.f32 %v3778
  %vm3785 = vmor %vm3783, %vm3784
  %v3786 = vsel %vm3785, %v3778, %v3782
  %v3787 = vand.u32 2147483647, %v3006
  %vm3788 = vcmp.eq.f32.partialorder %v3787, 8.507059e+37
  %v3789 = vand.u32 %v3006, 2147483648
  %v3790 = vor.u32 1.1754944e-38, %v3789
  %v3791 = vsel %vm3788, %v3790, %v3786
  %v3792 = vmul.f32 1.0, %v3791
  %v3793 = vrcp.pop %v3007
  %v3794 = vmul.f32 %v3007, %v3793
  %v3795 = vsub.f32 1.0, %v3794
  %v3796 = vmul.f32 %v3793, %v3795
  %v3797 = vadd.f32 %v3793, %v3796
  %vm3798 = vweird.f32 %v3007
  %vm3799 = vweird.f32 %v3793
  %vm3800 = vmor %vm3798, %vm3799
  %v3801 = vsel %vm3800, %v3793, %v3797
  %v3802 = vand.u32 2147483647, %v3007
  %vm3803 = vcmp.eq.f32.partialorder %v3802, 8.507059e+37
  %v3804 = vand.u32 %v3007, 2147483648
  %v3805 = vor.u32 1.1754944e-38, %v3804
  %v3806 = vsel %vm3803, %v3805, %v3801
  %v3807 = vmul.f32 1.0, %v3806
  %v3808 = vrcp.pop %v3008
  %v3809 = vmul.f32 %v3008, %v3808
  %v3810 = vsub.f32 1.0, %v3809
  %v3811 = vmul.f32 %v3808, %v3810
  %v3812 = vadd.f32 %v3808, %v3811
  %vm3813 = vweird.f32 %v3008
  %vm3814 = vweird.f32 %v3808
  %vm3815 = vmor %vm3813, %vm3814
  %v3816 = vsel %vm3815, %v3808, %v3812
  %v3817 = vand.u32 2147483647, %v3008
  %vm3818 = vcmp.eq.f32.partialorder %v3817, 8.507059e+37
  %v3819 = vand.u32 %v3008, 2147483648
  %v3820 = vor.u32 1.1754944e-38, %v3819
  %v3821 = vsel %vm3818, %v3820, %v3816
  %v3822 = vmul.f32 1.0, %v3821
  %v3823 = vrcp.pop %v3009
  %v3824 = vmul.f32 %v3009, %v3823
  %v3825 = vsub.f32 1.0, %v3824
  %v3826 = vmul.f32 %v3823, %v3825
  %v3827 = vadd.f32 %v3823, %v3826
  %vm3828 = vweird.f32 %v3009
  %vm3829 = vweird.f32 %v3823
  %vm3830 = vmor %vm3828, %vm3829
  %v3831 = vsel %vm3830, %v3823, %v3827
  %v3832 = vand.u32 2147483647, %v3009
  %vm3833 = vcmp.eq.f32.partialorder %v3832, 8.507059e+37
  %v3834 = vand.u32 %v3009, 2147483648
  %v3835 = vor.u32 1.1754944e-38, %v3834
  %v3836 = vsel %vm3833, %v3835, %v3831
  %v3837 = vmul.f32 1.0, %v3836
  %v3838 = vrcp.pop %v3010
  %v3839 = vmul.f32 %v3010, %v3838
  %v3840 = vsub.f32 1.0, %v3839
  %v3841 = vmul.f32 %v3838, %v3840
  %v3842 = vadd.f32 %v3838, %v3841
  %vm3843 = vweird.f32 %v3010
  %vm3844 = vweird.f32 %v3838
  %vm3845 = vmor %vm3843, %vm3844
  %v3846 = vsel %vm3845, %v3838, %v3842
  %v3847 = vand.u32 2147483647, %v3010
  %vm3848 = vcmp.eq.f32.partialorder %v3847, 8.507059e+37
  %v3849 = vand.u32 %v3010, 2147483648
  %v3850 = vor.u32 1.1754944e-38, %v3849
  %v3851 = vsel %vm3848, %v3850, %v3846
  %v3852 = vmul.f32 1.0, %v3851
  %v3853 = vrcp.pop %v3011
  %v3854 = vmul.f32 %v3011, %v3853
  %v3855 = vsub.f32 1.0, %v3854
  %v3856 = vmul.f32 %v3853, %v3855
  %v3857 = vadd.f32 %v3853, %v3856
  %vm3858 = vweird.f32 %v3011
  %vm3859 = vweird.f32 %v3853
  %vm3860 = vmor %vm3858, %vm3859
  %v3861 = vsel %vm3860, %v3853, %v3857
  %v3862 = vand.u32 2147483647, %v3011
  %vm3863 = vcmp.eq.f32.partialorder %v3862, 8.507059e+37
  %v3864 = vand.u32 %v3011, 2147483648
  %v3865 = vor.u32 1.1754944e-38, %v3864
  %v3866 = vsel %vm3863, %v3865, %v3861
  %v3867 = vmul.f32 1.0, %v3866
  %v3868 = vrcp.pop %v3012
  %v3869 = vmul.f32 %v3012, %v3868
  %v3870 = vsub.f32 1.0, %v3869
  %v3871 = vmul.f32 %v3868, %v3870
  %v3872 = vadd.f32 %v3868, %v3871
  %vm3873 = vweird.f32 %v3012
  %vm3874 = vweird.f32 %v3868
  %vm3875 = vmor %vm3873, %vm3874
  %v3876 = vsel %vm3875, %v3868, %v3872
  %v3877 = vand.u32 2147483647, %v3012
  %vm3878 = vcmp.eq.f32.partialorder %v3877, 8.507059e+37
  %v3879 = vand.u32 %v3012, 2147483648
  %v3880 = vor.u32 1.1754944e-38, %v3879
  %v3881 = vsel %vm3878, %v3880, %v3876
  %v3882 = vmul.f32 1.0, %v3881
  %v3883 = vrcp.pop %v3013
  %v3884 = vmul.f32 %v3013, %v3883
  %v3885 = vsub.f32 1.0, %v3884
  %v3886 = vmul.f32 %v3883, %v3885
  %v3887 = vadd.f32 %v3883, %v3886
  %vm3888 = vweird.f32 %v3013
  %vm3889 = vweird.f32 %v3883
  %vm3890 = vmor %vm3888, %vm3889
  %v3891 = vsel %vm3890, %v3883, %v3887
  %v3892 = vand.u32 2147483647, %v3013
  %vm3893 = vcmp.eq.f32.partialorder %v3892, 8.507059e+37
  %v3894 = vand.u32 %v3013, 2147483648
  %v3895 = vor.u32 1.1754944e-38, %v3894
  %v3896 = vsel %vm3893, %v3895, %v3891
  %v3897 = vmul.f32 1.0, %v3896
  %v3898 = vrcp.pop %v3014
  %v3899 = vmul.f32 %v3014, %v3898
  %v3900 = vsub.f32 1.0, %v3899
  %v3901 = vmul.f32 %v3898, %v3900
  %v3902 = vadd.f32 %v3898, %v3901
  %vm3903 = vweird.f32 %v3014
  %vm3904 = vweird.f32 %v3898
  %vm3905 = vmor %vm3903, %vm3904
  %v3906 = vsel %vm3905, %v3898, %v3902
  %v3907 = vand.u32 2147483647, %v3014
  %vm3908 = vcmp.eq.f32.partialorder %v3907, 8.507059e+37
  %v3909 = vand.u32 %v3014, 2147483648
  %v3910 = vor.u32 1.1754944e-38, %v3909
  %v3911 = vsel %vm3908, %v3910, %v3906
  %v3912 = vmul.f32 1.0, %v3911
  %v3913 = vrcp.pop %v3015
  %v3914 = vmul.f32 %v3015, %v3913
  %v3915 = vsub.f32 1.0, %v3914
  %v3916 = vmul.f32 %v3913, %v3915
  %v3917 = vadd.f32 %v3913, %v3916
  %vm3918 = vweird.f32 %v3015
  %vm3919 = vweird.f32 %v3913
  %vm3920 = vmor %vm3918, %vm3919
  %v3921 = vsel %vm3920, %v3913, %v3917
  %v3922 = vand.u32 2147483647, %v3015
  %vm3923 = vcmp.eq.f32.partialorder %v3922, 8.507059e+37
  %v3924 = vand.u32 %v3015, 2147483648
  %v3925 = vor.u32 1.1754944e-38, %v3924
  %v3926 = vsel %vm3923, %v3925, %v3921
  %v3927 = vmul.f32 1.0, %v3926
  %v3928 = vrcp.pop %v3016
  %v3929 = vmul.f32 %v3016, %v3928
  %v3930 = vsub.f32 1.0, %v3929
  %v3931 = vmul.f32 %v3928, %v3930
  %v3932 = vadd.f32 %v3928, %v3931
  %vm3933 = vweird.f32 %v3016
  %vm3934 = vweird.f32 %v3928
  %vm3935 = vmor %vm3933, %vm3934
  %v3936 = vsel %vm3935, %v3928, %v3932
  %v3937 = vand.u32 2147483647, %v3016
  %vm3938 = vcmp.eq.f32.partialorder %v3937, 8.507059e+37
  %v3939 = vand.u32 %v3016, 2147483648
  %v3940 = vor.u32 1.1754944e-38, %v3939
  %v3941 = vsel %vm3938, %v3940, %v3936
  %v3942 = vmul.f32 1.0, %v3941
  %v3943 = vrcp.pop %v3017
  %v3944 = vmul.f32 %v3017, %v3943
  %v3945 = vsub.f32 1.0, %v3944
  %v3946 = vmul.f32 %v3943, %v3945
  %v3947 = vadd.f32 %v3943, %v3946
  %vm3948 = vweird.f32 %v3017
  %vm3949 = vweird.f32 %v3943
  %vm3950 = vmor %vm3948, %vm3949
  %v3951 = vsel %vm3950, %v3943, %v3947
  %v3952 = vand.u32 2147483647, %v3017
  %vm3953 = vcmp.eq.f32.partialorder %v3952, 8.507059e+37
  %v3954 = vand.u32 %v3017, 2147483648
  %v3955 = vor.u32 1.1754944e-38, %v3954
  %v3956 = vsel %vm3953, %v3955, %v3951
  %v3957 = vmul.f32 1.0, %v3956
  %v3958 = vrcp.pop %v3018
  %v3959 = vmul.f32 %v3018, %v3958
  %v3960 = vsub.f32 1.0, %v3959
  %v3961 = vmul.f32 %v3958, %v3960
  %v3962 = vadd.f32 %v3958, %v3961
  %vm3963 = vweird.f32 %v3018
  %vm3964 = vweird.f32 %v3958
  %vm3965 = vmor %vm3963, %vm3964
  %v3966 = vsel %vm3965, %v3958, %v3962
  %v3967 = vand.u32 2147483647, %v3018
  %vm3968 = vcmp.eq.f32.partialorder %v3967, 8.507059e+37
  %v3969 = vand.u32 %v3018, 2147483648
  %v3970 = vor.u32 1.1754944e-38, %v3969
  %v3971 = vsel %vm3968, %v3970, %v3966
  %v3972 = vmul.f32 1.0, %v3971
  %v3973 = vrcp.pop %v3019
  %v3974 = vmul.f32 %v3019, %v3973
  %v3975 = vsub.f32 1.0, %v3974
  %v3976 = vmul.f32 %v3973, %v3975
  %v3977 = vadd.f32 %v3973, %v3976
  %vm3978 = vweird.f32 %v3019
  %vm3979 = vweird.f32 %v3973
  %vm3980 = vmor %vm3978, %vm3979
  %v3981 = vsel %vm3980, %v3973, %v3977
  %v3982 = vand.u32 2147483647, %v3019
  %vm3983 = vcmp.eq.f32.partialorder %v3982, 8.507059e+37
  %v3984 = vand.u32 %v3019, 2147483648
  %v3985 = vor.u32 1.1754944e-38, %v3984
  %v3986 = vsel %vm3983, %v3985, %v3981
  %v3987 = vmul.f32 1.0, %v3986
  %v3988 = vrcp.pop %v3020
  %v3989 = vmul.f32 %v3020, %v3988
  %v3990 = vsub.f32 1.0, %v3989
  %v3991 = vmul.f32 %v3988, %v3990
  %v3992 = vadd.f32 %v3988, %v3991
  %vm3993 = vweird.f32 %v3020
  %vm3994 = vweird.f32 %v3988
  %vm3995 = vmor %vm3993, %vm3994
  %v3996 = vsel %vm3995, %v3988, %v3992
  %v3997 = vand.u32 2147483647, %v3020
  %vm3998 = vcmp.eq.f32.partialorder %v3997, 8.507059e+37
  %v3999 = vand.u32 %v3020, 2147483648
  %v4000 = vor.u32 1.1754944e-38, %v3999
  %v4001 = vsel %vm3998, %v4000, %v3996
  %v4002 = vmul.f32 1.0, %v4001
  %v4003 = vrcp.pop %v3021
  %v4004 = vmul.f32 %v3021, %v4003
  %v4005 = vsub.f32 1.0, %v4004
  %v4006 = vmul.f32 %v4003, %v4005
  %v4007 = vadd.f32 %v4003, %v4006
  %vm4008 = vweird.f32 %v3021
  %vm4009 = vweird.f32 %v4003
  %vm4010 = vmor %vm4008, %vm4009
  %v4011 = vsel %vm4010, %v4003, %v4007
  %v4012 = vand.u32 2147483647, %v3021
  %vm4013 = vcmp.eq.f32.partialorder %v4012, 8.507059e+37
  %v4014 = vand.u32 %v3021, 2147483648
  %v4015 = vor.u32 1.1754944e-38, %v4014
  %v4016 = vsel %vm4013, %v4015, %v4011
  %v4017 = vmul.f32 1.0, %v4016
  %v4018 = vrcp.pop %v3022
  %v4019 = vmul.f32 %v3022, %v4018
  %v4020 = vsub.f32 1.0, %v4019
  %v4021 = vmul.f32 %v4018, %v4020
  %v4022 = vadd.f32 %v4018, %v4021
  %vm4023 = vweird.f32 %v3022
  %vm4024 = vweird.f32 %v4018
  %vm4025 = vmor %vm4023, %vm4024
  %v4026 = vsel %vm4025, %v4018, %v4022
  %v4027 = vand.u32 2147483647, %v3022
  %vm4028 = vcmp.eq.f32.partialorder %v4027, 8.507059e+37
  %v4029 = vand.u32 %v3022, 2147483648
  %v4030 = vor.u32 1.1754944e-38, %v4029
  %v4031 = vsel %vm4028, %v4030, %v4026
  %v4032 = vmul.f32 1.0, %v4031
  %v4033 = vrcp.pop %v3023
  %v4034 = vmul.f32 %v3023, %v4033
  %v4035 = vsub.f32 1.0, %v4034
  %v4036 = vmul.f32 %v4033, %v4035
  %v4037 = vadd.f32 %v4033, %v4036
  %vm4038 = vweird.f32 %v3023
  %vm4039 = vweird.f32 %v4033
  %vm4040 = vmor %vm4038, %vm4039
  %v4041 = vsel %vm4040, %v4033, %v4037
  %v4042 = vand.u32 2147483647, %v3023
  %vm4043 = vcmp.eq.f32.partialorder %v4042, 8.507059e+37
  %v4044 = vand.u32 %v3023, 2147483648
  %v4045 = vor.u32 1.1754944e-38, %v4044
  %v4046 = vsel %vm4043, %v4045, %v4041
  %v4047 = vmul.f32 1.0, %v4046
  %v4048 = vrcp.pop %v3024
  %v4049 = vmul.f32 %v3024, %v4048
  %v4050 = vsub.f32 1.0, %v4049
  %v4051 = vmul.f32 %v4048, %v4050
  %v4052 = vadd.f32 %v4048, %v4051
  %vm4053 = vweird.f32 %v3024
  %vm4054 = vweird.f32 %v4048
  %vm4055 = vmor %vm4053, %vm4054
  %v4056 = vsel %vm4055, %v4048, %v4052
  %v4057 = vand.u32 2147483647, %v3024
  %vm4058 = vcmp.eq.f32.partialorder %v4057, 8.507059e+37
  %v4059 = vand.u32 %v3024, 2147483648
  %v4060 = vor.u32 1.1754944e-38, %v4059
  %v4061 = vsel %vm4058, %v4060, %v4056
  %v4062 = vmul.f32 1.0, %v4061
  %v4063 = vrcp.pop %v3025
  %v4064 = vmul.f32 %v3025, %v4063
  %v4065 = vsub.f32 1.0, %v4064
  %v4066 = vmul.f32 %v4063, %v4065
  %v4067 = vadd.f32 %v4063, %v4066
  %vm4068 = vweird.f32 %v3025
  %vm4069 = vweird.f32 %v4063
  %vm4070 = vmor %vm4068, %vm4069
  %v4071 = vsel %vm4070, %v4063, %v4067
  %v4072 = vand.u32 2147483647, %v3025
  %vm4073 = vcmp.eq.f32.partialorder %v4072, 8.507059e+37
  %v4074 = vand.u32 %v3025, 2147483648
  %v4075 = vor.u32 1.1754944e-38, %v4074
  %v4076 = vsel %vm4073, %v4075, %v4071
  %v4077 = vmul.f32 1.0, %v4076
  %v4078 = vrcp.pop %v3026
  %v4079 = vmul.f32 %v3026, %v4078
  %v4080 = vsub.f32 1.0, %v4079
  %v4081 = vmul.f32 %v4078, %v4080
  %v4082 = vadd.f32 %v4078, %v4081
  %vm4083 = vweird.f32 %v3026
  %vm4084 = vweird.f32 %v4078
  %vm4085 = vmor %vm4083, %vm4084
  %v4086 = vsel %vm4085, %v4078, %v4082
  %v4087 = vand.u32 2147483647, %v3026
  %vm4088 = vcmp.eq.f32.partialorder %v4087, 8.507059e+37
  %v4089 = vand.u32 %v3026, 2147483648
  %v4090 = vor.u32 1.1754944e-38, %v4089
  %v4091 = vsel %vm4088, %v4090, %v4086
  %v4092 = vmul.f32 1.0, %v4091
  %v4093 = vrcp.pop %v3027
  %v4094 = vmul.f32 %v3027, %v4093
  %v4095 = vsub.f32 1.0, %v4094
  %v4096 = vmul.f32 %v4093, %v4095
  %v4097 = vadd.f32 %v4093, %v4096
  %vm4098 = vweird.f32 %v3027
  %vm4099 = vweird.f32 %v4093
  %vm4100 = vmor %vm4098, %vm4099
  %v4101 = vsel %vm4100, %v4093, %v4097
  %v4102 = vand.u32 2147483647, %v3027
  %vm4103 = vcmp.eq.f32.partialorder %v4102, 8.507059e+37
  %v4104 = vand.u32 %v3027, 2147483648
  %v4105 = vor.u32 1.1754944e-38, %v4104
  %v4106 = vsel %vm4103, %v4105, %v4101
  %v4107 = vmul.f32 1.0, %v4106
  %v4108 = vrcp.pop %v3028
  %v4109 = vmul.f32 %v3028, %v4108
  %v4110 = vsub.f32 1.0, %v4109
  %v4111 = vmul.f32 %v4108, %v4110
  %v4112 = vadd.f32 %v4108, %v4111
  %vm4113 = vweird.f32 %v3028
  %vm4114 = vweird.f32 %v4108
  %vm4115 = vmor %vm4113, %vm4114
  %v4116 = vsel %vm4115, %v4108, %v4112
  %v4117 = vand.u32 2147483647, %v3028
  %vm4118 = vcmp.eq.f32.partialorder %v4117, 8.507059e+37
  %v4119 = vand.u32 %v3028, 2147483648
  %v4120 = vor.u32 1.1754944e-38, %v4119
  %v4121 = vsel %vm4118, %v4120, %v4116
  %v4122 = vmul.f32 1.0, %v4121
  %v4123 = vrcp.pop %v3029
  %v4124 = vmul.f32 %v3029, %v4123
  %v4125 = vsub.f32 1.0, %v4124
  %v4126 = vmul.f32 %v4123, %v4125
  %v4127 = vadd.f32 %v4123, %v4126
  %vm4128 = vweird.f32 %v3029
  %vm4129 = vweird.f32 %v4123
  %vm4130 = vmor %vm4128, %vm4129
  %v4131 = vsel %vm4130, %v4123, %v4127
  %v4132 = vand.u32 2147483647, %v3029
  %vm4133 = vcmp.eq.f32.partialorder %v4132, 8.507059e+37
  %v4134 = vand.u32 %v3029, 2147483648
  %v4135 = vor.u32 1.1754944e-38, %v4134
  %v4136 = vsel %vm4133, %v4135, %v4131
  %v4137 = vmul.f32 1.0, %v4136
  %v4138 = vrcp.pop %v3030
  %v4139 = vmul.f32 %v3030, %v4138
  %v4140 = vsub.f32 1.0, %v4139
  %v4141 = vmul.f32 %v4138, %v4140
  %v4142 = vadd.f32 %v4138, %v4141
  %vm4143 = vweird.f32 %v3030
  %vm4144 = vweird.f32 %v4138
  %vm4145 = vmor %vm4143, %vm4144
  %v4146 = vsel %vm4145, %v4138, %v4142
  %v4147 = vand.u32 2147483647, %v3030
  %vm4148 = vcmp.eq.f32.partialorder %v4147, 8.507059e+37
  %v4149 = vand.u32 %v3030, 2147483648
  %v4150 = vor.u32 1.1754944e-38, %v4149
  %v4151 = vsel %vm4148, %v4150, %v4146
  %v4152 = vmul.f32 1.0, %v4151
  %v4153 = vrcp.pop %v3031
  %v4154 = vmul.f32 %v3031, %v4153
  %v4155 = vsub.f32 1.0, %v4154
  %v4156 = vmul.f32 %v4153, %v4155
  %v4157 = vadd.f32 %v4153, %v4156
  %vm4158 = vweird.f32 %v3031
  %vm4159 = vweird.f32 %v4153
  %vm4160 = vmor %vm4158, %vm4159
  %v4161 = vsel %vm4160, %v4153, %v4157
  %v4162 = vand.u32 2147483647, %v3031
  %vm4163 = vcmp.eq.f32.partialorder %v4162, 8.507059e+37
  %v4164 = vand.u32 %v3031, 2147483648
  %v4165 = vor.u32 1.1754944e-38, %v4164
  %v4166 = vsel %vm4163, %v4165, %v4161
  %v4167 = vmul.f32 1.0, %v4166
  %v4168 = vrcp.pop %v3032
  %v4169 = vmul.f32 %v3032, %v4168
  %v4170 = vsub.f32 1.0, %v4169
  %v4171 = vmul.f32 %v4168, %v4170
  %v4172 = vadd.f32 %v4168, %v4171
  %vm4173 = vweird.f32 %v3032
  %vm4174 = vweird.f32 %v4168
  %vm4175 = vmor %vm4173, %vm4174
  %v4176 = vsel %vm4175, %v4168, %v4172
  %v4177 = vand.u32 2147483647, %v3032
  %vm4178 = vcmp.eq.f32.partialorder %v4177, 8.507059e+37
  %v4179 = vand.u32 %v3032, 2147483648
  %v4180 = vor.u32 1.1754944e-38, %v4179
  %v4181 = vsel %vm4178, %v4180, %v4176
  %v4182 = vmul.f32 1.0, %v4181
  %v4183 = vrcp.pop %v3033
  %v4184 = vmul.f32 %v3033, %v4183
  %v4185 = vsub.f32 1.0, %v4184
  %v4186 = vmul.f32 %v4183, %v4185
  %v4187 = vadd.f32 %v4183, %v4186
  %vm4188 = vweird.f32 %v3033
  %vm4189 = vweird.f32 %v4183
  %vm4190 = vmor %vm4188, %vm4189
  %v4191 = vsel %vm4190, %v4183, %v4187
  %v4192 = vand.u32 2147483647, %v3033
  %vm4193 = vcmp.eq.f32.partialorder %v4192, 8.507059e+37
  %v4194 = vand.u32 %v3033, 2147483648
  %v4195 = vor.u32 1.1754944e-38, %v4194
  %v4196 = vsel %vm4193, %v4195, %v4191
  %v4197 = vmul.f32 1.0, %v4196
  %v4198 = vrcp.pop %v3034
  %v4199 = vmul.f32 %v3034, %v4198
  %v4200 = vsub.f32 1.0, %v4199
  %v4201 = vmul.f32 %v4198, %v4200
  %v4202 = vadd.f32 %v4198, %v4201
  %vm4203 = vweird.f32 %v3034
  %vm4204 = vweird.f32 %v4198
  %vm4205 = vmor %vm4203, %vm4204
  %v4206 = vsel %vm4205, %v4198, %v4202
  %v4207 = vand.u32 2147483647, %v3034
  %vm4208 = vcmp.eq.f32.partialorder %v4207, 8.507059e+37
  %v4209 = vand.u32 %v3034, 2147483648
  %v4210 = vor.u32 1.1754944e-38, %v4209
  %v4211 = vsel %vm4208, %v4210, %v4206
  %v4212 = vmul.f32 1.0, %v4211
  %v4213 = vrcp.pop %v3035
  %v4214 = vmul.f32 %v3035, %v4213
  %v4215 = vsub.f32 1.0, %v4214
  %v4216 = vmul.f32 %v4213, %v4215
  %v4217 = vadd.f32 %v4213, %v4216
  %vm4218 = vweird.f32 %v3035
  %vm4219 = vweird.f32 %v4213
  %vm4220 = vmor %vm4218, %vm4219
  %v4221 = vsel %vm4220, %v4213, %v4217
  %v4222 = vand.u32 2147483647, %v3035
  %vm4223 = vcmp.eq.f32.partialorder %v4222, 8.507059e+37
  %v4224 = vand.u32 %v3035, 2147483648
  %v4225 = vor.u32 1.1754944e-38, %v4224
  %v4226 = vsel %vm4223, %v4225, %v4221
  %v4227 = vmul.f32 1.0, %v4226
  %v4228 = vrcp.pop %v3036
  %v4229 = vmul.f32 %v3036, %v4228
  %v4230 = vsub.f32 1.0, %v4229
  %v4231 = vmul.f32 %v4228, %v4230
  %v4232 = vadd.f32 %v4228, %v4231
  %vm4233 = vweird.f32 %v3036
  %vm4234 = vweird.f32 %v4228
  %vm4235 = vmor %vm4233, %vm4234
  %v4236 = vsel %vm4235, %v4228, %v4232
  %v4237 = vand.u32 2147483647, %v3036
  %vm4238 = vcmp.eq.f32.partialorder %v4237, 8.507059e+37
  %v4239 = vand.u32 %v3036, 2147483648
  %v4240 = vor.u32 1.1754944e-38, %v4239
  %v4241 = vsel %vm4238, %v4240, %v4236
  %v4242 = vmul.f32 1.0, %v4241
  %v4243 = vrcp.pop %v3037
  %v4244 = vmul.f32 %v3037, %v4243
  %v4245 = vsub.f32 1.0, %v4244
  %v4246 = vmul.f32 %v4243, %v4245
  %v4247 = vadd.f32 %v4243, %v4246
  %vm4248 = vweird.f32 %v3037
  %vm4249 = vweird.f32 %v4243
  %vm4250 = vmor %vm4248, %vm4249
  %v4251 = vsel %vm4250, %v4243, %v4247
  %v4252 = vand.u32 2147483647, %v3037
  %vm4253 = vcmp.eq.f32.partialorder %v4252, 8.507059e+37
  %v4254 = vand.u32 %v3037, 2147483648
  %v4255 = vor.u32 1.1754944e-38, %v4254
  %v4256 = vsel %vm4253, %v4255, %v4251
  %v4257 = vmul.f32 1.0, %v4256
  %v4258 = vrcp.pop %v3038
  %v4259 = vmul.f32 %v3038, %v4258
  %v4260 = vsub.f32 1.0, %v4259
  %v4261 = vmul.f32 %v4258, %v4260
  %v4262 = vadd.f32 %v4258, %v4261
  %vm4263 = vweird.f32 %v3038
  %vm4264 = vweird.f32 %v4258
  %vm4265 = vmor %vm4263, %vm4264
  %v4266 = vsel %vm4265, %v4258, %v4262
  %v4267 = vand.u32 2147483647, %v3038
  %vm4268 = vcmp.eq.f32.partialorder %v4267, 8.507059e+37
  %v4269 = vand.u32 %v3038, 2147483648
  %v4270 = vor.u32 1.1754944e-38, %v4269
  %v4271 = vsel %vm4268, %v4270, %v4266
  %v4272 = vmul.f32 1.0, %v4271
  %v4273 = vrcp.pop %v3039
  %v4274 = vmul.f32 %v3039, %v4273
  %v4275 = vsub.f32 1.0, %v4274
  %v4276 = vmul.f32 %v4273, %v4275
  %v4277 = vadd.f32 %v4273, %v4276
  %vm4278 = vweird.f32 %v3039
  %vm4279 = vweird.f32 %v4273
  %vm4280 = vmor %vm4278, %vm4279
  %v4281 = vsel %vm4280, %v4273, %v4277
  %v4282 = vand.u32 2147483647, %v3039
  %vm4283 = vcmp.eq.f32.partialorder %v4282, 8.507059e+37
  %v4284 = vand.u32 %v3039, 2147483648
  %v4285 = vor.u32 1.1754944e-38, %v4284
  %v4286 = vsel %vm4283, %v4285, %v4281
  %v4287 = vmul.f32 1.0, %v4286
  %v4288 = vrcp.pop %v3040
  %v4289 = vmul.f32 %v3040, %v4288
  %v4290 = vsub.f32 1.0, %v4289
  %v4291 = vmul.f32 %v4288, %v4290
  %v4292 = vadd.f32 %v4288, %v4291
  %vm4293 = vweird.f32 %v3040
  %vm4294 = vweird.f32 %v4288
  %vm4295 = vmor %vm4293, %vm4294
  %v4296 = vsel %vm4295, %v4288, %v4292
  %v4297 = vand.u32 2147483647, %v3040
  %vm4298 = vcmp.eq.f32.partialorder %v4297, 8.507059e+37
  %v4299 = vand.u32 %v3040, 2147483648
  %v4300 = vor.u32 1.1754944e-38, %v4299
  %v4301 = vsel %vm4298, %v4300, %v4296
  %v4302 = vmul.f32 1.0, %v4301
  %v4303 = vrcp.pop %v3041
  %v4304 = vmul.f32 %v3041, %v4303
  %v4305 = vsub.f32 1.0, %v4304
  %v4306 = vmul.f32 %v4303, %v4305
  %v4307 = vadd.f32 %v4303, %v4306
  %vm4308 = vweird.f32 %v3041
  %vm4309 = vweird.f32 %v4303
  %vm4310 = vmor %vm4308, %vm4309
  %v4311 = vsel %vm4310, %v4303, %v4307
  %v4312 = vand.u32 2147483647, %v3041
  %vm4313 = vcmp.eq.f32.partialorder %v4312, 8.507059e+37
  %v4314 = vand.u32 %v3041, 2147483648
  %v4315 = vor.u32 1.1754944e-38, %v4314
  %v4316 = vsel %vm4313, %v4315, %v4311
  %v4317 = vmul.f32 1.0, %v4316
  %v4318 = vrcp.pop %v3042
  %v4319 = vmul.f32 %v3042, %v4318
  %v4320 = vsub.f32 1.0, %v4319
  %v4321 = vmul.f32 %v4318, %v4320
  %v4322 = vadd.f32 %v4318, %v4321
  %vm4323 = vweird.f32 %v3042
  %vm4324 = vweird.f32 %v4318
  %vm4325 = vmor %vm4323, %vm4324
  %v4326 = vsel %vm4325, %v4318, %v4322
  %v4327 = vand.u32 2147483647, %v3042
  %vm4328 = vcmp.eq.f32.partialorder %v4327, 8.507059e+37
  %v4329 = vand.u32 %v3042, 2147483648
  %v4330 = vor.u32 1.1754944e-38, %v4329
  %v4331 = vsel %vm4328, %v4330, %v4326
  %v4332 = vmul.f32 1.0, %v4331
  %v4333 = vrcp.pop %v3043
  %v4334 = vmul.f32 %v3043, %v4333
  %v4335 = vsub.f32 1.0, %v4334
  %v4336 = vmul.f32 %v4333, %v4335
  %v4337 = vadd.f32 %v4333, %v4336
  %vm4338 = vweird.f32 %v3043
  %vm4339 = vweird.f32 %v4333
  %vm4340 = vmor %vm4338, %vm4339
  %v4341 = vsel %vm4340, %v4333, %v4337
  %v4342 = vand.u32 2147483647, %v3043
  %vm4343 = vcmp.eq.f32.partialorder %v4342, 8.507059e+37
  %v4344 = vand.u32 %v3043, 2147483648
  %v4345 = vor.u32 1.1754944e-38, %v4344
  %v4346 = vsel %vm4343, %v4345, %v4341
  %v4347 = vmul.f32 1.0, %v4346
  %v4348 = vrcp.pop %v3044
  %v4349 = vmul.f32 %v3044, %v4348
  %v4350 = vsub.f32 1.0, %v4349
  %v4351 = vmul.f32 %v4348, %v4350
  %v4352 = vadd.f32 %v4348, %v4351
  %vm4353 = vweird.f32 %v3044
  %vm4354 = vweird.f32 %v4348
  %vm4355 = vmor %vm4353, %vm4354
  %v4356 = vsel %vm4355, %v4348, %v4352
  %v4357 = vand.u32 2147483647, %v3044
  %vm4358 = vcmp.eq.f32.partialorder %v4357, 8.507059e+37
  %v4359 = vand.u32 %v3044, 2147483648
  %v4360 = vor.u32 1.1754944e-38, %v4359
  %v4361 = vsel %vm4358, %v4360, %v4356
  %v4362 = vmul.f32 1.0, %v4361
  %v4363 = vrcp.pop %v3045
  %v4364 = vmul.f32 %v3045, %v4363
  %v4365 = vsub.f32 1.0, %v4364
  %v4366 = vmul.f32 %v4363, %v4365
  %v4367 = vadd.f32 %v4363, %v4366
  %vm4368 = vweird.f32 %v3045
  %vm4369 = vweird.f32 %v4363
  %vm4370 = vmor %vm4368, %vm4369
  %v4371 = vsel %vm4370, %v4363, %v4367
  %v4372 = vand.u32 2147483647, %v3045
  %vm4373 = vcmp.eq.f32.partialorder %v4372, 8.507059e+37
  %v4374 = vand.u32 %v3045, 2147483648
  %v4375 = vor.u32 1.1754944e-38, %v4374
  %v4376 = vsel %vm4373, %v4375, %v4371
  %v4377 = vmul.f32 1.0, %v4376
  %v4378 = vrcp.pop %v3046
  %v4379 = vmul.f32 %v3046, %v4378
  %v4380 = vsub.f32 1.0, %v4379
  %v4381 = vmul.f32 %v4378, %v4380
  %v4382 = vadd.f32 %v4378, %v4381
  %vm4383 = vweird.f32 %v3046
  %vm4384 = vweird.f32 %v4378
  %vm4385 = vmor %vm4383, %vm4384
  %v4386 = vsel %vm4385, %v4378, %v4382
  %v4387 = vand.u32 2147483647, %v3046
  %vm4388 = vcmp.eq.f32.partialorder %v4387, 8.507059e+37
  %v4389 = vand.u32 %v3046, 2147483648
  %v4390 = vor.u32 1.1754944e-38, %v4389
  %v4391 = vsel %vm4388, %v4390, %v4386
  %v4392 = vmul.f32 1.0, %v4391
  %v4393 = vrcp.pop %v3047
  %v4394 = vmul.f32 %v3047, %v4393
  %v4395 = vsub.f32 1.0, %v4394
  %v4396 = vmul.f32 %v4393, %v4395
  %v4397 = vadd.f32 %v4393, %v4396
  %vm4398 = vweird.f32 %v3047
  %vm4399 = vweird.f32 %v4393
  %vm4400 = vmor %vm4398, %vm4399
  %v4401 = vsel %vm4400, %v4393, %v4397
  %v4402 = vand.u32 2147483647, %v3047
  %vm4403 = vcmp.eq.f32.partialorder %v4402, 8.507059e+37
  %v4404 = vand.u32 %v3047, 2147483648
  %v4405 = vor.u32 1.1754944e-38, %v4404
  %v4406 = vsel %vm4403, %v4405, %v4401
  %v4407 = vmul.f32 1.0, %v4406
  %v4408 = vrcp.pop %v3048
  %v4409 = vmul.f32 %v3048, %v4408
  %v4410 = vsub.f32 1.0, %v4409
  %v4411 = vmul.f32 %v4408, %v4410
  %v4412 = vadd.f32 %v4408, %v4411
  %vm4413 = vweird.f32 %v3048
  %vm4414 = vweird.f32 %v4408
  %vm4415 = vmor %vm4413, %vm4414
  %v4416 = vsel %vm4415, %v4408, %v4412
  %v4417 = vand.u32 2147483647, %v3048
  %vm4418 = vcmp.eq.f32.partialorder %v4417, 8.507059e+37
  %v4419 = vand.u32 %v3048, 2147483648
  %v4420 = vor.u32 1.1754944e-38, %v4419
  %v4421 = vsel %vm4418, %v4420, %v4416
  %v4422 = vmul.f32 1.0, %v4421
  %v4423 = vrcp.pop %v3049
  %v4424 = vmul.f32 %v3049, %v4423
  %v4425 = vsub.f32 1.0, %v4424
  %v4426 = vmul.f32 %v4423, %v4425
  %v4427 = vadd.f32 %v4423, %v4426
  %vm4428 = vweird.f32 %v3049
  %vm4429 = vweird.f32 %v4423
  %vm4430 = vmor %vm4428, %vm4429
  %v4431 = vsel %vm4430, %v4423, %v4427
  %v4432 = vand.u32 2147483647, %v3049
  %vm4433 = vcmp.eq.f32.partialorder %v4432, 8.507059e+37
  %v4434 = vand.u32 %v3049, 2147483648
  %v4435 = vor.u32 1.1754944e-38, %v4434
  %v4436 = vsel %vm4433, %v4435, %v4431
  %v4437 = vmul.f32 1.0, %v4436
  %v4438 = vrcp.pop %v3050
  %v4439 = vmul.f32 %v3050, %v4438
  %v4440 = vsub.f32 1.0, %v4439
  %v4441 = vmul.f32 %v4438, %v4440
  %v4442 = vadd.f32 %v4438, %v4441
  %vm4443 = vweird.f32 %v3050
  %vm4444 = vweird.f32 %v4438
  %vm4445 = vmor %vm4443, %vm4444
  %v4446 = vsel %vm4445, %v4438, %v4442
  %v4447 = vand.u32 2147483647, %v3050
  %vm4448 = vcmp.eq.f32.partialorder %v4447, 8.507059e+37
  %v4449 = vand.u32 %v3050, 2147483648
  %v4450 = vor.u32 1.1754944e-38, %v4449
  %v4451 = vsel %vm4448, %v4450, %v4446
  %v4452 = vmul.f32 1.0, %v4451
  %v4453 = vrcp.pop %v3051
  %v4454 = vmul.f32 %v3051, %v4453
  %v4455 = vsub.f32 1.0, %v4454
  %v4456 = vmul.f32 %v4453, %v4455
  %v4457 = vadd.f32 %v4453, %v4456
  %vm4458 = vweird.f32 %v3051
  %vm4459 = vweird.f32 %v4453
  %vm4460 = vmor %vm4458, %vm4459
  %v4461 = vsel %vm4460, %v4453, %v4457
  %v4462 = vand.u32 2147483647, %v3051
  %vm4463 = vcmp.eq.f32.partialorder %v4462, 8.507059e+37
  %v4464 = vand.u32 %v3051, 2147483648
  %v4465 = vor.u32 1.1754944e-38, %v4464
  %v4466 = vsel %vm4463, %v4465, %v4461
  %v4467 = vmul.f32 1.0, %v4466
  %v4468 = vrcp.pop %v3052
  %v4469 = vmul.f32 %v3052, %v4468
  %v4470 = vsub.f32 1.0, %v4469
  %v4471 = vmul.f32 %v4468, %v4470
  %v4472 = vadd.f32 %v4468, %v4471
  %vm4473 = vweird.f32 %v3052
  %vm4474 = vweird.f32 %v4468
  %vm4475 = vmor %vm4473, %vm4474
  %v4476 = vsel %vm4475, %v4468, %v4472
  %v4477 = vand.u32 2147483647, %v3052
  %vm4478 = vcmp.eq.f32.partialorder %v4477, 8.507059e+37
  %v4479 = vand.u32 %v3052, 2147483648
  %v4480 = vor.u32 1.1754944e-38, %v4479
  %v4481 = vsel %vm4478, %v4480, %v4476
  %v4482 = vmul.f32 1.0, %v4481
  %v4483 = vrcp.pop %v3053
  %v4484 = vmul.f32 %v3053, %v4483
  %v4485 = vsub.f32 1.0, %v4484
  %v4486 = vmul.f32 %v4483, %v4485
  %v4487 = vadd.f32 %v4483, %v4486
  %vm4488 = vweird.f32 %v3053
  %vm4489 = vweird.f32 %v4483
  %vm4490 = vmor %vm4488, %vm4489
  %v4491 = vsel %vm4490, %v4483, %v4487
  %v4492 = vand.u32 2147483647, %v3053
  %vm4493 = vcmp.eq.f32.partialorder %v4492, 8.507059e+37
  %v4494 = vand.u32 %v3053, 2147483648
  %v4495 = vor.u32 1.1754944e-38, %v4494
  %v4496 = vsel %vm4493, %v4495, %v4491
  %v4497 = vmul.f32 1.0, %v4496
  %v4498 = vrcp.pop %v3054
  %v4499 = vmul.f32 %v3054, %v4498
  %v4500 = vsub.f32 1.0, %v4499
  %v4501 = vmul.f32 %v4498, %v4500
  %v4502 = vadd.f32 %v4498, %v4501
  %vm4503 = vweird.f32 %v3054
  %vm4504 = vweird.f32 %v4498
  %vm4505 = vmor %vm4503, %vm4504
  %v4506 = vsel %vm4505, %v4498, %v4502
  %v4507 = vand.u32 2147483647, %v3054
  %vm4508 = vcmp.eq.f32.partialorder %v4507, 8.507059e+37
  %v4509 = vand.u32 %v3054, 2147483648
  %v4510 = vor.u32 1.1754944e-38, %v4509
  %v4511 = vsel %vm4508, %v4510, %v4506
  %v4512 = vmul.f32 1.0, %v4511
  %v4513 = vrcp.pop %v3055
  %v4514 = vmul.f32 %v3055, %v4513
  %v4515 = vsub.f32 1.0, %v4514
  %v4516 = vmul.f32 %v4513, %v4515
  %v4517 = vadd.f32 %v4513, %v4516
  %vm4518 = vweird.f32 %v3055
  %vm4519 = vweird.f32 %v4513
  %vm4520 = vmor %vm4518, %vm4519
  %v4521 = vsel %vm4520, %v4513, %v4517
  %v4522 = vand.u32 2147483647, %v3055
  %vm4523 = vcmp.eq.f32.partialorder %v4522, 8.507059e+37
  %v4524 = vand.u32 %v3055, 2147483648
  %v4525 = vor.u32 1.1754944e-38, %v4524
  %v4526 = vsel %vm4523, %v4525, %v4521
  %v4527 = vmul.f32 1.0, %v4526
  %v4528 = vrcp.pop %v3056
  %v4529 = vmul.f32 %v3056, %v4528
  %v4530 = vsub.f32 1.0, %v4529
  %v4531 = vmul.f32 %v4528, %v4530
  %v4532 = vadd.f32 %v4528, %v4531
  %vm4533 = vweird.f32 %v3056
  %vm4534 = vweird.f32 %v4528
  %vm4535 = vmor %vm4533, %vm4534
  %v4536 = vsel %vm4535, %v4528, %v4532
  %v4537 = vand.u32 2147483647, %v3056
  %vm4538 = vcmp.eq.f32.partialorder %v4537, 8.507059e+37
  %v4539 = vand.u32 %v3056, 2147483648
  %v4540 = vor.u32 1.1754944e-38, %v4539
  %v4541 = vsel %vm4538, %v4540, %v4536
  %v4542 = vmul.f32 1.0, %v4541
  %v4543 = vrcp.pop %v3057
  %v4544 = vmul.f32 %v3057, %v4543
  %v4545 = vsub.f32 1.0, %v4544
  %v4546 = vmul.f32 %v4543, %v4545
  %v4547 = vadd.f32 %v4543, %v4546
  %vm4548 = vweird.f32 %v3057
  %vm4549 = vweird.f32 %v4543
  %vm4550 = vmor %vm4548, %vm4549
  %v4551 = vsel %vm4550, %v4543, %v4547
  %v4552 = vand.u32 2147483647, %v3057
  %vm4553 = vcmp.eq.f32.partialorder %v4552, 8.507059e+37
  %v4554 = vand.u32 %v3057, 2147483648
  %v4555 = vor.u32 1.1754944e-38, %v4554
  %v4556 = vsel %vm4553, %v4555, %v4551
  %v4557 = vmul.f32 1.0, %v4556
  %v4558 = vrcp.pop %v3058
  %v4559 = vmul.f32 %v3058, %v4558
  %v4560 = vsub.f32 1.0, %v4559
  %v4561 = vmul.f32 %v4558, %v4560
  %v4562 = vadd.f32 %v4558, %v4561
  %vm4563 = vweird.f32 %v3058
  %vm4564 = vweird.f32 %v4558
  %vm4565 = vmor %vm4563, %vm4564
  %v4566 = vsel %vm4565, %v4558, %v4562
  %v4567 = vand.u32 2147483647, %v3058
  %vm4568 = vcmp.eq.f32.partialorder %v4567, 8.507059e+37
  %v4569 = vand.u32 %v3058, 2147483648
  %v4570 = vor.u32 1.1754944e-38, %v4569
  %v4571 = vsel %vm4568, %v4570, %v4566
  %v4572 = vmul.f32 1.0, %v4571
  %v4573 = vrcp.pop %v3059
  %v4574 = vmul.f32 %v3059, %v4573
  %v4575 = vsub.f32 1.0, %v4574
  %v4576 = vmul.f32 %v4573, %v4575
  %v4577 = vadd.f32 %v4573, %v4576
  %vm4578 = vweird.f32 %v3059
  %vm4579 = vweird.f32 %v4573
  %vm4580 = vmor %vm4578, %vm4579
  %v4581 = vsel %vm4580, %v4573, %v4577
  %v4582 = vand.u32 2147483647, %v3059
  %vm4583 = vcmp.eq.f32.partialorder %v4582, 8.507059e+37
  %v4584 = vand.u32 %v3059, 2147483648
  %v4585 = vor.u32 1.1754944e-38, %v4584
  %v4586 = vsel %vm4583, %v4585, %v4581
  %v4587 = vmul.f32 1.0, %v4586
  %v4588 = vrcp.pop %v3060
  %v4589 = vmul.f32 %v3060, %v4588
  %v4590 = vsub.f32 1.0, %v4589
  %v4591 = vmul.f32 %v4588, %v4590
  %v4592 = vadd.f32 %v4588, %v4591
  %vm4593 = vweird.f32 %v3060
  %vm4594 = vweird.f32 %v4588
  %vm4595 = vmor %vm4593, %vm4594
  %v4596 = vsel %vm4595, %v4588, %v4592
  %v4597 = vand.u32 2147483647, %v3060
  %vm4598 = vcmp.eq.f32.partialorder %v4597, 8.507059e+37
  %v4599 = vand.u32 %v3060, 2147483648
  %v4600 = vor.u32 1.1754944e-38, %v4599
  %v4601 = vsel %vm4598, %v4600, %v4596
  %v4602 = vmul.f32 1.0, %v4601
  %v4603 = vrcp.pop %v3061
  %v4604 = vmul.f32 %v3061, %v4603
  %v4605 = vsub.f32 1.0, %v4604
  %v4606 = vmul.f32 %v4603, %v4605
  %v4607 = vadd.f32 %v4603, %v4606
  %vm4608 = vweird.f32 %v3061
  %vm4609 = vweird.f32 %v4603
  %vm4610 = vmor %vm4608, %vm4609
  %v4611 = vsel %vm4610, %v4603, %v4607
  %v4612 = vand.u32 2147483647, %v3061
  %vm4613 = vcmp.eq.f32.partialorder %v4612, 8.507059e+37
  %v4614 = vand.u32 %v3061, 2147483648
  %v4615 = vor.u32 1.1754944e-38, %v4614
  %v4616 = vsel %vm4613, %v4615, %v4611
  %v4617 = vmul.f32 1.0, %v4616
  %v4618 = vrcp.pop %v3062
  %v4619 = vmul.f32 %v3062, %v4618
  %v4620 = vsub.f32 1.0, %v4619
  %v4621 = vmul.f32 %v4618, %v4620
  %v4622 = vadd.f32 %v4618, %v4621
  %vm4623 = vweird.f32 %v3062
  %vm4624 = vweird.f32 %v4618
  %vm4625 = vmor %vm4623, %vm4624
  %v4626 = vsel %vm4625, %v4618, %v4622
  %v4627 = vand.u32 2147483647, %v3062
  %vm4628 = vcmp.eq.f32.partialorder %v4627, 8.507059e+37
  %v4629 = vand.u32 %v3062, 2147483648
  %v4630 = vor.u32 1.1754944e-38, %v4629
  %v4631 = vsel %vm4628, %v4630, %v4626
  %v4632 = vmul.f32 1.0, %v4631
  %v4633 = vrcp.pop %v3063
  %v4634 = vmul.f32 %v3063, %v4633
  %v4635 = vsub.f32 1.0, %v4634
  %v4636 = vmul.f32 %v4633, %v4635
  %v4637 = vadd.f32 %v4633, %v4636
  %vm4638 = vweird.f32 %v3063
  %vm4639 = vweird.f32 %v4633
  %vm4640 = vmor %vm4638, %vm4639
  %v4641 = vsel %vm4640, %v4633, %v4637
  %v4642 = vand.u32 2147483647, %v3063
  %vm4643 = vcmp.eq.f32.partialorder %v4642, 8.507059e+37
  %v4644 = vand.u32 %v3063, 2147483648
  %v4645 = vor.u32 1.1754944e-38, %v4644
  %v4646 = vsel %vm4643, %v4645, %v4641
  %v4647 = vmul.f32 1.0, %v4646
  %v4648 = vrcp.pop %v3064
  %v4649 = vmul.f32 %v3064, %v4648
  %v4650 = vsub.f32 1.0, %v4649
  %v4651 = vmul.f32 %v4648, %v4650
  %v4652 = vadd.f32 %v4648, %v4651
  %vm4653 = vweird.f32 %v3064
  %vm4654 = vweird.f32 %v4648
  %vm4655 = vmor %vm4653, %vm4654
  %v4656 = vsel %vm4655, %v4648, %v4652
  %v4657 = vand.u32 2147483647, %v3064
  %vm4658 = vcmp.eq.f32.partialorder %v4657, 8.507059e+37
  %v4659 = vand.u32 %v3064, 2147483648
  %v4660 = vor.u32 1.1754944e-38, %v4659
  %v4661 = vsel %vm4658, %v4660, %v4656
  %v4662 = vmul.f32 1.0, %v4661
  %v4663 = vrcp.pop %v3065
  %v4664 = vmul.f32 %v3065, %v4663
  %v4665 = vsub.f32 1.0, %v4664
  %v4666 = vmul.f32 %v4663, %v4665
  %v4667 = vadd.f32 %v4663, %v4666
  %vm4668 = vweird.f32 %v3065
  %vm4669 = vweird.f32 %v4663
  %vm4670 = vmor %vm4668, %vm4669
  %v4671 = vsel %vm4670, %v4663, %v4667
  %v4672 = vand.u32 2147483647, %v3065
  %vm4673 = vcmp.eq.f32.partialorder %v4672, 8.507059e+37
  %v4674 = vand.u32 %v3065, 2147483648
  %v4675 = vor.u32 1.1754944e-38, %v4674
  %v4676 = vsel %vm4673, %v4675, %v4671
  %v4677 = vmul.f32 1.0, %v4676
  %v4678 = vrcp.pop %v3066
  %v4679 = vmul.f32 %v3066, %v4678
  %v4680 = vsub.f32 1.0, %v4679
  %v4681 = vmul.f32 %v4678, %v4680
  %v4682 = vadd.f32 %v4678, %v4681
  %vm4683 = vweird.f32 %v3066
  %vm4684 = vweird.f32 %v4678
  %vm4685 = vmor %vm4683, %vm4684
  %v4686 = vsel %vm4685, %v4678, %v4682
  %v4687 = vand.u32 2147483647, %v3066
  %vm4688 = vcmp.eq.f32.partialorder %v4687, 8.507059e+37
  %v4689 = vand.u32 %v3066, 2147483648
  %v4690 = vor.u32 1.1754944e-38, %v4689
  %v4691 = vsel %vm4688, %v4690, %v4686
  %v4692 = vmul.f32 1.0, %v4691
  %v4693 = vrcp.pop %v3067
  %v4694 = vmul.f32 %v3067, %v4693
  %v4695 = vsub.f32 1.0, %v4694
  %v4696 = vmul.f32 %v4693, %v4695
  %v4697 = vadd.f32 %v4693, %v4696
  %vm4698 = vweird.f32 %v3067
  %vm4699 = vweird.f32 %v4693
  %vm4700 = vmor %vm4698, %vm4699
  %v4701 = vsel %vm4700, %v4693, %v4697
  %v4702 = vand.u32 2147483647, %v3067
  %vm4703 = vcmp.eq.f32.partialorder %v4702, 8.507059e+37
  %v4704 = vand.u32 %v3067, 2147483648
  %v4705 = vor.u32 1.1754944e-38, %v4704
  %v4706 = vsel %vm4703, %v4705, %v4701
  %v4707 = vmul.f32 1.0, %v4706
  %v4708 = vrcp.pop %v3068
  %v4709 = vmul.f32 %v3068, %v4708
  %v4710 = vsub.f32 1.0, %v4709
  %v4711 = vmul.f32 %v4708, %v4710
  %v4712 = vadd.f32 %v4708, %v4711
  %vm4713 = vweird.f32 %v3068
  %vm4714 = vweird.f32 %v4708
  %vm4715 = vmor %vm4713, %vm4714
  %v4716 = vsel %vm4715, %v4708, %v4712
  %v4717 = vand.u32 2147483647, %v3068
  %vm4718 = vcmp.eq.f32.partialorder %v4717, 8.507059e+37
  %v4719 = vand.u32 %v3068, 2147483648
  %v4720 = vor.u32 1.1754944e-38, %v4719
  %v4721 = vsel %vm4718, %v4720, %v4716
  %v4722 = vmul.f32 1.0, %v4721
  %v4723 = vrcp.pop %v3069
  %v4724 = vmul.f32 %v3069, %v4723
  %v4725 = vsub.f32 1.0, %v4724
  %v4726 = vmul.f32 %v4723, %v4725
  %v4727 = vadd.f32 %v4723, %v4726
  %vm4728 = vweird.f32 %v3069
  %vm4729 = vweird.f32 %v4723
  %vm4730 = vmor %vm4728, %vm4729
  %v4731 = vsel %vm4730, %v4723, %v4727
  %v4732 = vand.u32 2147483647, %v3069
  %vm4733 = vcmp.eq.f32.partialorder %v4732, 8.507059e+37
  %v4734 = vand.u32 %v3069, 2147483648
  %v4735 = vor.u32 1.1754944e-38, %v4734
  %v4736 = vsel %vm4733, %v4735, %v4731
  %v4737 = vmul.f32 1.0, %v4736
  %v4738 = vrcp.pop %v3070
  %v4739 = vmul.f32 %v3070, %v4738
  %v4740 = vsub.f32 1.0, %v4739
  %v4741 = vmul.f32 %v4738, %v4740
  %v4742 = vadd.f32 %v4738, %v4741
  %vm4743 = vweird.f32 %v3070
  %vm4744 = vweird.f32 %v4738
  %vm4745 = vmor %vm4743, %vm4744
  %v4746 = vsel %vm4745, %v4738, %v4742
  %v4747 = vand.u32 2147483647, %v3070
  %vm4748 = vcmp.eq.f32.partialorder %v4747, 8.507059e+37
  %v4749 = vand.u32 %v3070, 2147483648
  %v4750 = vor.u32 1.1754944e-38, %v4749
  %v4751 = vsel %vm4748, %v4750, %v4746
  %v4752 = vmul.f32 1.0, %v4751
  %v4753 = vrcp.pop %v3071
  %v4754 = vmul.f32 %v3071, %v4753
  %v4755 = vsub.f32 1.0, %v4754
  %v4756 = vmul.f32 %v4753, %v4755
  %v4757 = vadd.f32 %v4753, %v4756
  %vm4758 = vweird.f32 %v3071
  %vm4759 = vweird.f32 %v4753
  %vm4760 = vmor %vm4758, %vm4759
  %v4761 = vsel %vm4760, %v4753, %v4757
  %v4762 = vand.u32 2147483647, %v3071
  %vm4763 = vcmp.eq.f32.partialorder %v4762, 8.507059e+37
  %v4764 = vand.u32 %v3071, 2147483648
  %v4765 = vor.u32 1.1754944e-38, %v4764
  %v4766 = vsel %vm4763, %v4765, %v4761
  %v4767 = vmul.f32 1.0, %v4766
  %v4768 = vrcp.pop %v3072
  %v4769 = vmul.f32 %v3072, %v4768
  %v4770 = vsub.f32 1.0, %v4769
  %v4771 = vmul.f32 %v4768, %v4770
  %v4772 = vadd.f32 %v4768, %v4771
  %vm4773 = vweird.f32 %v3072
  %vm4774 = vweird.f32 %v4768
  %vm4775 = vmor %vm4773, %vm4774
  %v4776 = vsel %vm4775, %v4768, %v4772
  %v4777 = vand.u32 2147483647, %v3072
  %vm4778 = vcmp.eq.f32.partialorder %v4777, 8.507059e+37
  %v4779 = vand.u32 %v3072, 2147483648
  %v4780 = vor.u32 1.1754944e-38, %v4779
  %v4781 = vsel %vm4778, %v4780, %v4776
  %v4782 = vmul.f32 1.0, %v4781
  %v4783 = vrcp.pop %v3073
  %v4784 = vmul.f32 %v3073, %v4783
  %v4785 = vsub.f32 1.0, %v4784
  %v4786 = vmul.f32 %v4783, %v4785
  %v4787 = vadd.f32 %v4783, %v4786
  %vm4788 = vweird.f32 %v3073
  %vm4789 = vweird.f32 %v4783
  %vm4790 = vmor %vm4788, %vm4789
  %v4791 = vsel %vm4790, %v4783, %v4787
  %v4792 = vand.u32 2147483647, %v3073
  %vm4793 = vcmp.eq.f32.partialorder %v4792, 8.507059e+37
  %v4794 = vand.u32 %v3073, 2147483648
  %v4795 = vor.u32 1.1754944e-38, %v4794
  %v4796 = vsel %vm4793, %v4795, %v4791
  %v4797 = vmul.f32 1.0, %v4796
  %v4798 = vrcp.pop %v3074
  %v4799 = vmul.f32 %v3074, %v4798
  %v4800 = vsub.f32 1.0, %v4799
  %v4801 = vmul.f32 %v4798, %v4800
  %v4802 = vadd.f32 %v4798, %v4801
  %vm4803 = vweird.f32 %v3074
  %vm4804 = vweird.f32 %v4798
  %vm4805 = vmor %vm4803, %vm4804
  %v4806 = vsel %vm4805, %v4798, %v4802
  %v4807 = vand.u32 2147483647, %v3074
  %vm4808 = vcmp.eq.f32.partialorder %v4807, 8.507059e+37
  %v4809 = vand.u32 %v3074, 2147483648
  %v4810 = vor.u32 1.1754944e-38, %v4809
  %v4811 = vsel %vm4808, %v4810, %v4806
  %v4812 = vmul.f32 1.0, %v4811
  %v4813 = vrcp.pop %v3075
  %v4814 = vmul.f32 %v3075, %v4813
  %v4815 = vsub.f32 1.0, %v4814
  %v4816 = vmul.f32 %v4813, %v4815
  %v4817 = vadd.f32 %v4813, %v4816
  %vm4818 = vweird.f32 %v3075
  %vm4819 = vweird.f32 %v4813
  %vm4820 = vmor %vm4818, %vm4819
  %v4821 = vsel %vm4820, %v4813, %v4817
  %v4822 = vand.u32 2147483647, %v3075
  %vm4823 = vcmp.eq.f32.partialorder %v4822, 8.507059e+37
  %v4824 = vand.u32 %v3075, 2147483648
  %v4825 = vor.u32 1.1754944e-38, %v4824
  %v4826 = vsel %vm4823, %v4825, %v4821
  %v4827 = vmul.f32 1.0, %v4826
  %v4828 = vrcp.pop %v3076
  %v4829 = vmul.f32 %v3076, %v4828
  %v4830 = vsub.f32 1.0, %v4829
  %v4831 = vmul.f32 %v4828, %v4830
  %v4832 = vadd.f32 %v4828, %v4831
  %vm4833 = vweird.f32 %v3076
  %vm4834 = vweird.f32 %v4828
  %vm4835 = vmor %vm4833, %vm4834
  %v4836 = vsel %vm4835, %v4828, %v4832
  %v4837 = vand.u32 2147483647, %v3076
  %vm4838 = vcmp.eq.f32.partialorder %v4837, 8.507059e+37
  %v4839 = vand.u32 %v3076, 2147483648
  %v4840 = vor.u32 1.1754944e-38, %v4839
  %v4841 = vsel %vm4838, %v4840, %v4836
  %v4842 = vmul.f32 1.0, %v4841
  %v4843 = vrcp.pop %v3077
  %v4844 = vmul.f32 %v3077, %v4843
  %v4845 = vsub.f32 1.0, %v4844
  %v4846 = vmul.f32 %v4843, %v4845
  %v4847 = vadd.f32 %v4843, %v4846
  %vm4848 = vweird.f32 %v3077
  %vm4849 = vweird.f32 %v4843
  %vm4850 = vmor %vm4848, %vm4849
  %v4851 = vsel %vm4850, %v4843, %v4847
  %v4852 = vand.u32 2147483647, %v3077
  %vm4853 = vcmp.eq.f32.partialorder %v4852, 8.507059e+37
  %v4854 = vand.u32 %v3077, 2147483648
  %v4855 = vor.u32 1.1754944e-38, %v4854
  %v4856 = vsel %vm4853, %v4855, %v4851
  %v4857 = vmul.f32 1.0, %v4856
  %v4858 = vrcp.pop %v3078
  %v4859 = vmul.f32 %v3078, %v4858
  %v4860 = vsub.f32 1.0, %v4859
  %v4861 = vmul.f32 %v4858, %v4860
  %v4862 = vadd.f32 %v4858, %v4861
  %vm4863 = vweird.f32 %v3078
  %vm4864 = vweird.f32 %v4858
  %vm4865 = vmor %vm4863, %vm4864
  %v4866 = vsel %vm4865, %v4858, %v4862
  %v4867 = vand.u32 2147483647, %v3078
  %vm4868 = vcmp.eq.f32.partialorder %v4867, 8.507059e+37
  %v4869 = vand.u32 %v3078, 2147483648
  %v4870 = vor.u32 1.1754944e-38, %v4869
  %v4871 = vsel %vm4868, %v4870, %v4866
  %v4872 = vmul.f32 1.0, %v4871
  %v4873 = vrcp.pop %v3079
  %v4874 = vmul.f32 %v3079, %v4873
  %v4875 = vsub.f32 1.0, %v4874
  %v4876 = vmul.f32 %v4873, %v4875
  %v4877 = vadd.f32 %v4873, %v4876
  %vm4878 = vweird.f32 %v3079
  %vm4879 = vweird.f32 %v4873
  %vm4880 = vmor %vm4878, %vm4879
  %v4881 = vsel %vm4880, %v4873, %v4877
  %v4882 = vand.u32 2147483647, %v3079
  %vm4883 = vcmp.eq.f32.partialorder %v4882, 8.507059e+37
  %v4884 = vand.u32 %v3079, 2147483648
  %v4885 = vor.u32 1.1754944e-38, %v4884
  %v4886 = vsel %vm4883, %v4885, %v4881
  %v4887 = vmul.f32 1.0, %v4886
  %v4888 = vrcp.pop %v3080
  %v4889 = vmul.f32 %v3080, %v4888
  %v4890 = vsub.f32 1.0, %v4889
  %v4891 = vmul.f32 %v4888, %v4890
  %v4892 = vadd.f32 %v4888, %v4891
  %vm4893 = vweird.f32 %v3080
  %vm4894 = vweird.f32 %v4888
  %vm4895 = vmor %vm4893, %vm4894
  %v4896 = vsel %vm4895, %v4888, %v4892
  %v4897 = vand.u32 2147483647, %v3080
  %vm4898 = vcmp.eq.f32.partialorder %v4897, 8.507059e+37
  %v4899 = vand.u32 %v3080, 2147483648
  %v4900 = vor.u32 1.1754944e-38, %v4899
  %v4901 = vsel %vm4898, %v4900, %v4896
  %v4902 = vmul.f32 1.0, %v4901
  %v4903 = vrcp.pop %v3081
  %v4904 = vmul.f32 %v3081, %v4903
  %v4905 = vsub.f32 1.0, %v4904
  %v4906 = vmul.f32 %v4903, %v4905
  %v4907 = vadd.f32 %v4903, %v4906
  %vm4908 = vweird.f32 %v3081
  %vm4909 = vweird.f32 %v4903
  %vm4910 = vmor %vm4908, %vm4909
  %v4911 = vsel %vm4910, %v4903, %v4907
  %v4912 = vand.u32 2147483647, %v3081
  %vm4913 = vcmp.eq.f32.partialorder %v4912, 8.507059e+37
  %v4914 = vand.u32 %v3081, 2147483648
  %v4915 = vor.u32 1.1754944e-38, %v4914
  %v4916 = vsel %vm4913, %v4915, %v4911
  %v4917 = vmul.f32 1.0, %v4916
  %v4918 = vrcp.pop %v3082
  %v4919 = vmul.f32 %v3082, %v4918
  %v4920 = vsub.f32 1.0, %v4919
  %v4921 = vmul.f32 %v4918, %v4920
  %v4922 = vadd.f32 %v4918, %v4921
  %vm4923 = vweird.f32 %v3082
  %vm4924 = vweird.f32 %v4918
  %vm4925 = vmor %vm4923, %vm4924
  %v4926 = vsel %vm4925, %v4918, %v4922
  %v4927 = vand.u32 2147483647, %v3082
  %vm4928 = vcmp.eq.f32.partialorder %v4927, 8.507059e+37
  %v4929 = vand.u32 %v3082, 2147483648
  %v4930 = vor.u32 1.1754944e-38, %v4929
  %v4931 = vsel %vm4928, %v4930, %v4926
  %v4932 = vmul.f32 1.0, %v4931
  %v4933 = vrcp.pop %v3083
  %v4934 = vmul.f32 %v3083, %v4933
  %v4935 = vsub.f32 1.0, %v4934
  %v4936 = vmul.f32 %v4933, %v4935
  %v4937 = vadd.f32 %v4933, %v4936
  %vm4938 = vweird.f32 %v3083
  %vm4939 = vweird.f32 %v4933
  %vm4940 = vmor %vm4938, %vm4939
  %v4941 = vsel %vm4940, %v4933, %v4937
  %v4942 = vand.u32 2147483647, %v3083
  %vm4943 = vcmp.eq.f32.partialorder %v4942, 8.507059e+37
  %v4944 = vand.u32 %v3083, 2147483648
  %v4945 = vor.u32 1.1754944e-38, %v4944
  %v4946 = vsel %vm4943, %v4945, %v4941
  %v4947 = vmul.f32 1.0, %v4946
  %v4948 = vrcp.pop %v3084
  %v4949 = vmul.f32 %v3084, %v4948
  %v4950 = vsub.f32 1.0, %v4949
  %v4951 = vmul.f32 %v4948, %v4950
  %v4952 = vadd.f32 %v4948, %v4951
  %vm4953 = vweird.f32 %v3084
  %vm4954 = vweird.f32 %v4948
  %vm4955 = vmor %vm4953, %vm4954
  %v4956 = vsel %vm4955, %v4948, %v4952
  %v4957 = vand.u32 2147483647, %v3084
  %vm4958 = vcmp.eq.f32.partialorder %v4957, 8.507059e+37
  %v4959 = vand.u32 %v3084, 2147483648
  %v4960 = vor.u32 1.1754944e-38, %v4959
  %v4961 = vsel %vm4958, %v4960, %v4956
  %v4962 = vmul.f32 1.0, %v4961
  %v4963 = vrcp.pop %v3085
  %v4964 = vmul.f32 %v3085, %v4963
  %v4965 = vsub.f32 1.0, %v4964
  %v4966 = vmul.f32 %v4963, %v4965
  %v4967 = vadd.f32 %v4963, %v4966
  %vm4968 = vweird.f32 %v3085
  %vm4969 = vweird.f32 %v4963
  %vm4970 = vmor %vm4968, %vm4969
  %v4971 = vsel %vm4970, %v4963, %v4967
  %v4972 = vand.u32 2147483647, %v3085
  %vm4973 = vcmp.eq.f32.partialorder %v4972, 8.507059e+37
  %v4974 = vand.u32 %v3085, 2147483648
  %v4975 = vor.u32 1.1754944e-38, %v4974
  %v4976 = vsel %vm4973, %v4975, %v4971
  %v4977 = vmul.f32 1.0, %v4976
  %v4978 = vrcp.pop %v3086
  %v4979 = vmul.f32 %v3086, %v4978
  %v4980 = vsub.f32 1.0, %v4979
  %v4981 = vmul.f32 %v4978, %v4980
  %v4982 = vadd.f32 %v4978, %v4981
  %vm4983 = vweird.f32 %v3086
  %vm4984 = vweird.f32 %v4978
  %vm4985 = vmor %vm4983, %vm4984
  %v4986 = vsel %vm4985, %v4978, %v4982
  %v4987 = vand.u32 2147483647, %v3086
  %vm4988 = vcmp.eq.f32.partialorder %v4987, 8.507059e+37
  %v4989 = vand.u32 %v3086, 2147483648
  %v4990 = vor.u32 1.1754944e-38, %v4989
  %v4991 = vsel %vm4988, %v4990, %v4986
  %v4992 = vmul.f32 1.0, %v4991
  %v4993 = vrcp.pop %v3087
  %v4994 = vmul.f32 %v3087, %v4993
  %v4995 = vsub.f32 1.0, %v4994
  %v4996 = vmul.f32 %v4993, %v4995
  %v4997 = vadd.f32 %v4993, %v4996
  %vm4998 = vweird.f32 %v3087
  %vm4999 = vweird.f32 %v4993
  %vm5000 = vmor %vm4998, %vm4999
  %v5001 = vsel %vm5000, %v4993, %v4997
  %v5002 = vand.u32 2147483647, %v3087
  %vm5003 = vcmp.eq.f32.partialorder %v5002, 8.507059e+37
  %v5004 = vand.u32 %v3087, 2147483648
  %v5005 = vor.u32 1.1754944e-38, %v5004
  %v5006 = vsel %vm5003, %v5005, %v5001
  %v5007 = vmul.f32 1.0, %v5006
  %v5008 = vmul.f32 %v656, %v3102
  %v5009 = vmul.f32 %v657, %v3117
  %v5010 = vmul.f32 %v658, %v3132
  %v5011 = vmul.f32 %v659, %v3147
  %v5012 = vmul.f32 %v660, %v3162
  %v5013 = vmul.f32 %v661, %v3177
  %v5014 = vmul.f32 %v662, %v3192
  %v5015 = vmul.f32 %v663, %v3207
  %v5016 = vmul.f32 %v664, %v3222
  %v5017 = vmul.f32 %v665, %v3237
  %v5018 = vmul.f32 %v666, %v3252
  %v5019 = vmul.f32 %v667, %v3267
  %v5020 = vmul.f32 %v668, %v3282
  %v5021 = vmul.f32 %v669, %v3297
  %v5022 = vmul.f32 %v670, %v3312
  %v5023 = vmul.f32 %v671, %v3327
  %v5024 = vmul.f32 %v672, %v3342
  %v5025 = vmul.f32 %v673, %v3357
  %v5026 = vmul.f32 %v674, %v3372
  %v5027 = vmul.f32 %v675, %v3387
  %v5028 = vmul.f32 %v676, %v3402
  %v5029 = vmul.f32 %v677, %v3417
  %v5030 = vmul.f32 %v678, %v3432
  %v5031 = vmul.f32 %v679, %v3447
  %v5032 = vmul.f32 %v680, %v3462
  %v5033 = vmul.f32 %v681, %v3477
  %v5034 = vmul.f32 %v682, %v3492
  %v5035 = vmul.f32 %v683, %v3507
  %v5036 = vmul.f32 %v684, %v3522
  %v5037 = vmul.f32 %v685, %v3537
  %v5038 = vmul.f32 %v686, %v3552
  %v5039 = vmul.f32 %v687, %v3567
  %v5040 = vmul.f32 %v688, %v3582
  %v5041 = vmul.f32 %v689, %v3597
  %v5042 = vmul.f32 %v690, %v3612
  %v5043 = vmul.f32 %v691, %v3627
  %v5044 = vmul.f32 %v692, %v3642
  %v5045 = vmul.f32 %v693, %v3657
  %v5046 = vmul.f32 %v694, %v3672
  %v5047 = vmul.f32 %v695, %v3687
  %v5048 = vmul.f32 %v696, %v3702
  %v5049 = vmul.f32 %v697, %v3717
  %v5050 = vmul.f32 %v698, %v3732
  %v5051 = vmul.f32 %v699, %v3747
  %v5052 = vmul.f32 %v700, %v3762
  %v5053 = vmul.f32 %v701, %v3777
  %v5054 = vmul.f32 %v702, %v3792
  %v5055 = vmul.f32 %v703, %v3807
  %v5056 = vmul.f32 %v704, %v3822
  %v5057 = vmul.f32 %v705, %v3837
  %v5058 = vmul.f32 %v706, %v3852
  %v5059 = vmul.f32 %v707, %v3867
  %v5060 = vmul.f32 %v708, %v3882
  %v5061 = vmul.f32 %v709, %v3897
  %v5062 = vmul.f32 %v710, %v3912
  %v5063 = vmul.f32 %v711, %v3927
  %v5064 = vmul.f32 %v712, %v3942
  %v5065 = vmul.f32 %v713, %v3957
  %v5066 = vmul.f32 %v714, %v3972
  %v5067 = vmul.f32 %v715, %v3987
  %v5068 = vmul.f32 %v716, %v4002
  %v5069 = vmul.f32 %v717, %v4017
  %v5070 = vmul.f32 %v718, %v4032
  %v5071 = vmul.f32 %v719, %v4047
  %v5072 = vmul.f32 %v720, %v4062
  %v5073 = vmul.f32 %v721, %v4077
  %v5074 = vmul.f32 %v722, %v4092
  %v5075 = vmul.f32 %v723, %v4107
  %v5076 = vmul.f32 %v724, %v4122
  %v5077 = vmul.f32 %v725, %v4137
  %v5078 = vmul.f32 %v726, %v4152
  %v5079 = vmul.f32 %v727, %v4167
  %v5080 = vmul.f32 %v728, %v4182
  %v5081 = vmul.f32 %v729, %v4197
  %v5082 = vmul.f32 %v730, %v4212
  %v5083 = vmul.f32 %v731, %v4227
  %v5084 = vmul.f32 %v732, %v4242
  %v5085 = vmul.f32 %v733, %v4257
  %v5086 = vmul.f32 %v734, %v4272
  %v5087 = vmul.f32 %v735, %v4287
  %v5088 = vmul.f32 %v736, %v4302
  %v5089 = vmul.f32 %v737, %v4317
  %v5090 = vmul.f32 %v738, %v4332
  %v5091 = vmul.f32 %v739, %v4347
  %v5092 = vmul.f32 %v740, %v4362
  %v5093 = vmul.f32 %v741, %v4377
  %v5094 = vmul.f32 %v742, %v4392
  %v5095 = vmul.f32 %v743, %v4407
  %v5096 = vmul.f32 %v744, %v4422
  %v5097 = vmul.f32 %v745, %v4437
  %v5098 = vmul.f32 %v746, %v4452
  %v5099 = vmul.f32 %v747, %v4467
  %v5100 = vmul.f32 %v748, %v4482
  %v5101 = vmul.f32 %v749, %v4497
  %v5102 = vmul.f32 %v750, %v4512
  %v5103 = vmul.f32 %v751, %v4527
  %v5104 = vmul.f32 %v752, %v4542
  %v5105 = vmul.f32 %v753, %v4557
  %v5106 = vmul.f32 %v754, %v4572
  %v5107 = vmul.f32 %v755, %v4587
  %v5108 = vmul.f32 %v756, %v4602
  %v5109 = vmul.f32 %v757, %v4617
  %v5110 = vmul.f32 %v758, %v4632
  %v5111 = vmul.f32 %v759, %v4647
  %v5112 = vmul.f32 %v760, %v4662
  %v5113 = vmul.f32 %v761, %v4677
  %v5114 = vmul.f32 %v762, %v4692
  %v5115 = vmul.f32 %v763, %v4707
  %v5116 = vmul.f32 %v764, %v4722
  %v5117 = vmul.f32 %v765, %v4737
  %v5118 = vmul.f32 %v766, %v4752
  %v5119 = vmul.f32 %v767, %v4767
  %v5120 = vmul.f32 %v768, %v4782
  %v5121 = vmul.f32 %v769, %v4797
  %v5122 = vmul.f32 %v770, %v4812
  %v5123 = vmul.f32 %v771, %v4827
  %v5124 = vmul.f32 %v772, %v4842
  %v5125 = vmul.f32 %v773, %v4857
  %v5126 = vmul.f32 %v774, %v4872
  %v5127 = vmul.f32 %v775, %v4887
  %v5128 = vmul.f32 %v776, %v4902
  %v5129 = vmul.f32 %v777, %v4917
  %v5130 = vmul.f32 %v778, %v4932
  %v5131 = vmul.f32 %v779, %v4947
  %v5132 = vmul.f32 %v780, %v4962
  %v5133 = vmul.f32 %v781, %v4977
  %v5134 = vmul.f32 %v782, %v4992
  %v5135 = vmul.f32 %v783, %v5007
  %v5136 = vpack.c.bf16 %v5009, %v5008
  %v5137 = vpack.c.bf16 %v5011, %v5010
  %v5138 = vpack.c.bf16 %v5013, %v5012
  %v5139 = vpack.c.bf16 %v5015, %v5014
  %v5140 = vpack.c.bf16 %v5017, %v5016
  %v5141 = vpack.c.bf16 %v5019, %v5018
  %v5142 = vpack.c.bf16 %v5021, %v5020
  %v5143 = vpack.c.bf16 %v5023, %v5022
  %v5144 = vpack.c.bf16 %v5025, %v5024
  %v5145 = vpack.c.bf16 %v5027, %v5026
  %v5146 = vpack.c.bf16 %v5029, %v5028
  %v5147 = vpack.c.bf16 %v5031, %v5030
  %v5148 = vpack.c.bf16 %v5033, %v5032
  %v5149 = vpack.c.bf16 %v5035, %v5034
  %v5150 = vpack.c.bf16 %v5037, %v5036
  %v5151 = vpack.c.bf16 %v5039, %v5038
  %v5152 = vpack.c.bf16 %v5041, %v5040
  %v5153 = vpack.c.bf16 %v5043, %v5042
  %v5154 = vpack.c.bf16 %v5045, %v5044
  %v5155 = vpack.c.bf16 %v5047, %v5046
  %v5156 = vpack.c.bf16 %v5049, %v5048
  %v5157 = vpack.c.bf16 %v5051, %v5050
  %v5158 = vpack.c.bf16 %v5053, %v5052
  %v5159 = vpack.c.bf16 %v5055, %v5054
  %v5160 = vpack.c.bf16 %v5057, %v5056
  %v5161 = vpack.c.bf16 %v5059, %v5058
  %v5162 = vpack.c.bf16 %v5061, %v5060
  %v5163 = vpack.c.bf16 %v5063, %v5062
  %v5164 = vpack.c.bf16 %v5065, %v5064
  %v5165 = vpack.c.bf16 %v5067, %v5066
  %v5166 = vpack.c.bf16 %v5069, %v5068
  %v5167 = vpack.c.bf16 %v5071, %v5070
  %v5168 = vpack.c.bf16 %v5073, %v5072
  %v5169 = vpack.c.bf16 %v5075, %v5074
  %v5170 = vpack.c.bf16 %v5077, %v5076
  %v5171 = vpack.c.bf16 %v5079, %v5078
  %v5172 = vpack.c.bf16 %v5081, %v5080
  %v5173 = vpack.c.bf16 %v5083, %v5082
  %v5174 = vpack.c.bf16 %v5085, %v5084
  %v5175 = vpack.c.bf16 %v5087, %v5086
  %v5176 = vpack.c.bf16 %v5089, %v5088
  %v5177 = vpack.c.bf16 %v5091, %v5090
  %v5178 = vpack.c.bf16 %v5093, %v5092
  %v5179 = vpack.c.bf16 %v5095, %v5094
  %v5180 = vpack.c.bf16 %v5097, %v5096
  %v5181 = vpack.c.bf16 %v5099, %v5098
  %v5182 = vpack.c.bf16 %v5101, %v5100
  %v5183 = vpack.c.bf16 %v5103, %v5102
  %v5184 = vpack.c.bf16 %v5105, %v5104
  %v5185 = vpack.c.bf16 %v5107, %v5106
  %v5186 = vpack.c.bf16 %v5109, %v5108
  %v5187 = vpack.c.bf16 %v5111, %v5110
  %v5188 = vpack.c.bf16 %v5113, %v5112
  %v5189 = vpack.c.bf16 %v5115, %v5114
  %v5190 = vpack.c.bf16 %v5117, %v5116
  %v5191 = vpack.c.bf16 %v5119, %v5118
  %v5192 = vpack.c.bf16 %v5121, %v5120
  %v5193 = vpack.c.bf16 %v5123, %v5122
  %v5194 = vpack.c.bf16 %v5125, %v5124
  %v5195 = vpack.c.bf16 %v5127, %v5126
  %v5196 = vpack.c.bf16 %v5129, %v5128
  %v5197 = vpack.c.bf16 %v5131, %v5130
  %v5198 = vpack.c.bf16 %v5133, %v5132
  %v5199 = vpack.c.bf16 %v5135, %v5134
  %v5200 = vld [vmem:[%s1] sm:$0xf]
  %v5201 = vld [vmem:[%s1 + $0x4] sm:$0xf]
  %v5202 = vld [vmem:[%s1 + $0x8] sm:$0xf]
  %v5203 = vld [vmem:[%s1 + $0xc] sm:$0xf]
  %v5204 = vld [vmem:[%s1 + $0x10] sm:$0xf]
  %v5205 = vld [vmem:[%s1 + $0x14] sm:$0xf]
  %v5206 = vld [vmem:[%s1 + $0x18] sm:$0xf]
  %v5207 = vld [vmem:[%s1 + $0x1c] sm:$0xf]
  %v5208 = vld [vmem:[%s1 + $0x20] sm:$0xf]
  %v5209 = vld [vmem:[%s1 + $0x24] sm:$0xf]
  %v5210 = vld [vmem:[%s1 + $0x28] sm:$0xf]
  %v5211 = vld [vmem:[%s1 + $0x2c] sm:$0xf]
  %v5212 = vld [vmem:[%s2] sm:$0x1]
  %v5214 = vperm.slane %v5212, 0
  %v5228 = vunpack.c.l.b16 %v5200
  %v5229 = vunpack.c.l.b16 %v5201
  %v5230 = vunpack.c.l.b16 %v5202
  %v5231 = vunpack.c.l.b16 %v5203
  %v5232 = vunpack.c.l.b16 %v5204
  %v5233 = vunpack.c.l.b16 %v5205
  %v5234 = vunpack.c.l.b16 %v5206
  %v5235 = vunpack.c.l.b16 %v5207
  %v5236 = vunpack.c.l.b16 %v5208
  %v5237 = vunpack.c.l.b16 %v5209
  %v5238 = vunpack.c.l.b16 %v5210
  %v5239 = vunpack.c.l.b16 %v5211
  %v5240 = vpack.c.b16 %v5229, %v5228
  %v5241 = vpack.c.b16 %v5231, %v5230
  %v5242 = vpack.c.b16 %v5233, %v5232
  %v5243 = vpack.c.b16 %v5235, %v5234
  %v5244 = vpack.c.b16 %v5237, %v5236
  %v5245 = vpack.c.b16 %v5239, %v5238
  %v5253 = vsel %vm143, %v5136, 0
  %v5256 = vsel %vm143, %v5137, 0
  %v5259 = vsel %vm143, %v5138, 0
  %v5262 = vsel %vm143, %v5139, 0
  %v5265 = vsel %vm143, %v5140, 0
  %v5268 = vsel %vm143, %v5141, 0
  %v5271 = vsel %vm143, %v5142, 0
  %v5274 = vsel %vm143, %v5143, 0
  %v5277 = vsel %vm143, %v5144, 0
  %v5280 = vsel %vm143, %v5145, 0
  %v5283 = vsel %vm143, %v5146, 0
  %v5286 = vsel %vm143, %v5147, 0
  %v5289 = vsel %vm143, %v5148, 0
  %v5292 = vsel %vm143, %v5149, 0
  %v5295 = vsel %vm143, %v5150, 0
  %v5298 = vsel %vm143, %v5151, 0
  %v5301 = vsel %vm143, %v5152, 0
  %v5304 = vsel %vm143, %v5153, 0
  %v5307 = vsel %vm143, %v5154, 0
  %v5310 = vsel %vm143, %v5155, 0
  %v5313 = vsel %vm143, %v5156, 0
  %v5316 = vsel %vm143, %v5157, 0
  %v5319 = vsel %vm143, %v5158, 0
  %v5322 = vsel %vm143, %v5159, 0
  %v5325 = vsel %vm143, %v5160, 0
  %v5328 = vsel %vm143, %v5161, 0
  %v5331 = vsel %vm143, %v5162, 0
  %v5334 = vsel %vm143, %v5163, 0
  %v5337 = vsel %vm143, %v5164, 0
  %v5340 = vsel %vm143, %v5165, 0
  %v5343 = vsel %vm143, %v5166, 0
  %v5346 = vsel %vm143, %v5167, 0
  %v5349 = vsel %vm143, %v5168, 0
  %v5352 = vsel %vm143, %v5169, 0
  %v5355 = vsel %vm143, %v5170, 0
  %v5358 = vsel %vm143, %v5171, 0
  %v5361 = vsel %vm143, %v5172, 0
  %v5364 = vsel %vm143, %v5173, 0
  %v5367 = vsel %vm143, %v5174, 0
  %v5370 = vsel %vm143, %v5175, 0
  %v5373 = vsel %vm143, %v5176, 0
  %v5376 = vsel %vm143, %v5177, 0
  %v5379 = vsel %vm143, %v5178, 0
  %v5382 = vsel %vm143, %v5179, 0
  %v5385 = vsel %vm143, %v5180, 0
  %v5388 = vsel %vm143, %v5181, 0
  %v5391 = vsel %vm143, %v5182, 0
  %v5394 = vsel %vm143, %v5183, 0
  %v5397 = vsel %vm143, %v5184, 0
  %v5400 = vsel %vm143, %v5185, 0
  %v5403 = vsel %vm143, %v5186, 0
  %v5406 = vsel %vm143, %v5187, 0
  %v5409 = vsel %vm143, %v5188, 0
  %v5412 = vsel %vm143, %v5189, 0
  %v5415 = vsel %vm143, %v5190, 0
  %v5418 = vsel %vm143, %v5191, 0
  %v5421 = vsel %vm143, %v5192, 0
  %v5424 = vsel %vm143, %v5193, 0
  %v5427 = vsel %vm143, %v5194, 0
  %v5430 = vsel %vm143, %v5195, 0
  %v5433 = vsel %vm143, %v5196, 0
  %v5436 = vsel %vm143, %v5197, 0
  %v5439 = vsel %vm143, %v5198, 0
  %v5442 = vsel %vm143, %v5199, 0
  %5444 = vmatpush.bf16.msra.mxu0 0
  %5445 = vmatpush.bf16.msra.mxu0 0
  %5446 = vmatpush.bf16.msra.mxu0 %v5245
  %5447 = vmatpush.bf16.msra.mxu0 %v5244
  %5448 = vmatpush.bf16.msra.mxu0 %v5243
  %5449 = vmatpush.bf16.msra.mxu0 %v5242
  %5450 = vmatpush.bf16.msra.mxu0 %v5241
  %5451 = vmatpush.bf16.msra.mxu0 %v5240
  %5452 = vmatmul.bf16.gmra.mxu0 %v5253
  %v5453 = vpop.f32.mrf.mxu0
  %v5454 = vadd.f32 %v5214, %v5453
  %v5455 = vpop.f32.mrf.mxu0
  %v5456 = vadd.f32 %v5214, %v5455
  %5457 = vmatmul.bf16.gmra.mxu0 %v5256
  %v5458 = vpop.f32.mrf.mxu0
  %v5459 = vadd.f32 %v5214, %v5458
  %v5460 = vpop.f32.mrf.mxu0
  %v5461 = vadd.f32 %v5214, %v5460
  %5462 = vmatmul.bf16.gmra.mxu0 %v5259
  %v5463 = vpop.f32.mrf.mxu0
  %v5464 = vadd.f32 %v5214, %v5463
  %v5465 = vpop.f32.mrf.mxu0
  %v5466 = vadd.f32 %v5214, %v5465
  %5467 = vmatmul.bf16.gmra.mxu0 %v5262
  %v5468 = vpop.f32.mrf.mxu0
  %v5469 = vadd.f32 %v5214, %v5468
  %v5470 = vpop.f32.mrf.mxu0
  %v5471 = vadd.f32 %v5214, %v5470
  %5472 = vmatmul.bf16.gmra.mxu0 %v5265
  %v5473 = vpop.f32.mrf.mxu0
  %v5474 = vadd.f32 %v5214, %v5473
  %v5475 = vpop.f32.mrf.mxu0
  %v5476 = vadd.f32 %v5214, %v5475
  %5477 = vmatmul.bf16.gmra.mxu0 %v5268
  %v5478 = vpop.f32.mrf.mxu0
  %v5479 = vadd.f32 %v5214, %v5478
  %v5480 = vpop.f32.mrf.mxu0
  %v5481 = vadd.f32 %v5214, %v5480
  %5482 = vmatmul.bf16.gmra.mxu0 %v5271
  %v5483 = vpop.f32.mrf.mxu0
  %v5484 = vadd.f32 %v5214, %v5483
  %v5485 = vpop.f32.mrf.mxu0
  %v5486 = vadd.f32 %v5214, %v5485
  %5487 = vmatmul.bf16.gmra.mxu0 %v5274
  %v5488 = vpop.f32.mrf.mxu0
  %v5489 = vadd.f32 %v5214, %v5488
  %v5490 = vpop.f32.mrf.mxu0
  %v5491 = vadd.f32 %v5214, %v5490
  %5492 = vmatmul.bf16.gmra.mxu0 %v5277
  %v5493 = vpop.f32.mrf.mxu0
  %v5494 = vadd.f32 %v5214, %v5493
  %v5495 = vpop.f32.mrf.mxu0
  %v5496 = vadd.f32 %v5214, %v5495
  %5497 = vmatmul.bf16.gmra.mxu0 %v5280
  %v5498 = vpop.f32.mrf.mxu0
  %v5499 = vadd.f32 %v5214, %v5498
  %v5500 = vpop.f32.mrf.mxu0
  %v5501 = vadd.f32 %v5214, %v5500
  %5502 = vmatmul.bf16.gmra.mxu0 %v5283
  %v5503 = vpop.f32.mrf.mxu0
  %v5504 = vadd.f32 %v5214, %v5503
  %v5505 = vpop.f32.mrf.mxu0
  %v5506 = vadd.f32 %v5214, %v5505
  %5507 = vmatmul.bf16.gmra.mxu0 %v5286
  %v5508 = vpop.f32.mrf.mxu0
  %v5509 = vadd.f32 %v5214, %v5508
  %v5510 = vpop.f32.mrf.mxu0
  %v5511 = vadd.f32 %v5214, %v5510
  %5512 = vmatmul.bf16.gmra.mxu0 %v5289
  %v5513 = vpop.f32.mrf.mxu0
  %v5514 = vadd.f32 %v5214, %v5513
  %v5515 = vpop.f32.mrf.mxu0
  %v5516 = vadd.f32 %v5214, %v5515
  %5517 = vmatmul.bf16.gmra.mxu0 %v5292
  %v5518 = vpop.f32.mrf.mxu0
  %v5519 = vadd.f32 %v5214, %v5518
  %v5520 = vpop.f32.mrf.mxu0
  %v5521 = vadd.f32 %v5214, %v5520
  %5522 = vmatmul.bf16.gmra.mxu0 %v5295
  %v5523 = vpop.f32.mrf.mxu0
  %v5524 = vadd.f32 %v5214, %v5523
  %v5525 = vpop.f32.mrf.mxu0
  %v5526 = vadd.f32 %v5214, %v5525
  %5527 = vmatmul.bf16.gmra.mxu0 %v5298
  %v5528 = vpop.f32.mrf.mxu0
  %v5529 = vadd.f32 %v5214, %v5528
  %v5530 = vpop.f32.mrf.mxu0
  %v5531 = vadd.f32 %v5214, %v5530
  %5532 = vmatmul.bf16.gmra.mxu0 %v5301
  %v5533 = vpop.f32.mrf.mxu0
  %v5534 = vadd.f32 %v5214, %v5533
  %v5535 = vpop.f32.mrf.mxu0
  %v5536 = vadd.f32 %v5214, %v5535
  %5537 = vmatmul.bf16.gmra.mxu0 %v5304
  %v5538 = vpop.f32.mrf.mxu0
  %v5539 = vadd.f32 %v5214, %v5538
  %v5540 = vpop.f32.mrf.mxu0
  %v5541 = vadd.f32 %v5214, %v5540
  %5542 = vmatmul.bf16.gmra.mxu0 %v5307
  %v5543 = vpop.f32.mrf.mxu0
  %v5544 = vadd.f32 %v5214, %v5543
  %v5545 = vpop.f32.mrf.mxu0
  %v5546 = vadd.f32 %v5214, %v5545
  %5547 = vmatmul.bf16.gmra.mxu0 %v5310
  %v5548 = vpop.f32.mrf.mxu0
  %v5549 = vadd.f32 %v5214, %v5548
  %v5550 = vpop.f32.mrf.mxu0
  %v5551 = vadd.f32 %v5214, %v5550
  %5552 = vmatmul.bf16.gmra.mxu0 %v5313
  %v5553 = vpop.f32.mrf.mxu0
  %v5554 = vadd.f32 %v5214, %v5553
  %v5555 = vpop.f32.mrf.mxu0
  %v5556 = vadd.f32 %v5214, %v5555
  %5557 = vmatmul.bf16.gmra.mxu0 %v5316
  %v5558 = vpop.f32.mrf.mxu0
  %v5559 = vadd.f32 %v5214, %v5558
  %v5560 = vpop.f32.mrf.mxu0
  %v5561 = vadd.f32 %v5214, %v5560
  %5562 = vmatmul.bf16.gmra.mxu0 %v5319
  %v5563 = vpop.f32.mrf.mxu0
  %v5564 = vadd.f32 %v5214, %v5563
  %v5565 = vpop.f32.mrf.mxu0
  %v5566 = vadd.f32 %v5214, %v5565
  %5567 = vmatmul.bf16.gmra.mxu0 %v5322
  %v5568 = vpop.f32.mrf.mxu0
  %v5569 = vadd.f32 %v5214, %v5568
  %v5570 = vpop.f32.mrf.mxu0
  %v5571 = vadd.f32 %v5214, %v5570
  %5572 = vmatmul.bf16.gmra.mxu0 %v5325
  %v5573 = vpop.f32.mrf.mxu0
  %v5574 = vadd.f32 %v5214, %v5573
  %v5575 = vpop.f32.mrf.mxu0
  %v5576 = vadd.f32 %v5214, %v5575
  %5577 = vmatmul.bf16.gmra.mxu0 %v5328
  %v5578 = vpop.f32.mrf.mxu0
  %v5579 = vadd.f32 %v5214, %v5578
  %v5580 = vpop.f32.mrf.mxu0
  %v5581 = vadd.f32 %v5214, %v5580
  %5582 = vmatmul.bf16.gmra.mxu0 %v5331
  %v5583 = vpop.f32.mrf.mxu0
  %v5584 = vadd.f32 %v5214, %v5583
  %v5585 = vpop.f32.mrf.mxu0
  %v5586 = vadd.f32 %v5214, %v5585
  %5587 = vmatmul.bf16.gmra.mxu0 %v5334
  %v5588 = vpop.f32.mrf.mxu0
  %v5589 = vadd.f32 %v5214, %v5588
  %v5590 = vpop.f32.mrf.mxu0
  %v5591 = vadd.f32 %v5214, %v5590
  %5592 = vmatmul.bf16.gmra.mxu0 %v5337
  %v5593 = vpop.f32.mrf.mxu0
  %v5594 = vadd.f32 %v5214, %v5593
  %v5595 = vpop.f32.mrf.mxu0
  %v5596 = vadd.f32 %v5214, %v5595
  %5597 = vmatmul.bf16.gmra.mxu0 %v5340
  %v5598 = vpop.f32.mrf.mxu0
  %v5599 = vadd.f32 %v5214, %v5598
  %v5600 = vpop.f32.mrf.mxu0
  %v5601 = vadd.f32 %v5214, %v5600
  %5602 = vmatmul.bf16.gmra.mxu0 %v5343
  %v5603 = vpop.f32.mrf.mxu0
  %v5604 = vadd.f32 %v5214, %v5603
  %v5605 = vpop.f32.mrf.mxu0
  %v5606 = vadd.f32 %v5214, %v5605
  %5607 = vmatmul.bf16.gmra.mxu0 %v5346
  %v5608 = vpop.f32.mrf.mxu0
  %v5609 = vadd.f32 %v5214, %v5608
  %v5610 = vpop.f32.mrf.mxu0
  %v5611 = vadd.f32 %v5214, %v5610
  %5612 = vmatmul.bf16.gmra.mxu0 %v5349
  %v5613 = vpop.f32.mrf.mxu0
  %v5614 = vadd.f32 %v5214, %v5613
  %v5615 = vpop.f32.mrf.mxu0
  %v5616 = vadd.f32 %v5214, %v5615
  %5617 = vmatmul.bf16.gmra.mxu0 %v5352
  %v5618 = vpop.f32.mrf.mxu0
  %v5619 = vadd.f32 %v5214, %v5618
  %v5620 = vpop.f32.mrf.mxu0
  %v5621 = vadd.f32 %v5214, %v5620
  %5622 = vmatmul.bf16.gmra.mxu0 %v5355
  %v5623 = vpop.f32.mrf.mxu0
  %v5624 = vadd.f32 %v5214, %v5623
  %v5625 = vpop.f32.mrf.mxu0
  %v5626 = vadd.f32 %v5214, %v5625
  %5627 = vmatmul.bf16.gmra.mxu0 %v5358
  %v5628 = vpop.f32.mrf.mxu0
  %v5629 = vadd.f32 %v5214, %v5628
  %v5630 = vpop.f32.mrf.mxu0
  %v5631 = vadd.f32 %v5214, %v5630
  %5632 = vmatmul.bf16.gmra.mxu0 %v5361
  %v5633 = vpop.f32.mrf.mxu0
  %v5634 = vadd.f32 %v5214, %v5633
  %v5635 = vpop.f32.mrf.mxu0
  %v5636 = vadd.f32 %v5214, %v5635
  %5637 = vmatmul.bf16.gmra.mxu0 %v5364
  %v5638 = vpop.f32.mrf.mxu0
  %v5639 = vadd.f32 %v5214, %v5638
  %v5640 = vpop.f32.mrf.mxu0
  %v5641 = vadd.f32 %v5214, %v5640
  %5642 = vmatmul.bf16.gmra.mxu0 %v5367
  %v5643 = vpop.f32.mrf.mxu0
  %v5644 = vadd.f32 %v5214, %v5643
  %v5645 = vpop.f32.mrf.mxu0
  %v5646 = vadd.f32 %v5214, %v5645
  %5647 = vmatmul.bf16.gmra.mxu0 %v5370
  %v5648 = vpop.f32.mrf.mxu0
  %v5649 = vadd.f32 %v5214, %v5648
  %v5650 = vpop.f32.mrf.mxu0
  %v5651 = vadd.f32 %v5214, %v5650
  %5652 = vmatmul.bf16.gmra.mxu0 %v5373
  %v5653 = vpop.f32.mrf.mxu0
  %v5654 = vadd.f32 %v5214, %v5653
  %v5655 = vpop.f32.mrf.mxu0
  %v5656 = vadd.f32 %v5214, %v5655
  %5657 = vmatmul.bf16.gmra.mxu0 %v5376
  %v5658 = vpop.f32.mrf.mxu0
  %v5659 = vadd.f32 %v5214, %v5658
  %v5660 = vpop.f32.mrf.mxu0
  %v5661 = vadd.f32 %v5214, %v5660
  %5662 = vmatmul.bf16.gmra.mxu0 %v5379
  %v5663 = vpop.f32.mrf.mxu0
  %v5664 = vadd.f32 %v5214, %v5663
  %v5665 = vpop.f32.mrf.mxu0
  %v5666 = vadd.f32 %v5214, %v5665
  %5667 = vmatmul.bf16.gmra.mxu0 %v5382
  %v5668 = vpop.f32.mrf.mxu0
  %v5669 = vadd.f32 %v5214, %v5668
  %v5670 = vpop.f32.mrf.mxu0
  %v5671 = vadd.f32 %v5214, %v5670
  %5672 = vmatmul.bf16.gmra.mxu0 %v5385
  %v5673 = vpop.f32.mrf.mxu0
  %v5674 = vadd.f32 %v5214, %v5673
  %v5675 = vpop.f32.mrf.mxu0
  %v5676 = vadd.f32 %v5214, %v5675
  %5677 = vmatmul.bf16.gmra.mxu0 %v5388
  %v5678 = vpop.f32.mrf.mxu0
  %v5679 = vadd.f32 %v5214, %v5678
  %v5680 = vpop.f32.mrf.mxu0
  %v5681 = vadd.f32 %v5214, %v5680
  %5682 = vmatmul.bf16.gmra.mxu0 %v5391
  %v5683 = vpop.f32.mrf.mxu0
  %v5684 = vadd.f32 %v5214, %v5683
  %v5685 = vpop.f32.mrf.mxu0
  %v5686 = vadd.f32 %v5214, %v5685
  %5687 = vmatmul.bf16.gmra.mxu0 %v5394
  %v5688 = vpop.f32.mrf.mxu0
  %v5689 = vadd.f32 %v5214, %v5688
  %v5690 = vpop.f32.mrf.mxu0
  %v5691 = vadd.f32 %v5214, %v5690
  %5692 = vmatmul.bf16.gmra.mxu0 %v5397
  %v5693 = vpop.f32.mrf.mxu0
  %v5694 = vadd.f32 %v5214, %v5693
  %v5695 = vpop.f32.mrf.mxu0
  %v5696 = vadd.f32 %v5214, %v5695
  %5697 = vmatmul.bf16.gmra.mxu0 %v5400
  %v5698 = vpop.f32.mrf.mxu0
  %v5699 = vadd.f32 %v5214, %v5698
  %v5700 = vpop.f32.mrf.mxu0
  %v5701 = vadd.f32 %v5214, %v5700
  %5702 = vmatmul.bf16.gmra.mxu0 %v5403
  %v5703 = vpop.f32.mrf.mxu0
  %v5704 = vadd.f32 %v5214, %v5703
  %v5705 = vpop.f32.mrf.mxu0
  %v5706 = vadd.f32 %v5214, %v5705
  %5707 = vmatmul.bf16.gmra.mxu0 %v5406
  %v5708 = vpop.f32.mrf.mxu0
  %v5709 = vadd.f32 %v5214, %v5708
  %v5710 = vpop.f32.mrf.mxu0
  %v5711 = vadd.f32 %v5214, %v5710
  %5712 = vmatmul.bf16.gmra.mxu0 %v5409
  %v5713 = vpop.f32.mrf.mxu0
  %v5714 = vadd.f32 %v5214, %v5713
  %v5715 = vpop.f32.mrf.mxu0
  %v5716 = vadd.f32 %v5214, %v5715
  %5717 = vmatmul.bf16.gmra.mxu0 %v5412
  %v5718 = vpop.f32.mrf.mxu0
  %v5719 = vadd.f32 %v5214, %v5718
  %v5720 = vpop.f32.mrf.mxu0
  %v5721 = vadd.f32 %v5214, %v5720
  %5722 = vmatmul.bf16.gmra.mxu0 %v5415
  %v5723 = vpop.f32.mrf.mxu0
  %v5724 = vadd.f32 %v5214, %v5723
  %v5725 = vpop.f32.mrf.mxu0
  %v5726 = vadd.f32 %v5214, %v5725
  %5727 = vmatmul.bf16.gmra.mxu0 %v5418
  %v5728 = vpop.f32.mrf.mxu0
  %v5729 = vadd.f32 %v5214, %v5728
  %v5730 = vpop.f32.mrf.mxu0
  %v5731 = vadd.f32 %v5214, %v5730
  %5732 = vmatmul.bf16.gmra.mxu0 %v5421
  %v5733 = vpop.f32.mrf.mxu0
  %v5734 = vadd.f32 %v5214, %v5733
  %v5735 = vpop.f32.mrf.mxu0
  %v5736 = vadd.f32 %v5214, %v5735
  %5737 = vmatmul.bf16.gmra.mxu0 %v5424
  %v5738 = vpop.f32.mrf.mxu0
  %v5739 = vadd.f32 %v5214, %v5738
  %v5740 = vpop.f32.mrf.mxu0
  %v5741 = vadd.f32 %v5214, %v5740
  %5742 = vmatmul.bf16.gmra.mxu0 %v5427
  %v5743 = vpop.f32.mrf.mxu0
  %v5744 = vadd.f32 %v5214, %v5743
  %v5745 = vpop.f32.mrf.mxu0
  %v5746 = vadd.f32 %v5214, %v5745
  %5747 = vmatmul.bf16.gmra.mxu0 %v5430
  %v5748 = vpop.f32.mrf.mxu0
  %v5749 = vadd.f32 %v5214, %v5748
  %v5750 = vpop.f32.mrf.mxu0
  %v5751 = vadd.f32 %v5214, %v5750
  %5752 = vmatmul.bf16.gmra.mxu0 %v5433
  %v5753 = vpop.f32.mrf.mxu0
  %v5754 = vadd.f32 %v5214, %v5753
  %v5755 = vpop.f32.mrf.mxu0
  %v5756 = vadd.f32 %v5214, %v5755
  %5757 = vmatmul.bf16.gmra.mxu0 %v5436
  %v5758 = vpop.f32.mrf.mxu0
  %v5759 = vadd.f32 %v5214, %v5758
  %v5760 = vpop.f32.mrf.mxu0
  %v5761 = vadd.f32 %v5214, %v5760
  %5762 = vmatmul.bf16.gmra.mxu0 %v5439
  %v5763 = vpop.f32.mrf.mxu0
  %v5764 = vadd.f32 %v5214, %v5763
  %v5765 = vpop.f32.mrf.mxu0
  %v5766 = vadd.f32 %v5214, %v5765
  %5767 = vmatmul.bf16.gmra.mxu0 %v5442
  %v5768 = vpop.f32.mrf.mxu0
  %v5769 = vadd.f32 %v5214, %v5768
  %v5770 = vpop.f32.mrf.mxu0
  %v5771 = vadd.f32 %v5214, %v5770
  %5772 = vdwg.mxu0
  %v5773 = vadd.f32 %v15, %v5454
  %v5774 = vadd.f32 %v16, %v5456
  %v5775 = vadd.f32 %v17, %v5459
  %v5776 = vadd.f32 %v18, %v5461
  %v5777 = vadd.f32 %v19, %v5464
  %v5778 = vadd.f32 %v20, %v5466
  %v5779 = vadd.f32 %v21, %v5469
  %v5780 = vadd.f32 %v22, %v5471
  %v5781 = vadd.f32 %v23, %v5474
  %v5782 = vadd.f32 %v24, %v5476
  %v5783 = vadd.f32 %v25, %v5479
  %v5784 = vadd.f32 %v26, %v5481
  %v5785 = vadd.f32 %v27, %v5484
  %v5786 = vadd.f32 %v28, %v5486
  %v5787 = vadd.f32 %v29, %v5489
  %v5788 = vadd.f32 %v30, %v5491
  %v5789 = vadd.f32 %v31, %v5494
  %v5790 = vadd.f32 %v32, %v5496
  %v5791 = vadd.f32 %v33, %v5499
  %v5792 = vadd.f32 %v34, %v5501
  %v5793 = vadd.f32 %v35, %v5504
  %v5794 = vadd.f32 %v36, %v5506
  %v5795 = vadd.f32 %v37, %v5509
  %v5796 = vadd.f32 %v38, %v5511
  %v5797 = vadd.f32 %v39, %v5514
  %v5798 = vadd.f32 %v40, %v5516
  %v5799 = vadd.f32 %v41, %v5519
  %v5800 = vadd.f32 %v42, %v5521
  %v5801 = vadd.f32 %v43, %v5524
  %v5802 = vadd.f32 %v44, %v5526
  %v5803 = vadd.f32 %v45, %v5529
  %v5804 = vadd.f32 %v46, %v5531
  %v5805 = vadd.f32 %v47, %v5534
  %v5806 = vadd.f32 %v48, %v5536
  %v5807 = vadd.f32 %v49, %v5539
  %v5808 = vadd.f32 %v50, %v5541
  %v5809 = vadd.f32 %v51, %v5544
  %v5810 = vadd.f32 %v52, %v5546
  %v5811 = vadd.f32 %v53, %v5549
  %v5812 = vadd.f32 %v54, %v5551
  %v5813 = vadd.f32 %v55, %v5554
  %v5814 = vadd.f32 %v56, %v5556
  %v5815 = vadd.f32 %v57, %v5559
  %v5816 = vadd.f32 %v58, %v5561
  %v5817 = vadd.f32 %v59, %v5564
  %v5818 = vadd.f32 %v60, %v5566
  %v5819 = vadd.f32 %v61, %v5569
  %v5820 = vadd.f32 %v62, %v5571
  %v5821 = vadd.f32 %v63, %v5574
  %v5822 = vadd.f32 %v64, %v5576
  %v5823 = vadd.f32 %v65, %v5579
  %v5824 = vadd.f32 %v66, %v5581
  %v5825 = vadd.f32 %v67, %v5584
  %v5826 = vadd.f32 %v68, %v5586
  %v5827 = vadd.f32 %v69, %v5589
  %v5828 = vadd.f32 %v70, %v5591
  %v5829 = vadd.f32 %v71, %v5594
  %v5830 = vadd.f32 %v72, %v5596
  %v5831 = vadd.f32 %v73, %v5599
  %v5832 = vadd.f32 %v74, %v5601
  %v5833 = vadd.f32 %v75, %v5604
  %v5834 = vadd.f32 %v76, %v5606
  %v5835 = vadd.f32 %v77, %v5609
  %v5836 = vadd.f32 %v78, %v5611
  %v5837 = vadd.f32 %v79, %v5614
  %v5838 = vadd.f32 %v80, %v5616
  %v5839 = vadd.f32 %v81, %v5619
  %v5840 = vadd.f32 %v82, %v5621
  %v5841 = vadd.f32 %v83, %v5624
  %v5842 = vadd.f32 %v84, %v5626
  %v5843 = vadd.f32 %v85, %v5629
  %v5844 = vadd.f32 %v86, %v5631
  %v5845 = vadd.f32 %v87, %v5634
  %v5846 = vadd.f32 %v88, %v5636
  %v5847 = vadd.f32 %v89, %v5639
  %v5848 = vadd.f32 %v90, %v5641
  %v5849 = vadd.f32 %v91, %v5644
  %v5850 = vadd.f32 %v92, %v5646
  %v5851 = vadd.f32 %v93, %v5649
  %v5852 = vadd.f32 %v94, %v5651
  %v5853 = vadd.f32 %v95, %v5654
  %v5854 = vadd.f32 %v96, %v5656
  %v5855 = vadd.f32 %v97, %v5659
  %v5856 = vadd.f32 %v98, %v5661
  %v5857 = vadd.f32 %v99, %v5664
  %v5858 = vadd.f32 %v100, %v5666
  %v5859 = vadd.f32 %v101, %v5669
  %v5860 = vadd.f32 %v102, %v5671
  %v5861 = vadd.f32 %v103, %v5674
  %v5862 = vadd.f32 %v104, %v5676
  %v5863 = vadd.f32 %v105, %v5679
  %v5864 = vadd.f32 %v106, %v5681
  %v5865 = vadd.f32 %v107, %v5684
  %v5866 = vadd.f32 %v108, %v5686
  %v5867 = vadd.f32 %v109, %v5689
  %v5868 = vadd.f32 %v110, %v5691
  %v5869 = vadd.f32 %v111, %v5694
  %v5870 = vadd.f32 %v112, %v5696
  %v5871 = vadd.f32 %v113, %v5699
  %v5872 = vadd.f32 %v114, %v5701
  %v5873 = vadd.f32 %v115, %v5704
  %v5874 = vadd.f32 %v116, %v5706
  %v5875 = vadd.f32 %v117, %v5709
  %v5876 = vadd.f32 %v118, %v5711
  %v5877 = vadd.f32 %v119, %v5714
  %v5878 = vadd.f32 %v120, %v5716
  %v5879 = vadd.f32 %v121, %v5719
  %v5880 = vadd.f32 %v122, %v5721
  %v5881 = vadd.f32 %v123, %v5724
  %v5882 = vadd.f32 %v124, %v5726
  %v5883 = vadd.f32 %v125, %v5729
  %v5884 = vadd.f32 %v126, %v5731
  %v5885 = vadd.f32 %v127, %v5734
  %v5886 = vadd.f32 %v128, %v5736
  %v5887 = vadd.f32 %v129, %v5739
  %v5888 = vadd.f32 %v130, %v5741
  %v5889 = vadd.f32 %v131, %v5744
  %v5890 = vadd.f32 %v132, %v5746
  %v5891 = vadd.f32 %v133, %v5749
  %v5892 = vadd.f32 %v134, %v5751
  %v5893 = vadd.f32 %v135, %v5754
  %v5894 = vadd.f32 %v136, %v5756
  %v5895 = vadd.f32 %v137, %v5759
  %v5896 = vadd.f32 %v138, %v5761
  %v5897 = vadd.f32 %v139, %v5764
  %v5898 = vadd.f32 %v140, %v5766
  %v5899 = vadd.f32 %v141, %v5769
  %v5900 = vadd.f32 %v142, %v5771
  %5901 = vst.msk [vmem:[%s3] sm:$0xff] %vm143, %v5773
  %5902 = vst.msk [vmem:[%s3 + $0x8] sm:$0xff] %vm143, %v5774
  %5903 = vst.msk [vmem:[%s3 + $0x10] sm:$0xff] %vm143, %v5775
  %5904 = vst.msk [vmem:[%s3 + $0x18] sm:$0xff] %vm143, %v5776
  %5905 = vst.msk [vmem:[%s3 + $0x20] sm:$0xff] %vm143, %v5777
  %5906 = vst.msk [vmem:[%s3 + $0x28] sm:$0xff] %vm143, %v5778
  %5907 = vst.msk [vmem:[%s3 + $0x30] sm:$0xff] %vm143, %v5779
  %5908 = vst.msk [vmem:[%s3 + $0x38] sm:$0xff] %vm143, %v5780
  %5909 = vst.msk [vmem:[%s3 + $0x40] sm:$0xff] %vm143, %v5781
  %5910 = vst.msk [vmem:[%s3 + $0x48] sm:$0xff] %vm143, %v5782
  %5911 = vst.msk [vmem:[%s3 + $0x50] sm:$0xff] %vm143, %v5783
  %5912 = vst.msk [vmem:[%s3 + $0x58] sm:$0xff] %vm143, %v5784
  %5913 = vst.msk [vmem:[%s3 + $0x60] sm:$0xff] %vm143, %v5785
  %5914 = vst.msk [vmem:[%s3 + $0x68] sm:$0xff] %vm143, %v5786
  %5915 = vst.msk [vmem:[%s3 + $0x70] sm:$0xff] %vm143, %v5787
  %5916 = vst.msk [vmem:[%s3 + $0x78] sm:$0xff] %vm143, %v5788
  %5917 = vst.msk [vmem:[%s3 + $0x80] sm:$0xff] %vm143, %v5789
  %5918 = vst.msk [vmem:[%s3 + $0x88] sm:$0xff] %vm143, %v5790
  %5919 = vst.msk [vmem:[%s3 + $0x90] sm:$0xff] %vm143, %v5791
  %5920 = vst.msk [vmem:[%s3 + $0x98] sm:$0xff] %vm143, %v5792
  %5921 = vst.msk [vmem:[%s3 + $0xa0] sm:$0xff] %vm143, %v5793
  %5922 = vst.msk [vmem:[%s3 + $0xa8] sm:$0xff] %vm143, %v5794
  %5923 = vst.msk [vmem:[%s3 + $0xb0] sm:$0xff] %vm143, %v5795
  %5924 = vst.msk [vmem:[%s3 + $0xb8] sm:$0xff] %vm143, %v5796
  %5925 = vst.msk [vmem:[%s3 + $0xc0] sm:$0xff] %vm143, %v5797
  %5926 = vst.msk [vmem:[%s3 + $0xc8] sm:$0xff] %vm143, %v5798
  %5927 = vst.msk [vmem:[%s3 + $0xd0] sm:$0xff] %vm143, %v5799
  %5928 = vst.msk [vmem:[%s3 + $0xd8] sm:$0xff] %vm143, %v5800
  %5929 = vst.msk [vmem:[%s3 + $0xe0] sm:$0xff] %vm143, %v5801
  %5930 = vst.msk [vmem:[%s3 + $0xe8] sm:$0xff] %vm143, %v5802
  %5931 = vst.msk [vmem:[%s3 + $0xf0] sm:$0xff] %vm143, %v5803
  %5932 = vst.msk [vmem:[%s3 + $0xf8] sm:$0xff] %vm143, %v5804
  %5933 = vst.msk [vmem:[%s3 + $0x100] sm:$0xff] %vm143, %v5805
  %5934 = vst.msk [vmem:[%s3 + $0x108] sm:$0xff] %vm143, %v5806
  %5935 = vst.msk [vmem:[%s3 + $0x110] sm:$0xff] %vm143, %v5807
  %5936 = vst.msk [vmem:[%s3 + $0x118] sm:$0xff] %vm143, %v5808
  %5937 = vst.msk [vmem:[%s3 + $0x120] sm:$0xff] %vm143, %v5809
  %5938 = vst.msk [vmem:[%s3 + $0x128] sm:$0xff] %vm143, %v5810
  %5939 = vst.msk [vmem:[%s3 + $0x130] sm:$0xff] %vm143, %v5811
  %5940 = vst.msk [vmem:[%s3 + $0x138] sm:$0xff] %vm143, %v5812
  %5941 = vst.msk [vmem:[%s3 + $0x140] sm:$0xff] %vm143, %v5813
  %5942 = vst.msk [vmem:[%s3 + $0x148] sm:$0xff] %vm143, %v5814
  %5943 = vst.msk [vmem:[%s3 + $0x150] sm:$0xff] %vm143, %v5815
  %5944 = vst.msk [vmem:[%s3 + $0x158] sm:$0xff] %vm143, %v5816
  %5945 = vst.msk [vmem:[%s3 + $0x160] sm:$0xff] %vm143, %v5817
  %5946 = vst.msk [vmem:[%s3 + $0x168] sm:$0xff] %vm143, %v5818
  %5947 = vst.msk [vmem:[%s3 + $0x170] sm:$0xff] %vm143, %v5819
  %5948 = vst.msk [vmem:[%s3 + $0x178] sm:$0xff] %vm143, %v5820
  %5949 = vst.msk [vmem:[%s3 + $0x180] sm:$0xff] %vm143, %v5821
  %5950 = vst.msk [vmem:[%s3 + $0x188] sm:$0xff] %vm143, %v5822
  %5951 = vst.msk [vmem:[%s3 + $0x190] sm:$0xff] %vm143, %v5823
  %5952 = vst.msk [vmem:[%s3 + $0x198] sm:$0xff] %vm143, %v5824
  %5953 = vst.msk [vmem:[%s3 + $0x1a0] sm:$0xff] %vm143, %v5825
  %5954 = vst.msk [vmem:[%s3 + $0x1a8] sm:$0xff] %vm143, %v5826
  %5955 = vst.msk [vmem:[%s3 + $0x1b0] sm:$0xff] %vm143, %v5827
  %5956 = vst.msk [vmem:[%s3 + $0x1b8] sm:$0xff] %vm143, %v5828
  %5957 = vst.msk [vmem:[%s3 + $0x1c0] sm:$0xff] %vm143, %v5829
  %5958 = vst.msk [vmem:[%s3 + $0x1c8] sm:$0xff] %vm143, %v5830
  %5959 = vst.msk [vmem:[%s3 + $0x1d0] sm:$0xff] %vm143, %v5831
  %5960 = vst.msk [vmem:[%s3 + $0x1d8] sm:$0xff] %vm143, %v5832
  %5961 = vst.msk [vmem:[%s3 + $0x1e0] sm:$0xff] %vm143, %v5833
  %5962 = vst.msk [vmem:[%s3 + $0x1e8] sm:$0xff] %vm143, %v5834
  %5963 = vst.msk [vmem:[%s3 + $0x1f0] sm:$0xff] %vm143, %v5835
  %5964 = vst.msk [vmem:[%s3 + $0x1f8] sm:$0xff] %vm143, %v5836
  %5965 = vst.msk [vmem:[%s3 + $0x200] sm:$0xff] %vm143, %v5837
  %5966 = vst.msk [vmem:[%s3 + $0x208] sm:$0xff] %vm143, %v5838
  %5967 = vst.msk [vmem:[%s3 + $0x210] sm:$0xff] %vm143, %v5839
  %5968 = vst.msk [vmem:[%s3 + $0x218] sm:$0xff] %vm143, %v5840
  %5969 = vst.msk [vmem:[%s3 + $0x220] sm:$0xff] %vm143, %v5841
  %5970 = vst.msk [vmem:[%s3 + $0x228] sm:$0xff] %vm143, %v5842
  %5971 = vst.msk [vmem:[%s3 + $0x230] sm:$0xff] %vm143, %v5843
  %5972 = vst.msk [vmem:[%s3 + $0x238] sm:$0xff] %vm143, %v5844
  %5973 = vst.msk [vmem:[%s3 + $0x240] sm:$0xff] %vm143, %v5845
  %5974 = vst.msk [vmem:[%s3 + $0x248] sm:$0xff] %vm143, %v5846
  %5975 = vst.msk [vmem:[%s3 + $0x250] sm:$0xff] %vm143, %v5847
  %5976 = vst.msk [vmem:[%s3 + $0x258] sm:$0xff] %vm143, %v5848
  %5977 = vst.msk [vmem:[%s3 + $0x260] sm:$0xff] %vm143, %v5849
  %5978 = vst.msk [vmem:[%s3 + $0x268] sm:$0xff] %vm143, %v5850
  %5979 = vst.msk [vmem:[%s3 + $0x270] sm:$0xff] %vm143, %v5851
  %5980 = vst.msk [vmem:[%s3 + $0x278] sm:$0xff] %vm143, %v5852
  %5981 = vst.msk [vmem:[%s3 + $0x280] sm:$0xff] %vm143, %v5853
  %5982 = vst.msk [vmem:[%s3 + $0x288] sm:$0xff] %vm143, %v5854
  %5983 = vst.msk [vmem:[%s3 + $0x290] sm:$0xff] %vm143, %v5855
  %5984 = vst.msk [vmem:[%s3 + $0x298] sm:$0xff] %vm143, %v5856
  %5985 = vst.msk [vmem:[%s3 + $0x2a0] sm:$0xff] %vm143, %v5857
  %5986 = vst.msk [vmem:[%s3 + $0x2a8] sm:$0xff] %vm143, %v5858
  %5987 = vst.msk [vmem:[%s3 + $0x2b0] sm:$0xff] %vm143, %v5859
  %5988 = vst.msk [vmem:[%s3 + $0x2b8] sm:$0xff] %vm143, %v5860
  %5989 = vst.msk [vmem:[%s3 + $0x2c0] sm:$0xff] %vm143, %v5861
  %5990 = vst.msk [vmem:[%s3 + $0x2c8] sm:$0xff] %vm143, %v5862
  %5991 = vst.msk [vmem:[%s3 + $0x2d0] sm:$0xff] %vm143, %v5863
  %5992 = vst.msk [vmem:[%s3 + $0x2d8] sm:$0xff] %vm143, %v5864
  %5993 = vst.msk [vmem:[%s3 + $0x2e0] sm:$0xff] %vm143, %v5865
  %5994 = vst.msk [vmem:[%s3 + $0x2e8] sm:$0xff] %vm143, %v5866
  %5995 = vst.msk [vmem:[%s3 + $0x2f0] sm:$0xff] %vm143, %v5867
  %5996 = vst.msk [vmem:[%s3 + $0x2f8] sm:$0xff] %vm143, %v5868
  %5997 = vst.msk [vmem:[%s3 + $0x300] sm:$0xff] %vm143, %v5869
  %5998 = vst.msk [vmem:[%s3 + $0x308] sm:$0xff] %vm143, %v5870
  %5999 = vst.msk [vmem:[%s3 + $0x310] sm:$0xff] %vm143, %v5871
  %6000 = vst.msk [vmem:[%s3 + $0x318] sm:$0xff] %vm143, %v5872
  %6001 = vst.msk [vmem:[%s3 + $0x320] sm:$0xff] %vm143, %v5873
  %6002 = vst.msk [vmem:[%s3 + $0x328] sm:$0xff] %vm143, %v5874
  %6003 = vst.msk [vmem:[%s3 + $0x330] sm:$0xff] %vm143, %v5875
  %6004 = vst.msk [vmem:[%s3 + $0x338] sm:$0xff] %vm143, %v5876
  %6005 = vst.msk [vmem:[%s3 + $0x340] sm:$0xff] %vm143, %v5877
  %6006 = vst.msk [vmem:[%s3 + $0x348] sm:$0xff] %vm143, %v5878
  %6007 = vst.msk [vmem:[%s3 + $0x350] sm:$0xff] %vm143, %v5879
  %6008 = vst.msk [vmem:[%s3 + $0x358] sm:$0xff] %vm143, %v5880
  %6009 = vst.msk [vmem:[%s3 + $0x360] sm:$0xff] %vm143, %v5881
  %6010 = vst.msk [vmem:[%s3 + $0x368] sm:$0xff] %vm143, %v5882
  %6011 = vst.msk [vmem:[%s3 + $0x370] sm:$0xff] %vm143, %v5883
  %6012 = vst.msk [vmem:[%s3 + $0x378] sm:$0xff] %vm143, %v5884
  %6013 = vst.msk [vmem:[%s3 + $0x380] sm:$0xff] %vm143, %v5885
  %6014 = vst.msk [vmem:[%s3 + $0x388] sm:$0xff] %vm143, %v5886
  %6015 = vst.msk [vmem:[%s3 + $0x390] sm:$0xff] %vm143, %v5887
  %6016 = vst.msk [vmem:[%s3 + $0x398] sm:$0xff] %vm143, %v5888
  %6017 = vst.msk [vmem:[%s3 + $0x3a0] sm:$0xff] %vm143, %v5889
  %6018 = vst.msk [vmem:[%s3 + $0x3a8] sm:$0xff] %vm143, %v5890
  %6019 = vst.msk [vmem:[%s3 + $0x3b0] sm:$0xff] %vm143, %v5891
  %6020 = vst.msk [vmem:[%s3 + $0x3b8] sm:$0xff] %vm143, %v5892
  %6021 = vst.msk [vmem:[%s3 + $0x3c0] sm:$0xff] %vm143, %v5893
  %6022 = vst.msk [vmem:[%s3 + $0x3c8] sm:$0xff] %vm143, %v5894
  %6023 = vst.msk [vmem:[%s3 + $0x3d0] sm:$0xff] %vm143, %v5895
  %6024 = vst.msk [vmem:[%s3 + $0x3d8] sm:$0xff] %vm143, %v5896
  %6025 = vst.msk [vmem:[%s3 + $0x3e0] sm:$0xff] %vm143, %v5897
  %6026 = vst.msk [vmem:[%s3 + $0x3e8] sm:$0xff] %vm143, %v5898
  %6027 = vst.msk [vmem:[%s3 + $0x3f0] sm:$0xff] %vm143, %v5899
  %6028 = vst.msk [vmem:[%s3 + $0x3f8] sm:$0xff] %vm143, %v5900
  // Predicated region
  $region14: #{tpu_custom_call.1} parent=0 // pred_check
    _
  $region15: #{tpu_custom_call.1} parent=0 // pred_check_branch
    %6030 = sbr.rel (0) target = $region17
  $region16: #{tpu_custom_call.1} parent=0 // pred_region
    _
  $region17: #{tpu_custom_call.1} parent=0 // pred_fallthru
    _
  // Predicated region
  $region18: #{tpu_custom_call.1} parent=0 // pred_check
    _
  $region19: #{tpu_custom_call.1} parent=0 // pred_check_branch
    %6032 = sbr.rel (0) target = $region21
  $region20: #{tpu_custom_call.1} parent=0 // pred_region
    _
  $region21: #{tpu_custom_call.1} parent=0 // pred_fallthru
    _

</llo_original>
